<compile_context>
chip_gen: v6e
topology: v6e:2x2x1
jax: 0.10.0
libtpu: 0.0.40
codegen_flags: <defaults>
</compile_context>

<pallas_src>
import functools
import math

import jax
import jax.numpy as jnp
from jax.experimental import pallas as pl
from jax.experimental.pallas import tpu as pltpu


# ----------------------------- in-kernel helpers -----------------------------

def _layer_norm(y, g, b, eps=1e-5):
    mu = jnp.mean(y, axis=-1, keepdims=True)
    var = jnp.mean((y - mu) ** 2, axis=-1, keepdims=True)
    return (y - mu) * jax.lax.rsqrt(var + eps) * g + b


def _mha_proj(q, k, v, wo, bias, num_heads, scale):
    """Multi-head attention + out-projection (without bias), all in VMEM.

    q: (Tq, D), k/v: (Tk, D), wo: (D, D), bias: additive (Tq, Tk) or None.
    Head split is done via static column slices; the concat+matmul of the
    merged heads is replaced by accumulating per-head (Dh, D) row slices of
    the out-projection weight (avoids in-kernel concatenation/relayouts).
    """
    Tq, D = q.shape
    Dh = D // num_heads
    dn = (((1,), (1,)), ((), ()))          # contract last dims: q @ k^T
    out = jnp.zeros((Tq, D), jnp.float32)
    for h in range(num_heads):             # static loop, H is small
        sl = slice(h * Dh, (h + 1) * Dh)
        s = jax.lax.dot_general(q[:, sl], k[:, sl], dn,
                                preferred_element_type=jnp.float32) * scale
        if bias is not None:
            s = s + bias
        m = jnp.max(s, axis=-1, keepdims=True)
        p = jnp.exp(s - m)
        denom = jnp.sum(p, axis=-1, keepdims=True)
        p = p * pl.reciprocal(denom, approx=True)     # EUP slot, ~free
        o_h = jnp.dot(p, v[:, sl], preferred_element_type=jnp.float32)
        out = out + jnp.dot(o_h, wo[sl, :], preferred_element_type=jnp.float32)
    return out


# ----------------------------- fused decoder layer -----------------------------

def _decoder_layer_kernel(x_ref, mem_ref, kpm_ref,
                          sa_wqkv, sa_bqkv, sa_wo, sa_bo,
                          ca_wq, ca_bq, ca_wkv, ca_bkv, ca_wo, ca_bo,
                          w1, b1, w2, b2,
                          ln1_g, ln1_b, ln2_g, ln2_b, ln3_g, ln3_b,
                          o_ref, *, num_heads):
    x = x_ref[0]                    # (T, D)
    mem = mem_ref[0]                # (S, D)
    kpm = kpm_ref[0]                # (1, T)  additive float key-padding mask

    T, D = x.shape
    Dh = D // num_heads
    scale = 1.0 / math.sqrt(Dh)

    # ---- self-attention (causal mask built in-kernel, no HBM mask) ----
    qkv = jnp.dot(x, sa_wqkv[...], preferred_element_type=jnp.float32) + sa_bqkv[...]
    q = qkv[:, :D]
    k = qkv[:, D:2 * D]
    v = qkv[:, 2 * D:]

    row = jax.lax.broadcasted_iota(jnp.int32, (T, T), 0)
    col = jax.lax.broadcasted_iota(jnp.int32, (T, T), 1)
    causal = jnp.where(col <= row, 0.0, -1e30).astype(jnp.float32)
    bias = causal + kpm             # (T,T) + (1,T) broadcast; +1.0 on pad keys

    sa = _mha_proj(q, k, v, sa_wo[...], bias, num_heads, scale) + sa_bo[...]
    x = _layer_norm(x + sa, ln1_g[...], ln1_b[...])

    # ---- cross-attention (no mask; fused KV projection on memory) ----
    qc = jnp.dot(x, ca_wq[...], preferred_element_type=jnp.float32) + ca_bq[...]
    kvc = jnp.dot(mem, ca_wkv[...], preferred_element_type=jnp.float32) + ca_bkv[...]
    kc = kvc[:, :D]
    vc = kvc[:, D:]
    ca = _mha_proj(qc, kc, vc, ca_wo[...], None, num_heads, scale) + ca_bo[...]
    x = _layer_norm(x + ca, ln2_g[...], ln2_b[...])

    # ---- feed-forward (ReLU, PyTorch default) ----
    h = jnp.dot(x, w1[...], preferred_element_type=jnp.float32) + b1[...]
    h = jnp.maximum(h, 0.0)
    ff = jnp.dot(h, w2[...], preferred_element_type=jnp.float32) + b2[...]
    x = _layer_norm(x + ff, ln3_g[...], ln3_b[...])

    o_ref[0] = x


def decoder_layer(x, mem, kpm, p, num_heads):
    """x: (B, T, D), mem: (B, S, D), kpm: (B, 1, T) additive float mask."""
    B, T, D = x.shape
    S = mem.shape[1]
    F = p["ff_w1"].shape[1]

    def wspec(shape):
        return pl.BlockSpec(shape, lambda b, _s=shape: (0,) * len(_s))

    kernel = functools.partial(_decoder_layer_kernel, num_heads=num_heads)
    return pl.pallas_call(
        kernel,
        out_shape=jax.ShapeDtypeStruct((B, T, D), jnp.float32),
        grid=(B,),
        in_specs=[
            pl.BlockSpec((1, T, D), lambda b: (b, 0, 0)),      # x
            pl.BlockSpec((1, S, D), lambda b: (b, 0, 0)),      # memory
            pl.BlockSpec((1, 1, T), lambda b: (b, 0, 0)),      # key-padding mask
            wspec((D, 3 * D)), wspec((1, 3 * D)),              # self-attn fused QKV
            wspec((D, D)), wspec((1, D)),                      # self-attn out proj
            wspec((D, D)), wspec((1, D)),                      # cross-attn Q
            wspec((D, 2 * D)), wspec((1, 2 * D)),              # cross-attn fused KV
            wspec((D, D)), wspec((1, D)),                      # cross-attn out proj
            wspec((D, F)), wspec((1, F)),                      # ffn 1
            wspec((F, D)), wspec((1, D)),                      # ffn 2
            wspec((1, D)), wspec((1, D)),                      # ln1
            wspec((1, D)), wspec((1, D)),                      # ln2
            wspec((1, D)), wspec((1, D)),                      # ln3
        ],
        out_specs=pl.BlockSpec((1, T, D), lambda b: (b, 0, 0)),
        compiler_params=pltpu.CompilerParams(
            dimension_semantics=("parallel",)),                # megacore sharding
    )(x, mem, kpm,
      p["sa_wqkv"], p["sa_bqkv"].reshape(1, 3 * D),
      p["sa_wo"], p["sa_bo"].reshape(1, D),
      p["ca_wq"], p["ca_bq"].reshape(1, D),
      p["ca_wkv"], p["ca_bkv"].reshape(1, 2 * D),
      p["ca_wo"], p["ca_bo"].reshape(1, D),
      p["ff_w1"], p["ff_b1"].reshape(1, F),
      p["ff_w2"], p["ff_b2"].reshape(1, D),
      p["ln1_g"].reshape(1, D), p["ln1_b"].reshape(1, D),
      p["ln2_g"].reshape(1, D), p["ln2_b"].reshape(1, D),
      p["ln3_g"].reshape(1, D), p["ln3_b"].reshape(1, D))


# ----------------------------- final vocab projection -----------------------------

def _out_proj_kernel(x_ref, w_ref, b_ref, o_ref):
    o_ref[...] = (jnp.dot(x_ref[...], w_ref[...],
                          preferred_element_type=jnp.float32) + b_ref[...])


def output_projection(x, w_pad, b_pad, tile_m):
    """x: (M, D), w_pad: (D, Np) with Np % 128 == 0 -> lane-dense stores."""
    M, D = x.shape
    Np = w_pad.shape[1]
    return pl.pallas_call(
        _out_proj_kernel,
        out_shape=jax.ShapeDtypeStruct((M, Np), jnp.float32),
        grid=(M // tile_m,),
        in_specs=[pl.BlockSpec((tile_m, D), lambda i: (i, 0)),
                  pl.BlockSpec((D, Np), lambda i: (0, 0)),
                  pl.BlockSpec((1, Np), lambda i: (0, 0))],
        out_specs=pl.BlockSpec((tile_m, Np), lambda i: (i, 0)),
        compiler_params=pltpu.CompilerParams(
            dimension_semantics=("parallel",)),
    )(x, w_pad, b_pad.reshape(1, Np))


# ----------------------------- model wiring -----------------------------

def decoder_forward(params, encoder_out, target, *, num_heads, pad_idx):
    B, S, D = encoder_out.shape
    T = target.shape[1]
    V = params["w_out"].shape[1]

    # embedding + positional embeddings (dropout identity at inference).
    # TODO(synk): embedding gather + positional add left to XLA (tiny, no good
    # Pallas win at these sizes).
    tgt = jnp.take(params["embedding"], target, axis=0) + params["dec_pos"]
    mem = encoder_out + params["enc_pos"]

    # float key_padding_mask -> additive +1.0 on padded keys (PyTorch float-mask
    # semantics).  Passed as a tiny (B,1,T) row; causal part is built in-kernel.
    kpm = (target == pad_idx).astype(jnp.float32).reshape(B, 1, T)

    x = tgt
    for lp in params["layers"]:
        x = decoder_layer(x, mem, kpm, lp, num_heads)

    # Pad vocab dim up to a multiple of 128 for lane-dense output stores.
    Vp = ((V + 127) // 128) * 128
    w_pad = jnp.pad(params["w_out"], ((0, 0), (0, Vp - V)))
    b_pad = jnp.pad(params["b_out"], (0, Vp - V))

    M = B * T
    tile_m = 8 if M % 8 == 0 else M
    logits = output_projection(x.reshape(M, D), w_pad, b_pad, tile_m)
    return logits[:, :V].reshape(B, T, V)


# ----------------------------- parameter init -----------------------------

def _xavier(key, shape):
    fan_in, fan_out = shape
    lim = math.sqrt(6.0 / (fan_in + fan_out))
    return jax.random.uniform(key, shape, jnp.float32, -lim, lim)


def init_params(key, vocab_size, encoder_length, dim, max_len, num_layers,
                ffn_dim=2048):
    keys = iter(jax.random.split(key, 4 + num_layers * 10))
    params = {
        "embedding": _xavier(next(keys), (vocab_size, dim)),
        "dec_pos": jax.random.normal(next(keys), (1, max_len - 1, dim)) * 0.02,
        "enc_pos": jax.random.normal(next(keys), (1, encoder_length, dim)) * 0.02,
        "w_out": _xavier(next(keys), (dim, vocab_size)),
        "b_out": jnp.zeros((vocab_size,), jnp.float32),
        "layers": [],
    }

    for _ in range(num_layers):
        # self-attention: fused QKV weight (D, 3D)
        sa_wq = _xavier(next(keys), (dim, dim))
        sa_wk = _xavier(next(keys), (dim, dim))
        sa_wv = _xavier(next(keys), (dim, dim))
        sa_wo = _xavier(next(keys), (dim, dim))
        # cross-attention: Q separate, fused KV weight (D, 2D)
        ca_wq = _xavier(next(keys), (dim, dim))
        ca_wk = _xavier(next(keys), (dim, dim))
        ca_wv = _xavier(next(keys), (dim, dim))
        ca_wo = _xavier(next(keys), (dim, dim))
        params["layers"].append({
            "sa_wqkv": jnp.concatenate([sa_wq, sa_wk, sa_wv], axis=1),
            "sa_bqkv": jnp.zeros((3 * dim,), jnp.float32),
            "sa_wo": sa_wo, "sa_bo": jnp.zeros((dim,), jnp.float32),
            "ca_wq": ca_wq, "ca_bq": jnp.zeros((dim,), jnp.float32),
            "ca_wkv": jnp.concatenate([ca_wk, ca_wv], axis=1),
            "ca_bkv": jnp.zeros((2 * dim,), jnp.float32),
            "ca_wo": ca_wo, "ca_bo": jnp.zeros((dim,), jnp.float32),
            "ff_w1": _xavier(next(keys), (dim, ffn_dim)),
            "ff_b1": jnp.zeros((ffn_dim,), jnp.float32),
            "ff_w2": _xavier(next(keys), (ffn_dim, dim)),
            "ff_b2": jnp.zeros((dim,), jnp.float32),
            "ln1_g": jnp.ones((dim,), jnp.float32), "ln1_b": jnp.zeros((dim,), jnp.float32),
            "ln2_g": jnp.ones((dim,), jnp.float32), "ln2_b": jnp.zeros((dim,), jnp.float32),
            "ln3_g": jnp.ones((dim,), jnp.float32), "ln3_b": jnp.zeros((dim,), jnp.float32),
        })
    return params


# ----------------------------- main -----------------------------

if __name__ == "__main__":
    vocab_size = 50
    encoder_length = 16
    dim = 32
    max_len = 9            # target length = max_len - 1 = 8
    num_heads = 4
    num_layers = 2
    pad_idx = 0
    batch = 2

    key = jax.random.PRNGKey(0)
    kp, ke, kt = jax.random.split(key, 3)

    params = init_params(kp, vocab_size, encoder_length, dim, max_len, num_layers)

    encoder_out = jax.random.normal(ke, (batch, encoder_length, dim), jnp.float32)
    target = jax.random.randint(kt, (batch, max_len - 1), 0, vocab_size, jnp.int32)

    fwd = jax.jit(functools.partial(decoder_forward,
                                    num_heads=num_heads, pad_idx=pad_idx))
    out = fwd(params, encoder_out, target)
    out = jax.block_until_ready(out)

    assert out.shape == (batch, max_len - 1, vocab_size)
    assert bool(jnp.all(jnp.isfinite(out)))
    print("KERNEL_OK")
</pallas_src>

<mosaic_0001>
module attributes {stable_mosaic.version = 11 : i64} {
  func.func @_out_proj_kernel(%arg0: i32, %arg1: memref<8x32xf32, #tpu.memory_space<vmem>>, %arg2: memref<32x128xf32, #tpu.memory_space<vmem>>, %arg3: memref<1x128xf32, #tpu.memory_space<vmem>>, %arg4: memref<8x128xf32, #tpu.memory_space<vmem>>) attributes {dimension_semantics = [#tpu.dimension_semantics<parallel>], iteration_bounds = array<i64: 2>, scalar_prefetch = 0 : i64, scratch_operands = 0 : i64, tpu.core_type = #tpu.core_type<tc>, window_params = [{transform_indices = @transform_0, window_bounds = array<i64: 8, 32>}, {pipeline_mode = #tpu.pipeline_mode<synchronous>, transform_indices = @transform_1, window_bounds = array<i64: 32, 128>}, {pipeline_mode = #tpu.pipeline_mode<synchronous>, transform_indices = @transform_2, window_bounds = array<i64: 1, 128>}, {transform_indices = @transform_3, window_bounds = array<i64: 8, 128>}]} {
    %c0 = arith.constant 0 : index
    %c0_0 = arith.constant 0 : index
    %0 = vector.load %arg1[%c0, %c0_0] : memref<8x32xf32, #tpu.memory_space<vmem>>, vector<8x32xf32>
    %c0_1 = arith.constant 0 : index
    %c0_2 = arith.constant 0 : index
    %1 = vector.load %arg2[%c0_1, %c0_2] : memref<32x128xf32, #tpu.memory_space<vmem>>, vector<32x128xf32>
    %cst = arith.constant dense<0.000000e+00> : vector<8x128xf32>
    %2 = tpu.matmul %0, %1, %cst {dimension_numbers = #tpu.dot_dimension_numbers<[1], [0], [0], [1], [0, 0, 1, 1], [], []>} : vector<8x32xf32>, vector<32x128xf32>, vector<8x128xf32> -> vector<8x128xf32>
    %c0_3 = arith.constant 0 : index
    %c0_4 = arith.constant 0 : index
    %3 = vector.load %arg3[%c0_3, %c0_4] : memref<1x128xf32, #tpu.memory_space<vmem>>, vector<1x128xf32>
    %4 = vector.broadcast %3 : vector<1x128xf32> to vector<8x128xf32>
    %5 = arith.addf %2, %4 : vector<8x128xf32>
    %c0_5 = arith.constant 0 : index
    %c0_6 = arith.constant 0 : index
    %6 = vector.load %arg4[%c0_5, %c0_6] : memref<8x128xf32, #tpu.memory_space<vmem>>, vector<8x128xf32>
    tpu.vector_store %arg4[%c0_5, %c0_6], %5 {strides = array<i32>} : memref<8x128xf32, #tpu.memory_space<vmem>>, vector<8x128xf32>,
    return
  }
  func.func @transform_0(%arg0: i32) -> (i32, i32) {
    %c0_i32 = arith.constant 0 : i32
    %c0_i32_0 = arith.constant 0 : i32
    return %arg0, %c0_i32 : i32, i32
  }
  func.func @transform_1(%arg0: i32) -> (i32, i32) {
    %c0_i32 = arith.constant 0 : i32
    %c0_i32_0 = arith.constant 0 : i32
    %c0_i32_1 = arith.constant 0 : i32
    return %c0_i32, %c0_i32_0 : i32, i32
  }
  func.func @transform_2(%arg0: i32) -> (i32, i32) {
    %c0_i32 = arith.constant 0 : i32
    %c0_i32_0 = arith.constant 0 : i32
    %c0_i32_1 = arith.constant 0 : i32
    return %c0_i32, %c0_i32_0 : i32, i32
  }
  func.func @transform_3(%arg0: i32) -> (i32, i32) {
    %c0_i32 = arith.constant 0 : i32
    %c0_i32_0 = arith.constant 0 : i32
    return %arg0, %c0_i32 : i32, i32
  }
}

module attributes {stable_mosaic.version = 11 : i64} {
  func.func @_decoder_layer_kernel(%arg0: i32, %arg1: memref<1x8x32xf32, #tpu.memory_space<vmem>>, %arg2: memref<1x16x32xf32, #tpu.memory_space<vmem>>, %arg3: memref<1x1x8xf32, #tpu.memory_space<vmem>>, %arg4: memref<32x96xf32, #tpu.memory_space<vmem>>, %arg5: memref<1x96xf32, #tpu.memory_space<vmem>>, %arg6: memref<32x32xf32, #tpu.memory_space<vmem>>, %arg7: memref<1x32xf32, #tpu.memory_space<vmem>>, %arg8: memref<32x32xf32, #tpu.memory_space<vmem>>, %arg9: memref<1x32xf32, #tpu.memory_space<vmem>>, %arg10: memref<32x64xf32, #tpu.memory_space<vmem>>, %arg11: memref<1x64xf32, #tpu.memory_space<vmem>>, %arg12: memref<32x32xf32, #tpu.memory_space<vmem>>, %arg13: memref<1x32xf32, #tpu.memory_space<vmem>>, %arg14: memref<32x2048xf32, #tpu.memory_space<vmem>>, %arg15: memref<1x2048xf32, #tpu.memory_space<vmem>>, %arg16: memref<2048x32xf32, #tpu.memory_space<vmem>>, %arg17: memref<1x32xf32, #tpu.memory_space<vmem>>, %arg18: memref<1x32xf32, #tpu.memory_space<vmem>>, %arg19: memref<1x32xf32, #tpu.memory_space<vmem>>, %arg20: memref<1x32xf32, #tpu.memory_space<vmem>>, %arg21: memref<1x32xf32, #tpu.memory_space<vmem>>, %arg22: memref<1x32xf32, #tpu.memory_space<vmem>>, %arg23: memref<1x32xf32, #tpu.memory_space<vmem>>, %arg24: memref<1x8x32xf32, #tpu.memory_space<vmem>>) attributes {dimension_semantics = [#tpu.dimension_semantics<parallel>], iteration_bounds = array<i64: 2>, scalar_prefetch = 0 : i64, scratch_operands = 0 : i64, tpu.core_type = #tpu.core_type<tc>, window_params = [{transform_indices = @transform_0, window_bounds = array<i64: 1, 8, 32>}, {transform_indices = @transform_1, window_bounds = array<i64: 1, 16, 32>}, {transform_indices = @transform_2, window_bounds = array<i64: 1, 1, 8>}, {pipeline_mode = #tpu.pipeline_mode<synchronous>, transform_indices = @transform_3, window_bounds = array<i64: 32, 96>}, {pipeline_mode = #tpu.pipeline_mode<synchronous>, transform_indices = @transform_4, window_bounds = array<i64: 1, 96>}, {pipeline_mode = #tpu.pipeline_mode<synchronous>, transform_indices = @transform_5, window_bounds = array<i64: 32, 32>}, {pipeline_mode = #tpu.pipeline_mode<synchronous>, transform_indices = @transform_6, window_bounds = array<i64: 1, 32>}, {pipeline_mode = #tpu.pipeline_mode<synchronous>, transform_indices = @transform_7, window_bounds = array<i64: 32, 32>}, {pipeline_mode = #tpu.pipeline_mode<synchronous>, transform_indices = @transform_8, window_bounds = array<i64: 1, 32>}, {pipeline_mode = #tpu.pipeline_mode<synchronous>, transform_indices = @transform_9, window_bounds = array<i64: 32, 64>}, {pipeline_mode = #tpu.pipeline_mode<synchronous>, transform_indices = @transform_10, window_bounds = array<i64: 1, 64>}, {pipeline_mode = #tpu.pipeline_mode<synchronous>, transform_indices = @transform_11, window_bounds = array<i64: 32, 32>}, {pipeline_mode = #tpu.pipeline_mode<synchronous>, transform_indices = @transform_12, window_bounds = array<i64: 1, 32>}, {pipeline_mode = #tpu.pipeline_mode<synchronous>, transform_indices = @transform_13, window_bounds = array<i64: 32, 2048>}, {pipeline_mode = #tpu.pipeline_mode<synchronous>, transform_indices = @transform_14, window_bounds = array<i64: 1, 2048>}, {pipeline_mode = #tpu.pipeline_mode<synchronous>, transform_indices = @transform_15, window_bounds = array<i64: 2048, 32>}, {pipeline_mode = #tpu.pipeline_mode<synchronous>, transform_indices = @transform_16, window_bounds = array<i64: 1, 32>}, {pipeline_mode = #tpu.pipeline_mode<synchronous>, transform_indices = @transform_17, window_bounds = array<i64: 1, 32>}, {pipeline_mode = #tpu.pipeline_mode<synchronous>, transform_indices = @transform_18, window_bounds = array<i64: 1, 32>}, {pipeline_mode = #tpu.pipeline_mode<synchronous>, transform_indices = @transform_19, window_bounds = array<i64: 1, 32>}, {pipeline_mode = #tpu.pipeline_mode<synchronous>, transform_indices = @transform_20, window_bounds = array<i64: 1, 32>}, {pipeline_mode = #tpu.pipeline_mode<synchronous>, transform_indices = @transform_21, window_bounds = array<i64: 1, 32>}, {pipeline_mode = #tpu.pipeline_mode<synchronous>, transform_indices = @transform_22, window_bounds = array<i64: 1, 32>}, {transform_indices = @transform_23, window_bounds = array<i64: 1, 8, 32>}]} {
    %c0 = arith.constant 0 : index
    %c0_0 = arith.constant 0 : index
    %c0_1 = arith.constant 0 : index
    %0 = vector.load %arg1[%c0, %c0_0, %c0_1] : memref<1x8x32xf32, #tpu.memory_space<vmem>>, vector<1x8x32xf32>
    %1 = vector.shape_cast %0 : vector<1x8x32xf32> to vector<8x32xf32>
    %c0_2 = arith.constant 0 : index
    %c0_3 = arith.constant 0 : index
    %c0_4 = arith.constant 0 : index
    %2 = vector.load %arg2[%c0_2, %c0_3, %c0_4] : memref<1x16x32xf32, #tpu.memory_space<vmem>>, vector<1x16x32xf32>
    %3 = vector.shape_cast %2 : vector<1x16x32xf32> to vector<16x32xf32>
    %c0_5 = arith.constant 0 : index
    %c0_6 = arith.constant 0 : index
    %c0_7 = arith.constant 0 : index
    %4 = vector.load %arg3[%c0_5, %c0_6, %c0_7] : memref<1x1x8xf32, #tpu.memory_space<vmem>>, vector<1x1x8xf32>
    %5 = vector.shape_cast %4 : vector<1x1x8xf32> to vector<1x8xf32>
    %c0_8 = arith.constant 0 : index
    %c0_9 = arith.constant 0 : index
    %6 = vector.load %arg4[%c0_8, %c0_9] : memref<32x96xf32, #tpu.memory_space<vmem>>, vector<32x96xf32>
    %cst = arith.constant dense<0.000000e+00> : vector<8x96xf32>
    %7 = tpu.matmul %1, %6, %cst {dimension_numbers = #tpu.dot_dimension_numbers<[1], [0], [0], [1], [0, 0, 1, 1], [], []>} : vector<8x32xf32>, vector<32x96xf32>, vector<8x96xf32> -> vector<8x96xf32>
    %c0_10 = arith.constant 0 : index
    %c0_11 = arith.constant 0 : index
    %8 = vector.load %arg5[%c0_10, %c0_11] : memref<1x96xf32, #tpu.memory_space<vmem>>, vector<1x96xf32>
    %9 = vector.broadcast %8 : vector<1x96xf32> to vector<8x96xf32>
    %10 = arith.addf %7, %9 : vector<8x96xf32>
    %11 = vector.extract_strided_slice %10 {offsets = [0, 0], sizes = [8, 32], strides = [1, 1]} : vector<8x96xf32> to vector<8x32xf32>
    %12 = vector.extract_strided_slice %10 {offsets = [0, 32], sizes = [8, 32], strides = [1, 1]} : vector<8x96xf32> to vector<8x32xf32>
    %13 = vector.extract_strided_slice %10 {offsets = [0, 64], sizes = [8, 32], strides = [1, 1]} : vector<8x96xf32> to vector<8x32xf32>
    %14 = tpu.iota {dimensions = array<i32: 0>} : vector<8x8xi32>
    %15 = tpu.iota {dimensions = array<i32: 1>} : vector<8x8xi32>
    %16 = arith.cmpi sle, %15, %14 : vector<8x8xi32>
    %cst_12 = arith.constant 0.000000e+00 : f32
    %cst_13 = arith.constant -1.000000e+30 : f32
    %17 = vector.broadcast %cst_12 : f32 to vector<8x8xf32>
    %18 = vector.broadcast %cst_13 : f32 to vector<8x8xf32>
    %19 = arith.select %16, %17, %18 : vector<8x8xi1>, vector<8x8xf32>
    %20 = vector.broadcast %5 : vector<1x8xf32> to vector<8x8xf32>
    %21 = arith.addf %19, %20 : vector<8x8xf32>
    %c0_14 = arith.constant 0 : index
    %c0_15 = arith.constant 0 : index
    %22 = vector.load %arg6[%c0_14, %c0_15] : memref<32x32xf32, #tpu.memory_space<vmem>>, vector<32x32xf32>
    %cst_16 = arith.constant 0.000000e+00 : f32
    %23 = vector.broadcast %cst_16 : f32 to vector<8x32xf32>
    %24 = vector.extract_strided_slice %11 {offsets = [0, 0], sizes = [8, 8], strides = [1, 1]} : vector<8x32xf32> to vector<8x8xf32>
    %25 = vector.extract_strided_slice %12 {offsets = [0, 0], sizes = [8, 8], strides = [1, 1]} : vector<8x32xf32> to vector<8x8xf32>
    %cst_17 = arith.constant dense<0.000000e+00> : vector<8x8xf32>
    %26 = tpu.matmul %24, %25, %cst_17 {dimension_numbers = #tpu.dot_dimension_numbers<[1], [1], [0], [0], [0, 0, 1, 0], [], []>} : vector<8x8xf32>, vector<8x8xf32>, vector<8x8xf32> -> vector<8x8xf32>
    %cst_18 = arith.constant 0.353553385 : f32
    %27 = vector.broadcast %cst_18 : f32 to vector<8x8xf32>
    %28 = arith.mulf %26, %27 : vector<8x8xf32>
    %29 = arith.addf %28, %21 : vector<8x8xf32>
    %cst_19 = arith.constant dense<0xFF800000> : vector<8xf32>
    %30 = vector.multi_reduction <maximumf>, %29, %cst_19 [1] : vector<8x8xf32> to vector<8xf32>
    %31 = vector.shape_cast %30 : vector<8xf32> to vector<8x1xf32>
    %32 = vector.broadcast %31 : vector<8x1xf32> to vector<8x8xf32>
    %33 = arith.subf %29, %32 : vector<8x8xf32>
    %34 = math.exp %33 : vector<8x8xf32>
    %cst_20 = arith.constant dense<0.000000e+00> : vector<8xf32>
    %35 = vector.multi_reduction <add>, %34, %cst_20 [1] : vector<8x8xf32> to vector<8xf32>
    %36 = vector.shape_cast %35 : vector<8xf32> to vector<8x1xf32>
    %37 = tpu.reciprocal %36 {approx = true} : vector<8x1xf32> -> vector<8x1xf32>
    %38 = vector.broadcast %37 : vector<8x1xf32> to vector<8x8xf32>
    %39 = arith.mulf %34, %38 : vector<8x8xf32>
    %40 = vector.extract_strided_slice %13 {offsets = [0, 0], sizes = [8, 8], strides = [1, 1]} : vector<8x32xf32> to vector<8x8xf32>
    %cst_21 = arith.constant dense<0.000000e+00> : vector<8x8xf32>
    %41 = tpu.matmul %39, %40, %cst_21 {dimension_numbers = #tpu.dot_dimension_numbers<[1], [0], [0], [1], [0, 0, 1, 1], [], []>} : vector<8x8xf32>, vector<8x8xf32>, vector<8x8xf32> -> vector<8x8xf32>
    %42 = vector.extract_strided_slice %22 {offsets = [0, 0], sizes = [8, 32], strides = [1, 1]} : vector<32x32xf32> to vector<8x32xf32>
    %cst_22 = arith.constant dense<0.000000e+00> : vector<8x32xf32>
    %43 = tpu.matmul %41, %42, %cst_22 {dimension_numbers = #tpu.dot_dimension_numbers<[1], [0], [0], [1], [0, 0, 1, 1], [], []>} : vector<8x8xf32>, vector<8x32xf32>, vector<8x32xf32> -> vector<8x32xf32>
    %44 = arith.addf %23, %43 : vector<8x32xf32>
    %45 = vector.extract_strided_slice %11 {offsets = [0, 8], sizes = [8, 8], strides = [1, 1]} : vector<8x32xf32> to vector<8x8xf32>
    %46 = vector.extract_strided_slice %12 {offsets = [0, 8], sizes = [8, 8], strides = [1, 1]} : vector<8x32xf32> to vector<8x8xf32>
    %cst_23 = arith.constant dense<0.000000e+00> : vector<8x8xf32>
    %47 = tpu.matmul %45, %46, %cst_23 {dimension_numbers = #tpu.dot_dimension_numbers<[1], [1], [0], [0], [0, 0, 1, 0], [], []>} : vector<8x8xf32>, vector<8x8xf32>, vector<8x8xf32> -> vector<8x8xf32>
    %cst_24 = arith.constant 0.353553385 : f32
    %48 = vector.broadcast %cst_24 : f32 to vector<8x8xf32>
    %49 = arith.mulf %47, %48 : vector<8x8xf32>
    %50 = arith.addf %49, %21 : vector<8x8xf32>
    %cst_25 = arith.constant dense<0xFF800000> : vector<8xf32>
    %51 = vector.multi_reduction <maximumf>, %50, %cst_25 [1] : vector<8x8xf32> to vector<8xf32>
    %52 = vector.shape_cast %51 : vector<8xf32> to vector<8x1xf32>
    %53 = vector.broadcast %52 : vector<8x1xf32> to vector<8x8xf32>
    %54 = arith.subf %50, %53 : vector<8x8xf32>
    %55 = math.exp %54 : vector<8x8xf32>
    %cst_26 = arith.constant dense<0.000000e+00> : vector<8xf32>
    %56 = vector.multi_reduction <add>, %55, %cst_26 [1] : vector<8x8xf32> to vector<8xf32>
    %57 = vector.shape_cast %56 : vector<8xf32> to vector<8x1xf32>
    %58 = tpu.reciprocal %57 {approx = true} : vector<8x1xf32> -> vector<8x1xf32>
    %59 = vector.broadcast %58 : vector<8x1xf32> to vector<8x8xf32>
    %60 = arith.mulf %55, %59 : vector<8x8xf32>
    %61 = vector.extract_strided_slice %13 {offsets = [0, 8], sizes = [8, 8], strides = [1, 1]} : vector<8x32xf32> to vector<8x8xf32>
    %cst_27 = arith.constant dense<0.000000e+00> : vector<8x8xf32>
    %62 = tpu.matmul %60, %61, %cst_27 {dimension_numbers = #tpu.dot_dimension_numbers<[1], [0], [0], [1], [0, 0, 1, 1], [], []>} : vector<8x8xf32>, vector<8x8xf32>, vector<8x8xf32> -> vector<8x8xf32>
    %63 = vector.extract_strided_slice %22 {offsets = [8, 0], sizes = [8, 32], strides = [1, 1]} : vector<32x32xf32> to vector<8x32xf32>
    %cst_28 = arith.constant dense<0.000000e+00> : vector<8x32xf32>
    %64 = tpu.matmul %62, %63, %cst_28 {dimension_numbers = #tpu.dot_dimension_numbers<[1], [0], [0], [1], [0, 0, 1, 1], [], []>} : vector<8x8xf32>, vector<8x32xf32>, vector<8x32xf32> -> vector<8x32xf32>
    %65 = arith.addf %44, %64 : vector<8x32xf32>
    %66 = vector.extract_strided_slice %11 {offsets = [0, 16], sizes = [8, 8], strides = [1, 1]} : vector<8x32xf32> to vector<8x8xf32>
    %67 = vector.extract_strided_slice %12 {offsets = [0, 16], sizes = [8, 8], strides = [1, 1]} : vector<8x32xf32> to vector<8x8xf32>
    %cst_29 = arith.constant dense<0.000000e+00> : vector<8x8xf32>
    %68 = tpu.matmul %66, %67, %cst_29 {dimension_numbers = #tpu.dot_dimension_numbers<[1], [1], [0], [0], [0, 0, 1, 0], [], []>} : vector<8x8xf32>, vector<8x8xf32>, vector<8x8xf32> -> vector<8x8xf32>
    %cst_30 = arith.constant 0.353553385 : f32
    %69 = vector.broadcast %cst_30 : f32 to vector<8x8xf32>
    %70 = arith.mulf %68, %69 : vector<8x8xf32>
    %71 = arith.addf %70, %21 : vector<8x8xf32>
    %cst_31 = arith.constant dense<0xFF800000> : vector<8xf32>
    %72 = vector.multi_reduction <maximumf>, %71, %cst_31 [1] : vector<8x8xf32> to vector<8xf32>
    %73 = vector.shape_cast %72 : vector<8xf32> to vector<8x1xf32>
    %74 = vector.broadcast %73 : vector<8x1xf32> to vector<8x8xf32>
    %75 = arith.subf %71, %74 : vector<8x8xf32>
    %76 = math.exp %75 : vector<8x8xf32>
    %cst_32 = arith.constant dense<0.000000e+00> : vector<8xf32>
    %77 = vector.multi_reduction <add>, %76, %cst_32 [1] : vector<8x8xf32> to vector<8xf32>
    %78 = vector.shape_cast %77 : vector<8xf32> to vector<8x1xf32>
    %79 = tpu.reciprocal %78 {approx = true} : vector<8x1xf32> -> vector<8x1xf32>
    %80 = vector.broadcast %79 : vector<8x1xf32> to vector<8x8xf32>
    %81 = arith.mulf %76, %80 : vector<8x8xf32>
    %82 = vector.extract_strided_slice %13 {offsets = [0, 16], sizes = [8, 8], strides = [1, 1]} : vector<8x32xf32> to vector<8x8xf32>
    %cst_33 = arith.constant dense<0.000000e+00> : vector<8x8xf32>
    %83 = tpu.matmul %81, %82, %cst_33 {dimension_numbers = #tpu.dot_dimension_numbers<[1], [0], [0], [1], [0, 0, 1, 1], [], []>} : vector<8x8xf32>, vector<8x8xf32>, vector<8x8xf32> -> vector<8x8xf32>
    %84 = vector.extract_strided_slice %22 {offsets = [16, 0], sizes = [8, 32], strides = [1, 1]} : vector<32x32xf32> to vector<8x32xf32>
    %cst_34 = arith.constant dense<0.000000e+00> : vector<8x32xf32>
    %85 = tpu.matmul %83, %84, %cst_34 {dimension_numbers = #tpu.dot_dimension_numbers<[1], [0], [0], [1], [0, 0, 1, 1], [], []>} : vector<8x8xf32>, vector<8x32xf32>, vector<8x32xf32> -> vector<8x32xf32>
    %86 = arith.addf %65, %85 : vector<8x32xf32>
    %87 = vector.extract_strided_slice %11 {offsets = [0, 24], sizes = [8, 8], strides = [1, 1]} : vector<8x32xf32> to vector<8x8xf32>
    %88 = vector.extract_strided_slice %12 {offsets = [0, 24], sizes = [8, 8], strides = [1, 1]} : vector<8x32xf32> to vector<8x8xf32>
    %cst_35 = arith.constant dense<0.000000e+00> : vector<8x8xf32>
    %89 = tpu.matmul %87, %88, %cst_35 {dimension_numbers = #tpu.dot_dimension_numbers<[1], [1], [0], [0], [0, 0, 1, 0], [], []>} : vector<8x8xf32>, vector<8x8xf32>, vector<8x8xf32> -> vector<8x8xf32>
    %cst_36 = arith.constant 0.353553385 : f32
    %90 = vector.broadcast %cst_36 : f32 to vector<8x8xf32>
    %91 = arith.mulf %89, %90 : vector<8x8xf32>
    %92 = arith.addf %91, %21 : vector<8x8xf32>
    %cst_37 = arith.constant dense<0xFF800000> : vector<8xf32>
    %93 = vector.multi_reduction <maximumf>, %92, %cst_37 [1] : vector<8x8xf32> to vector<8xf32>
    %94 = vector.shape_cast %93 : vector<8xf32> to vector<8x1xf32>
    %95 = vector.broadcast %94 : vector<8x1xf32> to vector<8x8xf32>
    %96 = arith.subf %92, %95 : vector<8x8xf32>
    %97 = math.exp %96 : vector<8x8xf32>
    %cst_38 = arith.constant dense<0.000000e+00> : vector<8xf32>
    %98 = vector.multi_reduction <add>, %97, %cst_38 [1] : vector<8x8xf32> to vector<8xf32>
    %99 = vector.shape_cast %98 : vector<8xf32> to vector<8x1xf32>
    %100 = tpu.reciprocal %99 {approx = true} : vector<8x1xf32> -> vector<8x1xf32>
    %101 = vector.broadcast %100 : vector<8x1xf32> to vector<8x8xf32>
    %102 = arith.mulf %97, %101 : vector<8x8xf32>
    %103 = vector.extract_strided_slice %13 {offsets = [0, 24], sizes = [8, 8], strides = [1, 1]} : vector<8x32xf32> to vector<8x8xf32>
    %cst_39 = arith.constant dense<0.000000e+00> : vector<8x8xf32>
    %104 = tpu.matmul %102, %103, %cst_39 {dimension_numbers = #tpu.dot_dimension_numbers<[1], [0], [0], [1], [0, 0, 1, 1], [], []>} : vector<8x8xf32>, vector<8x8xf32>, vector<8x8xf32> -> vector<8x8xf32>
    %105 = vector.extract_strided_slice %22 {offsets = [24, 0], sizes = [8, 32], strides = [1, 1]} : vector<32x32xf32> to vector<8x32xf32>
    %cst_40 = arith.constant dense<0.000000e+00> : vector<8x32xf32>
    %106 = tpu.matmul %104, %105, %cst_40 {dimension_numbers = #tpu.dot_dimension_numbers<[1], [0], [0], [1], [0, 0, 1, 1], [], []>} : vector<8x8xf32>, vector<8x32xf32>, vector<8x32xf32> -> vector<8x32xf32>
    %107 = arith.addf %86, %106 : vector<8x32xf32>
    %c0_41 = arith.constant 0 : index
    %c0_42 = arith.constant 0 : index
    %108 = vector.load %arg7[%c0_41, %c0_42] : memref<1x32xf32, #tpu.memory_space<vmem>>, vector<1x32xf32>
    %109 = vector.broadcast %108 : vector<1x32xf32> to vector<8x32xf32>
    %110 = arith.addf %107, %109 : vector<8x32xf32>
    %111 = arith.addf %1, %110 : vector<8x32xf32>
    %c0_43 = arith.constant 0 : index
    %c0_44 = arith.constant 0 : index
    %112 = vector.load %arg18[%c0_43, %c0_44] : memref<1x32xf32, #tpu.memory_space<vmem>>, vector<1x32xf32>
    %c0_45 = arith.constant 0 : index
    %c0_46 = arith.constant 0 : index
    %113 = vector.load %arg19[%c0_45, %c0_46] : memref<1x32xf32, #tpu.memory_space<vmem>>, vector<1x32xf32>
    %cst_47 = arith.constant dense<0.000000e+00> : vector<8xf32>
    %114 = vector.multi_reduction <add>, %111, %cst_47 [1] : vector<8x32xf32> to vector<8xf32>
    %115 = vector.shape_cast %114 : vector<8xf32> to vector<8x1xf32>
    %cst_48 = arith.constant 3.200000e+01 : f32
    %116 = vector.broadcast %cst_48 : f32 to vector<8x1xf32>
    %117 = arith.divf %115, %116 : vector<8x1xf32>
    %118 = vector.broadcast %117 : vector<8x1xf32> to vector<8x32xf32>
    %119 = arith.subf %111, %118 : vector<8x32xf32>
    %120 = arith.mulf %119, %119 : vector<8x32xf32>
    %cst_49 = arith.constant dense<0.000000e+00> : vector<8xf32>
    %121 = vector.multi_reduction <add>, %120, %cst_49 [1] : vector<8x32xf32> to vector<8xf32>
    %122 = vector.shape_cast %121 : vector<8xf32> to vector<8x1xf32>
    %cst_50 = arith.constant 3.200000e+01 : f32
    %123 = vector.broadcast %cst_50 : f32 to vector<8x1xf32>
    %124 = arith.divf %122, %123 : vector<8x1xf32>
    %125 = vector.broadcast %117 : vector<8x1xf32> to vector<8x32xf32>
    %126 = arith.subf %111, %125 : vector<8x32xf32>
    %cst_51 = arith.constant 9.99999974E-6 : f32
    %127 = vector.broadcast %cst_51 : f32 to vector<8x1xf32>
    %128 = arith.addf %124, %127 : vector<8x1xf32>
    %129 = math.rsqrt %128 : vector<8x1xf32>
    %130 = vector.broadcast %129 : vector<8x1xf32> to vector<8x32xf32>
    %131 = arith.mulf %126, %130 : vector<8x32xf32>
    %132 = vector.broadcast %112 : vector<1x32xf32> to vector<8x32xf32>
    %133 = arith.mulf %131, %132 : vector<8x32xf32>
    %134 = vector.broadcast %113 : vector<1x32xf32> to vector<8x32xf32>
    %135 = arith.addf %133, %134 : vector<8x32xf32>
    %c0_52 = arith.constant 0 : index
    %c0_53 = arith.constant 0 : index
    %136 = vector.load %arg8[%c0_52, %c0_53] : memref<32x32xf32, #tpu.memory_space<vmem>>, vector<32x32xf32>
    %cst_54 = arith.constant dense<0.000000e+00> : vector<8x32xf32>
    %137 = tpu.matmul %135, %136, %cst_54 {dimension_numbers = #tpu.dot_dimension_numbers<[1], [0], [0], [1], [0, 0, 1, 1], [], []>} : vector<8x32xf32>, vector<32x32xf32>, vector<8x32xf32> -> vector<8x32xf32>
    %c0_55 = arith.constant 0 : index
    %c0_56 = arith.constant 0 : index
    %138 = vector.load %arg9[%c0_55, %c0_56] : memref<1x32xf32, #tpu.memory_space<vmem>>, vector<1x32xf32>
    %139 = vector.broadcast %138 : vector<1x32xf32> to vector<8x32xf32>
    %140 = arith.addf %137, %139 : vector<8x32xf32>
    %c0_57 = arith.constant 0 : index
    %c0_58 = arith.constant 0 : index
    %141 = vector.load %arg10[%c0_57, %c0_58] : memref<32x64xf32, #tpu.memory_space<vmem>>, vector<32x64xf32>
    %cst_59 = arith.constant dense<0.000000e+00> : vector<16x64xf32>
    %142 = tpu.matmul %3, %141, %cst_59 {dimension_numbers = #tpu.dot_dimension_numbers<[1], [0], [0], [1], [0, 0, 1, 1], [], []>} : vector<16x32xf32>, vector<32x64xf32>, vector<16x64xf32> -> vector<16x64xf32>
    %c0_60 = arith.constant 0 : index
    %c0_61 = arith.constant 0 : index
    %143 = vector.load %arg11[%c0_60, %c0_61] : memref<1x64xf32, #tpu.memory_space<vmem>>, vector<1x64xf32>
    %144 = vector.broadcast %143 : vector<1x64xf32> to vector<16x64xf32>
    %145 = arith.addf %142, %144 : vector<16x64xf32>
    %146 = vector.extract_strided_slice %145 {offsets = [0, 0], sizes = [16, 32], strides = [1, 1]} : vector<16x64xf32> to vector<16x32xf32>
    %147 = vector.extract_strided_slice %145 {offsets = [0, 32], sizes = [16, 32], strides = [1, 1]} : vector<16x64xf32> to vector<16x32xf32>
    %c0_62 = arith.constant 0 : index
    %c0_63 = arith.constant 0 : index
    %148 = vector.load %arg12[%c0_62, %c0_63] : memref<32x32xf32, #tpu.memory_space<vmem>>, vector<32x32xf32>
    %cst_64 = arith.constant 0.000000e+00 : f32
    %149 = vector.broadcast %cst_64 : f32 to vector<8x32xf32>
    %150 = vector.extract_strided_slice %140 {offsets = [0, 0], sizes = [8, 8], strides = [1, 1]} : vector<8x32xf32> to vector<8x8xf32>
    %151 = vector.extract_strided_slice %146 {offsets = [0, 0], sizes = [16, 8], strides = [1, 1]} : vector<16x32xf32> to vector<16x8xf32>
    %cst_65 = arith.constant dense<0.000000e+00> : vector<8x16xf32>
    %152 = tpu.matmul %150, %151, %cst_65 {dimension_numbers = #tpu.dot_dimension_numbers<[1], [1], [0], [0], [0, 0, 1, 0], [], []>} : vector<8x8xf32>, vector<16x8xf32>, vector<8x16xf32> -> vector<8x16xf32>
    %cst_66 = arith.constant 0.353553385 : f32
    %153 = vector.broadcast %cst_66 : f32 to vector<8x16xf32>
    %154 = arith.mulf %152, %153 : vector<8x16xf32>
    %cst_67 = arith.constant dense<0xFF800000> : vector<8xf32>
    %155 = vector.multi_reduction <maximumf>, %154, %cst_67 [1] : vector<8x16xf32> to vector<8xf32>
    %156 = vector.shape_cast %155 : vector<8xf32> to vector<8x1xf32>
    %157 = vector.broadcast %156 : vector<8x1xf32> to vector<8x16xf32>
    %158 = arith.subf %154, %157 : vector<8x16xf32>
    %159 = math.exp %158 : vector<8x16xf32>
    %cst_68 = arith.constant dense<0.000000e+00> : vector<8xf32>
    %160 = vector.multi_reduction <add>, %159, %cst_68 [1] : vector<8x16xf32> to vector<8xf32>
    %161 = vector.shape_cast %160 : vector<8xf32> to vector<8x1xf32>
    %162 = tpu.reciprocal %161 {approx = true} : vector<8x1xf32> -> vector<8x1xf32>
    %163 = vector.broadcast %162 : vector<8x1xf32> to vector<8x16xf32>
    %164 = arith.mulf %159, %163 : vector<8x16xf32>
    %165 = vector.extract_strided_slice %147 {offsets = [0, 0], sizes = [16, 8], strides = [1, 1]} : vector<16x32xf32> to vector<16x8xf32>
    %cst_69 = arith.constant dense<0.000000e+00> : vector<8x8xf32>
    %166 = tpu.matmul %164, %165, %cst_69 {dimension_numbers = #tpu.dot_dimension_numbers<[1], [0], [0], [1], [0, 0, 1, 1], [], []>} : vector<8x16xf32>, vector<16x8xf32>, vector<8x8xf32> -> vector<8x8xf32>
    %167 = vector.extract_strided_slice %148 {offsets = [0, 0], sizes = [8, 32], strides = [1, 1]} : vector<32x32xf32> to vector<8x32xf32>
    %cst_70 = arith.constant dense<0.000000e+00> : vector<8x32xf32>
    %168 = tpu.matmul %166, %167, %cst_70 {dimension_numbers = #tpu.dot_dimension_numbers<[1], [0], [0], [1], [0, 0, 1, 1], [], []>} : vector<8x8xf32>, vector<8x32xf32>, vector<8x32xf32> -> vector<8x32xf32>
    %169 = arith.addf %149, %168 : vector<8x32xf32>
    %170 = vector.extract_strided_slice %140 {offsets = [0, 8], sizes = [8, 8], strides = [1, 1]} : vector<8x32xf32> to vector<8x8xf32>
    %171 = vector.extract_strided_slice %146 {offsets = [0, 8], sizes = [16, 8], strides = [1, 1]} : vector<16x32xf32> to vector<16x8xf32>
    %cst_71 = arith.constant dense<0.000000e+00> : vector<8x16xf32>
    %172 = tpu.matmul %170, %171, %cst_71 {dimension_numbers = #tpu.dot_dimension_numbers<[1], [1], [0], [0], [0, 0, 1, 0], [], []>} : vector<8x8xf32>, vector<16x8xf32>, vector<8x16xf32> -> vector<8x16xf32>
    %cst_72 = arith.constant 0.353553385 : f32
    %173 = vector.broadcast %cst_72 : f32 to vector<8x16xf32>
    %174 = arith.mulf %172, %173 : vector<8x16xf32>
    %cst_73 = arith.constant dense<0xFF800000> : vector<8xf32>
    %175 = vector.multi_reduction <maximumf>, %174, %cst_73 [1] : vector<8x16xf32> to vector<8xf32>
    %176 = vector.shape_cast %175 : vector<8xf32> to vector<8x1xf32>
    %177 = vector.broadcast %176 : vector<8x1xf32> to vector<8x16xf32>
    %178 = arith.subf %174, %177 : vector<8x16xf32>
    %179 = math.exp %178 : vector<8x16xf32>
    %cst_74 = arith.constant dense<0.000000e+00> : vector<8xf32>
    %180 = vector.multi_reduction <add>, %179, %cst_74 [1] : vector<8x16xf32> to vector<8xf32>
    %181 = vector.shape_cast %180 : vector<8xf32> to vector<8x1xf32>
    %182 = tpu.reciprocal %181 {approx = true} : vector<8x1xf32> -> vector<8x1xf32>
    %183 = vector.broadcast %182 : vector<8x1xf32> to vector<8x16xf32>
    %184 = arith.mulf %179, %183 : vector<8x16xf32>
    %185 = vector.extract_strided_slice %147 {offsets = [0, 8], sizes = [16, 8], strides = [1, 1]} : vector<16x32xf32> to vector<16x8xf32>
    %cst_75 = arith.constant dense<0.000000e+00> : vector<8x8xf32>
    %186 = tpu.matmul %184, %185, %cst_75 {dimension_numbers = #tpu.dot_dimension_numbers<[1], [0], [0], [1], [0, 0, 1, 1], [], []>} : vector<8x16xf32>, vector<16x8xf32>, vector<8x8xf32> -> vector<8x8xf32>
    %187 = vector.extract_strided_slice %148 {offsets = [8, 0], sizes = [8, 32], strides = [1, 1]} : vector<32x32xf32> to vector<8x32xf32>
    %cst_76 = arith.constant dense<0.000000e+00> : vector<8x32xf32>
    %188 = tpu.matmul %186, %187, %cst_76 {dimension_numbers = #tpu.dot_dimension_numbers<[1], [0], [0], [1], [0, 0, 1, 1], [], []>} : vector<8x8xf32>, vector<8x32xf32>, vector<8x32xf32> -> vector<8x32xf32>
    %189 = arith.addf %169, %188 : vector<8x32xf32>
    %190 = vector.extract_strided_slice %140 {offsets = [0, 16], sizes = [8, 8], strides = [1, 1]} : vector<8x32xf32> to vector<8x8xf32>
    %191 = vector.extract_strided_slice %146 {offsets = [0, 16], sizes = [16, 8], strides = [1, 1]} : vector<16x32xf32> to vector<16x8xf32>
    %cst_77 = arith.constant dense<0.000000e+00> : vector<8x16xf32>
    %192 = tpu.matmul %190, %191, %cst_77 {dimension_numbers = #tpu.dot_dimension_numbers<[1], [1], [0], [0], [0, 0, 1, 0], [], []>} : vector<8x8xf32>, vector<16x8xf32>, vector<8x16xf32> -> vector<8x16xf32>
    %cst_78 = arith.constant 0.353553385 : f32
    %193 = vector.broadcast %cst_78 : f32 to vector<8x16xf32>
    %194 = arith.mulf %192, %193 : vector<8x16xf32>
    %cst_79 = arith.constant dense<0xFF800000> : vector<8xf32>
    %195 = vector.multi_reduction <maximumf>, %194, %cst_79 [1] : vector<8x16xf32> to vector<8xf32>
    %196 = vector.shape_cast %195 : vector<8xf32> to vector<8x1xf32>
    %197 = vector.broadcast %196 : vector<8x1xf32> to vector<8x16xf32>
    %198 = arith.subf %194, %197 : vector<8x16xf32>
    %199 = math.exp %198 : vector<8x16xf32>
    %cst_80 = arith.constant dense<0.000000e+00> : vector<8xf32>
    %200 = vector.multi_reduction <add>, %199, %cst_80 [1] : vector<8x16xf32> to vector<8xf32>
    %201 = vector.shape_cast %200 : vector<8xf32> to vector<8x1xf32>
    %202 = tpu.reciprocal %201 {approx = true} : vector<8x1xf32> -> vector<8x1xf32>
    %203 = vector.broadcast %202 : vector<8x1xf32> to vector<8x16xf32>
    %204 = arith.mulf %199, %203 : vector<8x16xf32>
    %205 = vector.extract_strided_slice %147 {offsets = [0, 16], sizes = [16, 8], strides = [1, 1]} : vector<16x32xf32> to vector<16x8xf32>
    %cst_81 = arith.constant dense<0.000000e+00> : vector<8x8xf32>
    %206 = tpu.matmul %204, %205, %cst_81 {dimension_numbers = #tpu.dot_dimension_numbers<[1], [0], [0], [1], [0, 0, 1, 1], [], []>} : vector<8x16xf32>, vector<16x8xf32>, vector<8x8xf32> -> vector<8x8xf32>
    %207 = vector.extract_strided_slice %148 {offsets = [16, 0], sizes = [8, 32], strides = [1, 1]} : vector<32x32xf32> to vector<8x32xf32>
    %cst_82 = arith.constant dense<0.000000e+00> : vector<8x32xf32>
    %208 = tpu.matmul %206, %207, %cst_82 {dimension_numbers = #tpu.dot_dimension_numbers<[1], [0], [0], [1], [0, 0, 1, 1], [], []>} : vector<8x8xf32>, vector<8x32xf32>, vector<8x32xf32> -> vector<8x32xf32>
    %209 = arith.addf %189, %208 : vector<8x32xf32>
    %210 = vector.extract_strided_slice %140 {offsets = [0, 24], sizes = [8, 8], strides = [1, 1]} : vector<8x32xf32> to vector<8x8xf32>
    %211 = vector.extract_strided_slice %146 {offsets = [0, 24], sizes = [16, 8], strides = [1, 1]} : vector<16x32xf32> to vector<16x8xf32>
    %cst_83 = arith.constant dense<0.000000e+00> : vector<8x16xf32>
    %212 = tpu.matmul %210, %211, %cst_83 {dimension_numbers = #tpu.dot_dimension_numbers<[1], [1], [0], [0], [0, 0, 1, 0], [], []>} : vector<8x8xf32>, vector<16x8xf32>, vector<8x16xf32> -> vector<8x16xf32>
    %cst_84 = arith.constant 0.353553385 : f32
    %213 = vector.broadcast %cst_84 : f32 to vector<8x16xf32>
    %214 = arith.mulf %212, %213 : vector<8x16xf32>
    %cst_85 = arith.constant dense<0xFF800000> : vector<8xf32>
    %215 = vector.multi_reduction <maximumf>, %214, %cst_85 [1] : vector<8x16xf32> to vector<8xf32>
    %216 = vector.shape_cast %215 : vector<8xf32> to vector<8x1xf32>
    %217 = vector.broadcast %216 : vector<8x1xf32> to vector<8x16xf32>
    %218 = arith.subf %214, %217 : vector<8x16xf32>
    %219 = math.exp %218 : vector<8x16xf32>
    %cst_86 = arith.constant dense<0.000000e+00> : vector<8xf32>
    %220 = vector.multi_reduction <add>, %219, %cst_86 [1] : vector<8x16xf32> to vector<8xf32>
    %221 = vector.shape_cast %220 : vector<8xf32> to vector<8x1xf32>
    %222 = tpu.reciprocal %221 {approx = true} : vector<8x1xf32> -> vector<8x1xf32>
    %223 = vector.broadcast %222 : vector<8x1xf32> to vector<8x16xf32>
    %224 = arith.mulf %219, %223 : vector<8x16xf32>
    %225 = vector.extract_strided_slice %147 {offsets = [0, 24], sizes = [16, 8], strides = [1, 1]} : vector<16x32xf32> to vector<16x8xf32>
    %cst_87 = arith.constant dense<0.000000e+00> : vector<8x8xf32>
    %226 = tpu.matmul %224, %225, %cst_87 {dimension_numbers = #tpu.dot_dimension_numbers<[1], [0], [0], [1], [0, 0, 1, 1], [], []>} : vector<8x16xf32>, vector<16x8xf32>, vector<8x8xf32> -> vector<8x8xf32>
    %227 = vector.extract_strided_slice %148 {offsets = [24, 0], sizes = [8, 32], strides = [1, 1]} : vector<32x32xf32> to vector<8x32xf32>
    %cst_88 = arith.constant dense<0.000000e+00> : vector<8x32xf32>
    %228 = tpu.matmul %226, %227, %cst_88 {dimension_numbers = #tpu.dot_dimension_numbers<[1], [0], [0], [1], [0, 0, 1, 1], [], []>} : vector<8x8xf32>, vector<8x32xf32>, vector<8x32xf32> -> vector<8x32xf32>
    %229 = arith.addf %209, %228 : vector<8x32xf32>
    %c0_89 = arith.constant 0 : index
    %c0_90 = arith.constant 0 : index
    %230 = vector.load %arg13[%c0_89, %c0_90] : memref<1x32xf32, #tpu.memory_space<vmem>>, vector<1x32xf32>
    %231 = vector.broadcast %230 : vector<1x32xf32> to vector<8x32xf32>
    %232 = arith.addf %229, %231 : vector<8x32xf32>
    %233 = arith.addf %135, %232 : vector<8x32xf32>
    %c0_91 = arith.constant 0 : index
    %c0_92 = arith.constant 0 : index
    %234 = vector.load %arg20[%c0_91, %c0_92] : memref<1x32xf32, #tpu.memory_space<vmem>>, vector<1x32xf32>
    %c0_93 = arith.constant 0 : index
    %c0_94 = arith.constant 0 : index
    %235 = vector.load %arg21[%c0_93, %c0_94] : memref<1x32xf32, #tpu.memory_space<vmem>>, vector<1x32xf32>
    %cst_95 = arith.constant dense<0.000000e+00> : vector<8xf32>
    %236 = vector.multi_reduction <add>, %233, %cst_95 [1] : vector<8x32xf32> to vector<8xf32>
    %237 = vector.shape_cast %236 : vector<8xf32> to vector<8x1xf32>
    %cst_96 = arith.constant 3.200000e+01 : f32
    %238 = vector.broadcast %cst_96 : f32 to vector<8x1xf32>
    %239 = arith.divf %237, %238 : vector<8x1xf32>
    %240 = vector.broadcast %239 : vector<8x1xf32> to vector<8x32xf32>
    %241 = arith.subf %233, %240 : vector<8x32xf32>
    %242 = arith.mulf %241, %241 : vector<8x32xf32>
    %cst_97 = arith.constant dense<0.000000e+00> : vector<8xf32>
    %243 = vector.multi_reduction <add>, %242, %cst_97 [1] : vector<8x32xf32> to vector<8xf32>
    %244 = vector.shape_cast %243 : vector<8xf32> to vector<8x1xf32>
    %cst_98 = arith.constant 3.200000e+01 : f32
    %245 = vector.broadcast %cst_98 : f32 to vector<8x1xf32>
    %246 = arith.divf %244, %245 : vector<8x1xf32>
    %247 = vector.broadcast %239 : vector<8x1xf32> to vector<8x32xf32>
    %248 = arith.subf %233, %247 : vector<8x32xf32>
    %cst_99 = arith.constant 9.99999974E-6 : f32
    %249 = vector.broadcast %cst_99 : f32 to vector<8x1xf32>
    %250 = arith.addf %246, %249 : vector<8x1xf32>
    %251 = math.rsqrt %250 : vector<8x1xf32>
    %252 = vector.broadcast %251 : vector<8x1xf32> to vector<8x32xf32>
    %253 = arith.mulf %248, %252 : vector<8x32xf32>
    %254 = vector.broadcast %234 : vector<1x32xf32> to vector<8x32xf32>
    %255 = arith.mulf %253, %254 : vector<8x32xf32>
    %256 = vector.broadcast %235 : vector<1x32xf32> to vector<8x32xf32>
    %257 = arith.addf %255, %256 : vector<8x32xf32>
    %c0_100 = arith.constant 0 : index
    %c0_101 = arith.constant 0 : index
    %258 = vector.load %arg14[%c0_100, %c0_101] : memref<32x2048xf32, #tpu.memory_space<vmem>>, vector<32x2048xf32>
    %cst_102 = arith.constant dense<0.000000e+00> : vector<8x2048xf32>
    %259 = tpu.matmul %257, %258, %cst_102 {dimension_numbers = #tpu.dot_dimension_numbers<[1], [0], [0], [1], [0, 0, 1, 1], [], []>} : vector<8x32xf32>, vector<32x2048xf32>, vector<8x2048xf32> -> vector<8x2048xf32>
    %c0_103 = arith.constant 0 : index
    %c0_104 = arith.constant 0 : index
    %260 = vector.load %arg15[%c0_103, %c0_104] : memref<1x2048xf32, #tpu.memory_space<vmem>>, vector<1x2048xf32>
    %261 = vector.broadcast %260 : vector<1x2048xf32> to vector<8x2048xf32>
    %262 = arith.addf %259, %261 : vector<8x2048xf32>
    %cst_105 = arith.constant 0.000000e+00 : f32
    %263 = vector.broadcast %cst_105 : f32 to vector<8x2048xf32>
    %264 = arith.maximumf %262, %263 : vector<8x2048xf32>
    %c0_106 = arith.constant 0 : index
    %c0_107 = arith.constant 0 : index
    %265 = vector.load %arg16[%c0_106, %c0_107] : memref<2048x32xf32, #tpu.memory_space<vmem>>, vector<2048x32xf32>
    %cst_108 = arith.constant dense<0.000000e+00> : vector<8x32xf32>
    %266 = tpu.matmul %264, %265, %cst_108 {dimension_numbers = #tpu.dot_dimension_numbers<[1], [0], [0], [1], [0, 0, 1, 1], [], []>} : vector<8x2048xf32>, vector<2048x32xf32>, vector<8x32xf32> -> vector<8x32xf32>
    %c0_109 = arith.constant 0 : index
    %c0_110 = arith.constant 0 : index
    %267 = vector.load %arg17[%c0_109, %c0_110] : memref<1x32xf32, #tpu.memory_space<vmem>>, vector<1x32xf32>
    %268 = vector.broadcast %267 : vector<1x32xf32> to vector<8x32xf32>
    %269 = arith.addf %266, %268 : vector<8x32xf32>
    %270 = arith.addf %257, %269 : vector<8x32xf32>
    %c0_111 = arith.constant 0 : index
    %c0_112 = arith.constant 0 : index
    %271 = vector.load %arg22[%c0_111, %c0_112] : memref<1x32xf32, #tpu.memory_space<vmem>>, vector<1x32xf32>
    %c0_113 = arith.constant 0 : index
    %c0_114 = arith.constant 0 : index
    %272 = vector.load %arg23[%c0_113, %c0_114] : memref<1x32xf32, #tpu.memory_space<vmem>>, vector<1x32xf32>
    %cst_115 = arith.constant dense<0.000000e+00> : vector<8xf32>
    %273 = vector.multi_reduction <add>, %270, %cst_115 [1] : vector<8x32xf32> to vector<8xf32>
    %274 = vector.shape_cast %273 : vector<8xf32> to vector<8x1xf32>
    %cst_116 = arith.constant 3.200000e+01 : f32
    %275 = vector.broadcast %cst_116 : f32 to vector<8x1xf32>
    %276 = arith.divf %274, %275 : vector<8x1xf32>
    %277 = vector.broadcast %276 : vector<8x1xf32> to vector<8x32xf32>
    %278 = arith.subf %270, %277 : vector<8x32xf32>
    %279 = arith.mulf %278, %278 : vector<8x32xf32>
    %cst_117 = arith.constant dense<0.000000e+00> : vector<8xf32>
    %280 = vector.multi_reduction <add>, %279, %cst_117 [1] : vector<8x32xf32> to vector<8xf32>
    %281 = vector.shape_cast %280 : vector<8xf32> to vector<8x1xf32>
    %cst_118 = arith.constant 3.200000e+01 : f32
    %282 = vector.broadcast %cst_118 : f32 to vector<8x1xf32>
    %283 = arith.divf %281, %282 : vector<8x1xf32>
    %284 = vector.broadcast %276 : vector<8x1xf32> to vector<8x32xf32>
    %285 = arith.subf %270, %284 : vector<8x32xf32>
    %cst_119 = arith.constant 9.99999974E-6 : f32
    %286 = vector.broadcast %cst_119 : f32 to vector<8x1xf32>
    %287 = arith.addf %283, %286 : vector<8x1xf32>
    %288 = math.rsqrt %287 : vector<8x1xf32>
    %289 = vector.broadcast %288 : vector<8x1xf32> to vector<8x32xf32>
    %290 = arith.mulf %285, %289 : vector<8x32xf32>
    %291 = vector.broadcast %271 : vector<1x32xf32> to vector<8x32xf32>
    %292 = arith.mulf %290, %291 : vector<8x32xf32>
    %293 = vector.broadcast %272 : vector<1x32xf32> to vector<8x32xf32>
    %294 = arith.addf %292, %293 : vector<8x32xf32>
    %c0_120 = arith.constant 0 : index
    %c0_121 = arith.constant 0 : index
    %c0_122 = arith.constant 0 : index
    %295 = vector.load %arg24[%c0_120, %c0_121, %c0_122] : memref<1x8x32xf32, #tpu.memory_space<vmem>>, vector<1x8x32xf32>
    %296 = vector.shape_cast %295 : vector<1x8x32xf32> to vector<8x32xf32>
    %297 = vector.shape_cast %294 : vector<8x32xf32> to vector<1x8x32xf32>
    tpu.vector_store %arg24[%c0_120, %c0_121, %c0_122], %297 {strides = array<i32>} : memref<1x8x32xf32, #tpu.memory_space<vmem>>, vector<1x8x32xf32>,
    return
  }
  func.func @transform_0(%arg0: i32) -> (i32, i32, i32) {
    %c0_i32 = arith.constant 0 : i32
    %c0_i32_0 = arith.constant 0 : i32
    %c0_i32_1 = arith.constant 0 : i32
    return %arg0, %c0_i32, %c0_i32_0 : i32, i32, i32
  }
  func.func @transform_1(%arg0: i32) -> (i32, i32, i32) {
    %c0_i32 = arith.constant 0 : i32
    %c0_i32_0 = arith.constant 0 : i32
    %c0_i32_1 = arith.constant 0 : i32
    return %arg0, %c0_i32, %c0_i32_0 : i32, i32, i32
  }
  func.func @transform_2(%arg0: i32) -> (i32, i32, i32) {
    %c0_i32 = arith.constant 0 : i32
    %c0_i32_0 = arith.constant 0 : i32
    %c0_i32_1 = arith.constant 0 : i32
    return %arg0, %c0_i32, %c0_i32_0 : i32, i32, i32
  }
  func.func @transform_3(%arg0: i32) -> (i32, i32) {
    %c0_i32 = arith.constant 0 : i32
    %c0_i32_0 = arith.constant 0 : i32
    %c0_i32_1 = arith.constant 0 : i32
    return %c0_i32, %c0_i32_0 : i32, i32
  }
  func.func @transform_4(%arg0: i32) -> (i32, i32) {
    %c0_i32 = arith.constant 0 : i32
    %c0_i32_0 = arith.constant 0 : i32
    %c0_i32_1 = arith.constant 0 : i32
    return %c0_i32, %c0_i32_0 : i32, i32
  }
  func.func @transform_5(%arg0: i32) -> (i32, i32) {
    %c0_i32 = arith.constant 0 : i32
    %c0_i32_0 = arith.constant 0 : i32
    %c0_i32_1 = arith.constant 0 : i32
    return %c0_i32, %c0_i32_0 : i32, i32
  }
  func.func @transform_6(%arg0: i32) -> (i32, i32) {
    %c0_i32 = arith.constant 0 : i32
    %c0_i32_0 = arith.constant 0 : i32
    %c0_i32_1 = arith.constant 0 : i32
    return %c0_i32, %c0_i32_0 : i32, i32
  }
  func.func @transform_7(%arg0: i32) -> (i32, i32) {
    %c0_i32 = arith.constant 0 : i32
    %c0_i32_0 = arith.constant 0 : i32
    %c0_i32_1 = arith.constant 0 : i32
    return %c0_i32, %c0_i32_0 : i32, i32
  }
  func.func @transform_8(%arg0: i32) -> (i32, i32) {
    %c0_i32 = arith.constant 0 : i32
    %c0_i32_0 = arith.constant 0 : i32
    %c0_i32_1 = arith.constant 0 : i32
    return %c0_i32, %c0_i32_0 : i32, i32
  }
  func.func @transform_9(%arg0: i32) -> (i32, i32) {
    %c0_i32 = arith.constant 0 : i32
    %c0_i32_0 = arith.constant 0 : i32
    %c0_i32_1 = arith.constant 0 : i32
    return %c0_i32, %c0_i32_0 : i32, i32
  }
  func.func @transform_10(%arg0: i32) -> (i32, i32) {
    %c0_i32 = arith.constant 0 : i32
    %c0_i32_0 = arith.constant 0 : i32
    %c0_i32_1 = arith.constant 0 : i32
    return %c0_i32, %c0_i32_0 : i32, i32
  }
  func.func @transform_11(%arg0: i32) -> (i32, i32) {
    %c0_i32 = arith.constant 0 : i32
    %c0_i32_0 = arith.constant 0 : i32
    %c0_i32_1 = arith.constant 0 : i32
    return %c0_i32, %c0_i32_0 : i32, i32
  }
  func.func @transform_12(%arg0: i32) -> (i32, i32) {
    %c0_i32 = arith.constant 0 : i32
    %c0_i32_0 = arith.constant 0 : i32
    %c0_i32_1 = arith.constant 0 : i32
    return %c0_i32, %c0_i32_0 : i32, i32
  }
  func.func @transform_13(%arg0: i32) -> (i32, i32) {
    %c0_i32 = arith.constant 0 : i32
    %c0_i32_0 = arith.constant 0 : i32
    %c0_i32_1 = arith.constant 0 : i32
    return %c0_i32, %c0_i32_0 : i32, i32
  }
  func.func @transform_14(%arg0: i32) -> (i32, i32) {
    %c0_i32 = arith.constant 0 : i32
    %c0_i32_0 = arith.constant 0 : i32
    %c0_i32_1 = arith.constant 0 : i32
    return %c0_i32, %c0_i32_0 : i32, i32
  }
  func.func @transform_15(%arg0: i32) -> (i32, i32) {
    %c0_i32 = arith.constant 0 : i32
    %c0_i32_0 = arith.constant 0 : i32
    %c0_i32_1 = arith.constant 0 : i32
    return %c0_i32, %c0_i32_0 : i32, i32
  }
  func.func @transform_16(%arg0: i32) -> (i32, i32) {
    %c0_i32 = arith.constant 0 : i32
    %c0_i32_0 = arith.constant 0 : i32
    %c0_i32_1 = arith.constant 0 : i32
    return %c0_i32, %c0_i32_0 : i32, i32
  }
  func.func @transform_17(%arg0: i32) -> (i32, i32) {
    %c0_i32 = arith.constant 0 : i32
    %c0_i32_0 = arith.constant 0 : i32
    %c0_i32_1 = arith.constant 0 : i32
    return %c0_i32, %c0_i32_0 : i32, i32
  }
  func.func @transform_18(%arg0: i32) -> (i32, i32) {
    %c0_i32 = arith.constant 0 : i32
    %c0_i32_0 = arith.constant 0 : i32
    %c0_i32_1 = arith.constant 0 : i32
    return %c0_i32, %c0_i32_0 : i32, i32
  }
  func.func @transform_19(%arg0: i32) -> (i32, i32) {
    %c0_i32 = arith.constant 0 : i32
    %c0_i32_0 = arith.constant 0 : i32
    %c0_i32_1 = arith.constant 0 : i32
    return %c0_i32, %c0_i32_0 : i32, i32
  }
  func.func @transform_20(%arg0: i32) -> (i32, i32) {
    %c0_i32 = arith.constant 0 : i32
    %c0_i32_0 = arith.constant 0 : i32
    %c0_i32_1 = arith.constant 0 : i32
    return %c0_i32, %c0_i32_0 : i32, i32
  }
  func.func @transform_21(%arg0: i32) -> (i32, i32) {
    %c0_i32 = arith.constant 0 : i32
    %c0_i32_0 = arith.constant 0 : i32
    %c0_i32_1 = arith.constant 0 : i32
    return %c0_i32, %c0_i32_0 : i32, i32
  }
  func.func @transform_22(%arg0: i32) -> (i32, i32) {
    %c0_i32 = arith.constant 0 : i32
    %c0_i32_0 = arith.constant 0 : i32
    %c0_i32_1 = arith.constant 0 : i32
    return %c0_i32, %c0_i32_0 : i32, i32
  }
  func.func @transform_23(%arg0: i32) -> (i32, i32, i32) {
    %c0_i32 = arith.constant 0 : i32
    %c0_i32_0 = arith.constant 0 : i32
    %c0_i32_1 = arith.constant 0 : i32
    return %arg0, %c0_i32, %c0_i32_0 : i32, i32, i32
  }
}

</mosaic_0001>

<llo_original>
// kernel: decoder_forward.5
$region0: #{decoder_forward.5}
  #allocation0 [shape = 'u32[]', space=smem, size = 0x4, offset = 0x4, fixed_abs, tag = 'smem constant byte address 0x4 - core index']
  #allocation1 [shape = 'u32[144,128]{1,0:T(1,128)}', space=vmem, size = 0x12000, scoped, tag = 'internal scratch']
  %s0 = inlined_call_operand.vmem [shape: f32[16,32], index: 0, kind: input, shape index: {}]
  %s1 = inlined_call_operand.vmem [shape: f32[32,128], index: 1, kind: input, shape index: {}]
  %s2 = inlined_call_operand.vmem [shape: f32[1,128], index: 2, kind: input, shape index: {}]
  %s3 = inlined_call_operand.vmem [shape: f32[16,128], index: 3, kind: output, shape index: {}]
  %s4 = sld [smem:[#allocation0]]
  $region45: #{decoder_forward.5} parent=0
    _
  %s6 = ssub.s32 1, %s4
  %s7 = scalar_select 0, %s6, %s4
  loop: start=0, step=1, limit=4
  $region2: #{decoder_forward.5} parent=0 // loop_pre_header
    _
  $region3: #{decoder_forward.5} parent=0 // loop_header
    %s9 = sphi 0, %s13
    %p10 = scmp.ge.s32.totalorder %s9, 4
    %s19 = sphi 0, %s21
    %s22 = sphi 0, %s19
    %s23 = sphi 0, %s22
    %s39 = sphi 0, %s23
    %s43 = sphi 0, %s43
    %s45 = sphi 0, %s43
    %s46 = sphi 0, %s45
    %s60 = sphi 0, %s46
    %s64 = sphi 0, %s64
    %s66 = sphi 0, %s64
    %s67 = sphi 0, %s66
    %s81 = sphi 0, %s67
    %s87 = sphi 0, %s89
    %s90 = sphi 0, %s87
    %s91 = sphi 0, %s90
    %s107 = sphi 0, %s91
  $region4: #{decoder_forward.5} parent=0 // loop_header_branch
    %12 = sbr.rel (%p10) target = $region8
  $region5: #{decoder_forward.5} parent=0 // loop_body
    %s14 = ssub.s32 %s9, 1
    %s15 = ssub.s32 %s9, 2
    %s16 = sadd.s32 %s9, 1
    %s17 = ssub.s32 %s9, %s16
    %p18 = scmp.eq.s32.totalorder %s17, 0
    %s20 = sadd.s32 %s19, 1
    %s21 = scalar_select %p18, %s19, %s20
    %p24 = pneg %p18
    %p25 = scmp.eq.s32.totalorder %s9, 1
    %p26 = por %p24, %p25
    %p27 = scmp.ne.s32.totalorder %s19, %s22
    %p28 = scmp.eq.s32.totalorder %s9, 0
    %p29 = por %p27, %p28
    %p30 = scmp.ne.s32.totalorder %s19, %s22
    %p31 = scmp.eq.s32.totalorder %s14, 1
    %p32 = por %p30, %p31
    %p33 = scmp.ne.s32.totalorder %s22, %s23
    %p34 = scmp.eq.s32.totalorder %s14, 0
    %p35 = por %p33, %p34
    %p36 = scmp.ne.s32.totalorder %s22, %s23
    %p37 = scmp.eq.s32.totalorder %s15, 1
    %p38 = por %p36, %p37
    %p40 = scmp.ne.s32.totalorder %s23, %s39
    %p41 = scmp.eq.s32.totalorder %s15, 0
    %p42 = por %p40, %p41
    %s44 = sadd.s32 %s43, 1
    %p47 = scmp.eq.s32.totalorder %s9, 1
    %p48 = scmp.ne.s32.totalorder %s43, %s45
    %p49 = scmp.eq.s32.totalorder %s9, 0
    %p50 = por %p48, %p49
    %p51 = scmp.ne.s32.totalorder %s43, %s45
    %p52 = scmp.eq.s32.totalorder %s14, 1
    %p53 = por %p51, %p52
    %p54 = scmp.ne.s32.totalorder %s45, %s46
    %p55 = scmp.eq.s32.totalorder %s14, 0
    %p56 = por %p54, %p55
    %p57 = scmp.ne.s32.totalorder %s45, %s46
    %p58 = scmp.eq.s32.totalorder %s15, 1
    %p59 = por %p57, %p58
    %p61 = scmp.ne.s32.totalorder %s46, %s60
    %p62 = scmp.eq.s32.totalorder %s15, 0
    %p63 = por %p61, %p62
    %s65 = sadd.s32 %s64, 1
    %p68 = scmp.eq.s32.totalorder %s9, 1
    %p69 = scmp.ne.s32.totalorder %s64, %s66
    %p70 = scmp.eq.s32.totalorder %s9, 0
    %p71 = por %p69, %p70
    %p72 = scmp.ne.s32.totalorder %s64, %s66
    %p73 = scmp.eq.s32.totalorder %s14, 1
    %p74 = por %p72, %p73
    %p75 = scmp.ne.s32.totalorder %s66, %s67
    %p76 = scmp.eq.s32.totalorder %s14, 0
    %p77 = por %p75, %p76
    %p78 = scmp.ne.s32.totalorder %s66, %s67
    %p79 = scmp.eq.s32.totalorder %s15, 1
    %p80 = por %p78, %p79
    %p82 = scmp.ne.s32.totalorder %s67, %s81
    %p83 = scmp.eq.s32.totalorder %s15, 0
    %p84 = por %p82, %p83
    %s85 = ssub.s32 %s9, %s16
    %p86 = scmp.eq.s32.totalorder %s85, 0
    %s88 = sadd.s32 %s87, 1
    %s89 = scalar_select %p86, %s87, %s88
    %p92 = pneg %p86
    %p93 = scmp.eq.s32.totalorder %s9, 1
    %p94 = por %p92, %p93
    %p95 = scmp.ne.s32.totalorder %s87, %s90
    %p96 = scmp.eq.s32.totalorder %s9, 0
    %p97 = por %p95, %p96
    %p98 = scmp.ne.s32.totalorder %s87, %s90
    %p99 = scmp.eq.s32.totalorder %s14, 1
    %p100 = por %p98, %p99
    %p101 = scmp.ne.s32.totalorder %s90, %s91
    %p102 = scmp.eq.s32.totalorder %s14, 0
    %p103 = por %p101, %p102
    %p104 = scmp.ne.s32.totalorder %s90, %s91
    %p105 = scmp.eq.s32.totalorder %s15, 1
    %p106 = por %p104, %p105
    %p108 = scmp.ne.s32.totalorder %s91, %s107
    %p109 = scmp.eq.s32.totalorder %s15, 0
    %p110 = por %p108, %p109
    %p111 = scmp.le.s32.totalorder 1, %s9
    %p112 = scmp.lt.s32.totalorder %s9, 3
    %p113 = pnand %p111, %p112
    %p114 = pneg %p113
    // Predicated region
    $region9: #{decoder_forward.5} parent=5 // pred_check
      _
    $region10: #{decoder_forward.5} parent=5 // pred_check_branch
      %116 = sbr.rel (%p113) target = $region12
    $region11: #{decoder_forward.5} parent=5 // pred_region
      %s117 = ssub.s32 %s9, 1
      // Predicated region
      $region13: #{decoder_forward.5} parent=11 // pred_check
        %p118 = pneg %p56
      $region14: #{decoder_forward.5} parent=11 // pred_check_branch
        %120 = sbr.rel (%p118) target = $region16
      $region15: #{decoder_forward.5} parent=11 // pred_region
        _
      $region16: #{decoder_forward.5} parent=11 // pred_fallthru
        _
      // Predicated region
      $region17: #{decoder_forward.5} parent=11 // pred_check
        %p121 = pneg %p77
      $region18: #{decoder_forward.5} parent=11 // pred_check_branch
        %123 = sbr.rel (%p121) target = $region20
      $region19: #{decoder_forward.5} parent=11 // pred_region
        _
      $region20: #{decoder_forward.5} parent=11 // pred_fallthru
        _
    $region12: #{decoder_forward.5} parent=5 // pred_fallthru
      _
    %p124 = scmp.lt.s32.totalorder %s9, 2
    // Predicated region
    $region21: #{decoder_forward.5} parent=5 // pred_check
      %p125 = pneg %p124
    $region22: #{decoder_forward.5} parent=5 // pred_check_branch
      %127 = sbr.rel (%p125) target = $region24
    $region23: #{decoder_forward.5} parent=5 // pred_region
      // Predicated region
      $region25: #{decoder_forward.5} parent=23 // pred_check
        %p128 = pneg %p29
      $region26: #{decoder_forward.5} parent=23 // pred_check_branch
        %130 = sbr.rel (%p128) target = $region28
      $region27: #{decoder_forward.5} parent=23 // pred_region
        %p131 = scmp.lt.s32.totalorder %s9, 1
        %s132 = scalar_select %p131, %s9, 1
        %s133 = smul.addr %s132, 8
        %s134 = scalar_lea.vmem %s0, %s133
      $region28: #{decoder_forward.5} parent=23 // pred_fallthru
        _
    $region24: #{decoder_forward.5} parent=5 // pred_fallthru
      _
    %p135 = scmp.le.s32.totalorder 1, %s9
    %p136 = scmp.lt.s32.totalorder %s9, 3
    %p137 = pnand %p135, %p136
    %p138 = pneg %p137
    // Predicated region
    $region29: #{decoder_forward.5} parent=5 // pred_check
      _
    $region30: #{decoder_forward.5} parent=5 // pred_check_branch
      %140 = sbr.rel (%p137) target = $region32
    $region31: #{decoder_forward.5} parent=5 // pred_region
      %s141 = ssub.s32 %s9, 1
      %p142 = scmp.lt.s32.totalorder %s14, 1
      %s143 = scalar_select %p142, %s14, 1
      %s144 = smul.addr %s143, 8
      %s145 = scalar_lea.vmem %s0, %s144
      %p146 = pneg %p35
      %p147 = pneg %p32
      %p148 = pneg %p56
      %p149 = pneg %p53
      %p150 = pneg %p77
      %p151 = pneg %p74
      %p152 = pneg %p103
      %p153 = pneg %p100
      %p154 = scmp.lt.s32.totalorder %s14, 1
      %s155 = scalar_select %p154, %s14, 1
      %s156 = smul.addr %s155, 8
      %s157 = scalar_lea.vmem %s3, %s156
      %p158 = scmp.lt.s32.totalorder %s14, 1
      %s159 = scalar_select %p158, %s14, 1
      %s160 = smul.addr %s159, 8
      %s161 = scalar_lea.vmem %s0, %s160
      %p162 = scmp.lt.s32.totalorder %s14, 1
      %s163 = scalar_select %p162, %s14, 1
      %s164 = smul.addr %s163, 8
      %s165 = scalar_lea.vmem %s3, %s164
      %v166 = vld [vmem:[%s161] sm:$0xff]
      %v167 = vld [vmem:[%s1] sm:$0xff]
      %v168 = vld [vmem:[%s1 + $0x8] sm:$0xff]
      %v169 = vld [vmem:[%s1 + $0x10] sm:$0xff]
      %v170 = vld [vmem:[%s1 + $0x18] sm:$0xff]
      %v171 = vld [vmem:[%s2] sm:$0x1]
      %v173 = vlaneseq
      %v174 = vshrl.u32 %v173, 7
      %v175 = vsub.s32 0, %v174
      %v176 = vrot.slane %v171, %v175
      %vm178 = vcmask 261120
      %v180 = vsel %vm178, %v166, 0
      %182 = vmatprep.subr.mxu0 0.0
      %183 = vmatpush1.msra.mxu0 0.0
      %184 = vmatprep.subr.mxu0 0.0
      %185 = vmatpush1.msra.mxu0 0.0
      %186 = vmatprep.subr.mxu0 0.0
      %187 = vmatpush1.msra.mxu0 0.0
      %188 = vmatprep.subr.mxu0 0.0
      %189 = vmatpush1.msra.mxu0 0.0
      %190 = vmatprep.subr.mxu0 0.0
      %191 = vmatpush1.msra.mxu0 0.0
      %192 = vmatprep.subr.mxu0 0.0
      %193 = vmatpush1.msra.mxu0 0.0
      %194 = vmatprep.subr.mxu0 0.0
      %195 = vmatpush1.msra.mxu0 0.0
      %196 = vmatprep.subr.mxu0 0.0
      %197 = vmatpush1.msra.mxu0 0.0
      %198 = vmatprep.subr.mxu0 0.0
      %199 = vmatpush1.msra.mxu0 0.0
      %200 = vmatprep.subr.mxu0 0.0
      %201 = vmatpush1.msra.mxu0 0.0
      %202 = vmatprep.subr.mxu0 0.0
      %203 = vmatpush1.msra.mxu0 0.0
      %204 = vmatprep.subr.mxu0 0.0
      %205 = vmatpush1.msra.mxu0 0.0
      %206 = vmatprep.subr.mxu0 0.0
      %207 = vmatpush1.msra.mxu0 %v170
      %208 = vmatprep.subr.mxu0 0.0
      %209 = vmatpush1.msra.mxu0 %v169
      %210 = vmatprep.subr.mxu0 0.0
      %211 = vmatpush1.msra.mxu0 %v168
      %212 = vmatprep.subr.mxu0 0.0
      %213 = vmatpush1.msra.mxu0 %v167
      %214 = vmatprep.subr.mxu0 0.0
      %215 = vmatpush2.msra.mxu0 0.0
      %216 = vmatprep.subr.mxu0 0.0
      %217 = vmatpush2.msra.mxu0 0.0
      %218 = vmatprep.subr.mxu0 0.0
      %219 = vmatpush2.msra.mxu0 0.0
      %220 = vmatprep.subr.mxu0 0.0
      %221 = vmatpush2.msra.mxu0 0.0
      %222 = vmatprep.subr.mxu0 0.0
      %223 = vmatpush2.msra.mxu0 0.0
      %224 = vmatprep.subr.mxu0 0.0
      %225 = vmatpush2.msra.mxu0 0.0
      %226 = vmatprep.subr.mxu0 0.0
      %227 = vmatpush2.msra.mxu0 0.0
      %228 = vmatprep.subr.mxu0 0.0
      %229 = vmatpush2.msra.mxu0 0.0
      %230 = vmatprep.subr.mxu0 0.0
      %231 = vmatpush2.msra.mxu0 0.0
      %232 = vmatprep.subr.mxu0 0.0
      %233 = vmatpush2.msra.mxu0 0.0
      %234 = vmatprep.subr.mxu0 0.0
      %235 = vmatpush2.msra.mxu0 0.0
      %236 = vmatprep.subr.mxu0 0.0
      %237 = vmatpush2.msra.mxu0 0.0
      %238 = vmatprep.subr.mxu0 0.0
      %239 = vmatpush2.msra.mxu0 0.0
      %240 = vmatprep.subr.mxu0 0.0
      %241 = vmatpush2.msra.mxu0 0.0
      %242 = vmatprep.subr.mxu0 0.0
      %243 = vmatpush2.msra.mxu0 0.0
      %244 = vmatprep.subr.mxu0 0.0
      %245 = vmatpush2.msra.mxu0 0.0
      %246 = vmatprep.mubr.f32.mxu0 0.0
      %247 = vmatmul.mubr.f32.gmra.mxu0 %v180
      %v248 = vpop.f32.mrf.mxu0
      %v249 = vadd.f32 %v176, %v248
      %v250 = vpop.f32.mrf.mxu0
      %251 = vdwg.mxu0
      %252 = vst [vmem:[%s165] sm:$0xff] %v249
      %p253 = scmp.lt.s32.totalorder %s14, 1
      %s254 = scalar_select %p253, %s14, 1
      %s255 = smul.addr %s254, 8
      %s256 = scalar_lea.vmem %s3, %s255
      // Predicated region
      $region33: #{decoder_forward.5} parent=31 // pred_check
        %p257 = pneg %p100
      $region34: #{decoder_forward.5} parent=31 // pred_check_branch
        %259 = sbr.rel (%p257) target = $region36
      $region35: #{decoder_forward.5} parent=31 // pred_region
        _
      $region36: #{decoder_forward.5} parent=31 // pred_fallthru
        _
    $region32: #{decoder_forward.5} parent=5 // pred_fallthru
      _
    %p260 = scmp.le.s32.totalorder 2, %s9
    // Predicated region
    $region37: #{decoder_forward.5} parent=5 // pred_check
      %p261 = pneg %p260
    $region38: #{decoder_forward.5} parent=5 // pred_check_branch
      %263 = sbr.rel (%p261) target = $region40
    $region39: #{decoder_forward.5} parent=5 // pred_region
      %s264 = ssub.s32 %s9, 2
      // Predicated region
      $region41: #{decoder_forward.5} parent=39 // pred_check
        %p265 = pneg %p106
      $region42: #{decoder_forward.5} parent=39 // pred_check_branch
        %267 = sbr.rel (%p265) target = $region44
      $region43: #{decoder_forward.5} parent=39 // pred_region
        %p268 = scmp.lt.s32.totalorder %s15, 1
        %s269 = scalar_select %p268, %s15, 1
        %s270 = smul.addr %s269, 8
        %s271 = scalar_lea.vmem %s3, %s270
      $region44: #{decoder_forward.5} parent=39 // pred_fallthru
        _
    $region40: #{decoder_forward.5} parent=5 // pred_fallthru
      _
  $region6: #{decoder_forward.5} parent=0 // loop_footer
    %s13 = sadd.s32 1, %s9
  $region7: #{decoder_forward.5} parent=0 // loop_footer_branch
    %8 = sbr.rel target = $region3
  $region8: #{decoder_forward.5} parent=0 // loop_exit
    _

// kernel: decoder_forward.3
$region0: #{decoder_forward.3}
  #allocation0 [shape = 'u32[]', space=smem, size = 0x4, offset = 0x4, fixed_abs, tag = 'smem constant byte address 0x4 - core index']
  #allocation1 [shape = 'u32[144,128]{1,0:T(1,128)}', space=vmem, size = 0x12000, scoped, tag = 'internal scratch']
  %s0 = inlined_call_operand.vmem [shape: f32[2,8,32], index: 0, kind: input, shape index: {}]
  %s1 = inlined_call_operand.vmem [shape: f32[2,16,32], index: 1, kind: input, shape index: {}]
  %s2 = inlined_call_operand.vmem [shape: f32[2,1,8], index: 2, kind: input, shape index: {}]
  %s3 = inlined_call_operand.vmem [shape: f32[32,96], index: 3, kind: input, shape index: {}]
  %s4 = inlined_call_operand.vmem [shape: f32[1,96], index: 4, kind: input, shape index: {}]
  %s5 = inlined_call_operand.vmem [shape: f32[32,32], index: 5, kind: input, shape index: {}]
  %s6 = inlined_call_operand.vmem [shape: f32[1,32], index: 6, kind: input, shape index: {}]
  %s7 = inlined_call_operand.vmem [shape: f32[32,32], index: 7, kind: input, shape index: {}]
  %s8 = inlined_call_operand.vmem [shape: f32[1,32], index: 8, kind: input, shape index: {}]
  %s9 = inlined_call_operand.vmem [shape: f32[32,64], index: 9, kind: input, shape index: {}]
  %s10 = inlined_call_operand.vmem [shape: f32[1,64], index: 10, kind: input, shape index: {}]
  %s11 = inlined_call_operand.vmem [shape: f32[32,32], index: 11, kind: input, shape index: {}]
  %s12 = inlined_call_operand.vmem [shape: f32[1,32], index: 12, kind: input, shape index: {}]
  %s13 = inlined_call_operand.vmem [shape: f32[32,2048], index: 13, kind: input, shape index: {}]
  %s14 = inlined_call_operand.vmem [shape: f32[1,2048], index: 14, kind: input, shape index: {}]
  %s15 = inlined_call_operand.vmem [shape: f32[2048,32], index: 15, kind: input, shape index: {}]
  %s16 = inlined_call_operand.vmem [shape: f32[1,32], index: 16, kind: input, shape index: {}]
  %s17 = inlined_call_operand.vmem [shape: f32[1,32], index: 17, kind: input, shape index: {}]
  %s18 = inlined_call_operand.vmem [shape: f32[1,32], index: 18, kind: input, shape index: {}]
  %s19 = inlined_call_operand.vmem [shape: f32[1,32], index: 19, kind: input, shape index: {}]
  %s20 = inlined_call_operand.vmem [shape: f32[1,32], index: 20, kind: input, shape index: {}]
  %s21 = inlined_call_operand.vmem [shape: f32[1,32], index: 21, kind: input, shape index: {}]
  %s22 = inlined_call_operand.vmem [shape: f32[1,32], index: 22, kind: input, shape index: {}]
  %s23 = inlined_call_operand.vmem [shape: f32[2,8,32], index: 23, kind: output, shape index: {}]
  %s24 = sld [smem:[#allocation0]]
  $region125: #{decoder_forward.3} parent=0
    _
  %s26 = ssub.s32 1, %s24
  %s27 = scalar_select 0, %s26, %s24
  loop: start=0, step=1, limit=4
  $region2: #{decoder_forward.3} parent=0 // loop_pre_header
    _
  $region3: #{decoder_forward.3} parent=0 // loop_header
    %s29 = sphi 0, %s33
    %p30 = scmp.ge.s32.totalorder %s29, 4
    %s39 = sphi 0, %s41
    %s42 = sphi 0, %s39
    %s43 = sphi 0, %s42
    %s59 = sphi 0, %s43
    %s65 = sphi 0, %s67
    %s68 = sphi 0, %s65
    %s69 = sphi 0, %s68
    %s85 = sphi 0, %s69
    %s91 = sphi 0, %s93
    %s94 = sphi 0, %s91
    %s95 = sphi 0, %s94
    %s111 = sphi 0, %s95
    %s115 = sphi 0, %s115
    %s117 = sphi 0, %s115
    %s118 = sphi 0, %s117
    %s132 = sphi 0, %s118
    %s136 = sphi 0, %s136
    %s138 = sphi 0, %s136
    %s139 = sphi 0, %s138
    %s153 = sphi 0, %s139
    %s157 = sphi 0, %s157
    %s159 = sphi 0, %s157
    %s160 = sphi 0, %s159
    %s174 = sphi 0, %s160
    %s178 = sphi 0, %s178
    %s180 = sphi 0, %s178
    %s181 = sphi 0, %s180
    %s195 = sphi 0, %s181
    %s199 = sphi 0, %s199
    %s201 = sphi 0, %s199
    %s202 = sphi 0, %s201
    %s216 = sphi 0, %s202
    %s220 = sphi 0, %s220
    %s222 = sphi 0, %s220
    %s223 = sphi 0, %s222
    %s237 = sphi 0, %s223
    %s241 = sphi 0, %s241
    %s243 = sphi 0, %s241
    %s244 = sphi 0, %s243
    %s258 = sphi 0, %s244
    %s262 = sphi 0, %s262
    %s264 = sphi 0, %s262
    %s265 = sphi 0, %s264
    %s279 = sphi 0, %s265
    %s283 = sphi 0, %s283
    %s285 = sphi 0, %s283
    %s286 = sphi 0, %s285
    %s300 = sphi 0, %s286
    %s304 = sphi 0, %s304
    %s306 = sphi 0, %s304
    %s307 = sphi 0, %s306
    %s321 = sphi 0, %s307
    %s325 = sphi 0, %s325
    %s327 = sphi 0, %s325
    %s328 = sphi 0, %s327
    %s342 = sphi 0, %s328
    %s346 = sphi 0, %s346
    %s348 = sphi 0, %s346
    %s349 = sphi 0, %s348
    %s363 = sphi 0, %s349
    %s367 = sphi 0, %s367
    %s369 = sphi 0, %s367
    %s370 = sphi 0, %s369
    %s384 = sphi 0, %s370
    %s388 = sphi 0, %s388
    %s390 = sphi 0, %s388
    %s391 = sphi 0, %s390
    %s405 = sphi 0, %s391
    %s409 = sphi 0, %s409
    %s411 = sphi 0, %s409
    %s412 = sphi 0, %s411
    %s426 = sphi 0, %s412
    %s430 = sphi 0, %s430
    %s432 = sphi 0, %s430
    %s433 = sphi 0, %s432
    %s447 = sphi 0, %s433
    %s451 = sphi 0, %s451
    %s453 = sphi 0, %s451
    %s454 = sphi 0, %s453
    %s468 = sphi 0, %s454
    %s472 = sphi 0, %s472
    %s474 = sphi 0, %s472
    %s475 = sphi 0, %s474
    %s489 = sphi 0, %s475
    %s493 = sphi 0, %s493
    %s495 = sphi 0, %s493
    %s496 = sphi 0, %s495
    %s510 = sphi 0, %s496
    %s514 = sphi 0, %s514
    %s516 = sphi 0, %s514
    %s517 = sphi 0, %s516
    %s531 = sphi 0, %s517
    %s537 = sphi 0, %s539
    %s540 = sphi 0, %s537
    %s541 = sphi 0, %s540
    %s557 = sphi 0, %s541
  $region4: #{decoder_forward.3} parent=0 // loop_header_branch
    %32 = sbr.rel (%p30) target = $region8
  $region5: #{decoder_forward.3} parent=0 // loop_body
    %s34 = ssub.s32 %s29, 1
    %s35 = ssub.s32 %s29, 2
    %s36 = sadd.s32 %s29, 1
    %s37 = ssub.s32 %s29, %s36
    %p38 = scmp.eq.s32.totalorder %s37, 0
    %s40 = sadd.s32 %s39, 1
    %s41 = scalar_select %p38, %s39, %s40
    %p44 = pneg %p38
    %p45 = scmp.eq.s32.totalorder %s29, 1
    %p46 = por %p44, %p45
    %p47 = scmp.ne.s32.totalorder %s39, %s42
    %p48 = scmp.eq.s32.totalorder %s29, 0
    %p49 = por %p47, %p48
    %p50 = scmp.ne.s32.totalorder %s39, %s42
    %p51 = scmp.eq.s32.totalorder %s34, 1
    %p52 = por %p50, %p51
    %p53 = scmp.ne.s32.totalorder %s42, %s43
    %p54 = scmp.eq.s32.totalorder %s34, 0
    %p55 = por %p53, %p54
    %p56 = scmp.ne.s32.totalorder %s42, %s43
    %p57 = scmp.eq.s32.totalorder %s35, 1
    %p58 = por %p56, %p57
    %p60 = scmp.ne.s32.totalorder %s43, %s59
    %p61 = scmp.eq.s32.totalorder %s35, 0
    %p62 = por %p60, %p61
    %s63 = ssub.s32 %s29, %s36
    %p64 = scmp.eq.s32.totalorder %s63, 0
    %s66 = sadd.s32 %s65, 1
    %s67 = scalar_select %p64, %s65, %s66
    %p70 = pneg %p64
    %p71 = scmp.eq.s32.totalorder %s29, 1
    %p72 = por %p70, %p71
    %p73 = scmp.ne.s32.totalorder %s65, %s68
    %p74 = scmp.eq.s32.totalorder %s29, 0
    %p75 = por %p73, %p74
    %p76 = scmp.ne.s32.totalorder %s65, %s68
    %p77 = scmp.eq.s32.totalorder %s34, 1
    %p78 = por %p76, %p77
    %p79 = scmp.ne.s32.totalorder %s68, %s69
    %p80 = scmp.eq.s32.totalorder %s34, 0
    %p81 = por %p79, %p80
    %p82 = scmp.ne.s32.totalorder %s68, %s69
    %p83 = scmp.eq.s32.totalorder %s35, 1
    %p84 = por %p82, %p83
    %p86 = scmp.ne.s32.totalorder %s69, %s85
    %p87 = scmp.eq.s32.totalorder %s35, 0
    %p88 = por %p86, %p87
    %s89 = ssub.s32 %s29, %s36
    %p90 = scmp.eq.s32.totalorder %s89, 0
    %s92 = sadd.s32 %s91, 1
    %s93 = scalar_select %p90, %s91, %s92
    %p96 = pneg %p90
    %p97 = scmp.eq.s32.totalorder %s29, 1
    %p98 = por %p96, %p97
    %p99 = scmp.ne.s32.totalorder %s91, %s94
    %p100 = scmp.eq.s32.totalorder %s29, 0
    %p101 = por %p99, %p100
    %p102 = scmp.ne.s32.totalorder %s91, %s94
    %p103 = scmp.eq.s32.totalorder %s34, 1
    %p104 = por %p102, %p103
    %p105 = scmp.ne.s32.totalorder %s94, %s95
    %p106 = scmp.eq.s32.totalorder %s34, 0
    %p107 = por %p105, %p106
    %p108 = scmp.ne.s32.totalorder %s94, %s95
    %p109 = scmp.eq.s32.totalorder %s35, 1
    %p110 = por %p108, %p109
    %p112 = scmp.ne.s32.totalorder %s95, %s111
    %p113 = scmp.eq.s32.totalorder %s35, 0
    %p114 = por %p112, %p113
    %s116 = sadd.s32 %s115, 1
    %p119 = scmp.eq.s32.totalorder %s29, 1
    %p120 = scmp.ne.s32.totalorder %s115, %s117
    %p121 = scmp.eq.s32.totalorder %s29, 0
    %p122 = por %p120, %p121
    %p123 = scmp.ne.s32.totalorder %s115, %s117
    %p124 = scmp.eq.s32.totalorder %s34, 1
    %p125 = por %p123, %p124
    %p126 = scmp.ne.s32.totalorder %s117, %s118
    %p127 = scmp.eq.s32.totalorder %s34, 0
    %p128 = por %p126, %p127
    %p129 = scmp.ne.s32.totalorder %s117, %s118
    %p130 = scmp.eq.s32.totalorder %s35, 1
    %p131 = por %p129, %p130
    %p133 = scmp.ne.s32.totalorder %s118, %s132
    %p134 = scmp.eq.s32.totalorder %s35, 0
    %p135 = por %p133, %p134
    %s137 = sadd.s32 %s136, 1
    %p140 = scmp.eq.s32.totalorder %s29, 1
    %p141 = scmp.ne.s32.totalorder %s136, %s138
    %p142 = scmp.eq.s32.totalorder %s29, 0
    %p143 = por %p141, %p142
    %p144 = scmp.ne.s32.totalorder %s136, %s138
    %p145 = scmp.eq.s32.totalorder %s34, 1
    %p146 = por %p144, %p145
    %p147 = scmp.ne.s32.totalorder %s138, %s139
    %p148 = scmp.eq.s32.totalorder %s34, 0
    %p149 = por %p147, %p148
    %p150 = scmp.ne.s32.totalorder %s138, %s139
    %p151 = scmp.eq.s32.totalorder %s35, 1
    %p152 = por %p150, %p151
    %p154 = scmp.ne.s32.totalorder %s139, %s153
    %p155 = scmp.eq.s32.totalorder %s35, 0
    %p156 = por %p154, %p155
    %s158 = sadd.s32 %s157, 1
    %p161 = scmp.eq.s32.totalorder %s29, 1
    %p162 = scmp.ne.s32.totalorder %s157, %s159
    %p163 = scmp.eq.s32.totalorder %s29, 0
    %p164 = por %p162, %p163
    %p165 = scmp.ne.s32.totalorder %s157, %s159
    %p166 = scmp.eq.s32.totalorder %s34, 1
    %p167 = por %p165, %p166
    %p168 = scmp.ne.s32.totalorder %s159, %s160
    %p169 = scmp.eq.s32.totalorder %s34, 0
    %p170 = por %p168, %p169
    %p171 = scmp.ne.s32.totalorder %s159, %s160
    %p172 = scmp.eq.s32.totalorder %s35, 1
    %p173 = por %p171, %p172
    %p175 = scmp.ne.s32.totalorder %s160, %s174
    %p176 = scmp.eq.s32.totalorder %s35, 0
    %p177 = por %p175, %p176
    %s179 = sadd.s32 %s178, 1
    %p182 = scmp.eq.s32.totalorder %s29, 1
    %p183 = scmp.ne.s32.totalorder %s178, %s180
    %p184 = scmp.eq.s32.totalorder %s29, 0
    %p185 = por %p183, %p184
    %p186 = scmp.ne.s32.totalorder %s178, %s180
    %p187 = scmp.eq.s32.totalorder %s34, 1
    %p188 = por %p186, %p187
    %p189 = scmp.ne.s32.totalorder %s180, %s181
    %p190 = scmp.eq.s32.totalorder %s34, 0
    %p191 = por %p189, %p190
    %p192 = scmp.ne.s32.totalorder %s180, %s181
    %p193 = scmp.eq.s32.totalorder %s35, 1
    %p194 = por %p192, %p193
    %p196 = scmp.ne.s32.totalorder %s181, %s195
    %p197 = scmp.eq.s32.totalorder %s35, 0
    %p198 = por %p196, %p197
    %s200 = sadd.s32 %s199, 1
    %p203 = scmp.eq.s32.totalorder %s29, 1
    %p204 = scmp.ne.s32.totalorder %s199, %s201
    %p205 = scmp.eq.s32.totalorder %s29, 0
    %p206 = por %p204, %p205
    %p207 = scmp.ne.s32.totalorder %s199, %s201
    %p208 = scmp.eq.s32.totalorder %s34, 1
    %p209 = por %p207, %p208
    %p210 = scmp.ne.s32.totalorder %s201, %s202
    %p211 = scmp.eq.s32.totalorder %s34, 0
    %p212 = por %p210, %p211
    %p213 = scmp.ne.s32.totalorder %s201, %s202
    %p214 = scmp.eq.s32.totalorder %s35, 1
    %p215 = por %p213, %p214
    %p217 = scmp.ne.s32.totalorder %s202, %s216
    %p218 = scmp.eq.s32.totalorder %s35, 0
    %p219 = por %p217, %p218
    %s221 = sadd.s32 %s220, 1
    %p224 = scmp.eq.s32.totalorder %s29, 1
    %p225 = scmp.ne.s32.totalorder %s220, %s222
    %p226 = scmp.eq.s32.totalorder %s29, 0
    %p227 = por %p225, %p226
    %p228 = scmp.ne.s32.totalorder %s220, %s222
    %p229 = scmp.eq.s32.totalorder %s34, 1
    %p230 = por %p228, %p229
    %p231 = scmp.ne.s32.totalorder %s222, %s223
    %p232 = scmp.eq.s32.totalorder %s34, 0
    %p233 = por %p231, %p232
    %p234 = scmp.ne.s32.totalorder %s222, %s223
    %p235 = scmp.eq.s32.totalorder %s35, 1
    %p236 = por %p234, %p235
    %p238 = scmp.ne.s32.totalorder %s223, %s237
    %p239 = scmp.eq.s32.totalorder %s35, 0
    %p240 = por %p238, %p239
    %s242 = sadd.s32 %s241, 1
    %p245 = scmp.eq.s32.totalorder %s29, 1
    %p246 = scmp.ne.s32.totalorder %s241, %s243
    %p247 = scmp.eq.s32.totalorder %s29, 0
    %p248 = por %p246, %p247
    %p249 = scmp.ne.s32.totalorder %s241, %s243
    %p250 = scmp.eq.s32.totalorder %s34, 1
    %p251 = por %p249, %p250
    %p252 = scmp.ne.s32.totalorder %s243, %s244
    %p253 = scmp.eq.s32.totalorder %s34, 0
    %p254 = por %p252, %p253
    %p255 = scmp.ne.s32.totalorder %s243, %s244
    %p256 = scmp.eq.s32.totalorder %s35, 1
    %p257 = por %p255, %p256
    %p259 = scmp.ne.s32.totalorder %s244, %s258
    %p260 = scmp.eq.s32.totalorder %s35, 0
    %p261 = por %p259, %p260
    %s263 = sadd.s32 %s262, 1
    %p266 = scmp.eq.s32.totalorder %s29, 1
    %p267 = scmp.ne.s32.totalorder %s262, %s264
    %p268 = scmp.eq.s32.totalorder %s29, 0
    %p269 = por %p267, %p268
    %p270 = scmp.ne.s32.totalorder %s262, %s264
    %p271 = scmp.eq.s32.totalorder %s34, 1
    %p272 = por %p270, %p271
    %p273 = scmp.ne.s32.totalorder %s264, %s265
    %p274 = scmp.eq.s32.totalorder %s34, 0
    %p275 = por %p273, %p274
    %p276 = scmp.ne.s32.totalorder %s264, %s265
    %p277 = scmp.eq.s32.totalorder %s35, 1
    %p278 = por %p276, %p277
    %p280 = scmp.ne.s32.totalorder %s265, %s279
    %p281 = scmp.eq.s32.totalorder %s35, 0
    %p282 = por %p280, %p281
    %s284 = sadd.s32 %s283, 1
    %p287 = scmp.eq.s32.totalorder %s29, 1
    %p288 = scmp.ne.s32.totalorder %s283, %s285
    %p289 = scmp.eq.s32.totalorder %s29, 0
    %p290 = por %p288, %p289
    %p291 = scmp.ne.s32.totalorder %s283, %s285
    %p292 = scmp.eq.s32.totalorder %s34, 1
    %p293 = por %p291, %p292
    %p294 = scmp.ne.s32.totalorder %s285, %s286
    %p295 = scmp.eq.s32.totalorder %s34, 0
    %p296 = por %p294, %p295
    %p297 = scmp.ne.s32.totalorder %s285, %s286
    %p298 = scmp.eq.s32.totalorder %s35, 1
    %p299 = por %p297, %p298
    %p301 = scmp.ne.s32.totalorder %s286, %s300
    %p302 = scmp.eq.s32.totalorder %s35, 0
    %p303 = por %p301, %p302
    %s305 = sadd.s32 %s304, 1
    %p308 = scmp.eq.s32.totalorder %s29, 1
    %p309 = scmp.ne.s32.totalorder %s304, %s306
    %p310 = scmp.eq.s32.totalorder %s29, 0
    %p311 = por %p309, %p310
    %p312 = scmp.ne.s32.totalorder %s304, %s306
    %p313 = scmp.eq.s32.totalorder %s34, 1
    %p314 = por %p312, %p313
    %p315 = scmp.ne.s32.totalorder %s306, %s307
    %p316 = scmp.eq.s32.totalorder %s34, 0
    %p317 = por %p315, %p316
    %p318 = scmp.ne.s32.totalorder %s306, %s307
    %p319 = scmp.eq.s32.totalorder %s35, 1
    %p320 = por %p318, %p319
    %p322 = scmp.ne.s32.totalorder %s307, %s321
    %p323 = scmp.eq.s32.totalorder %s35, 0
    %p324 = por %p322, %p323
    %s326 = sadd.s32 %s325, 1
    %p329 = scmp.eq.s32.totalorder %s29, 1
    %p330 = scmp.ne.s32.totalorder %s325, %s327
    %p331 = scmp.eq.s32.totalorder %s29, 0
    %p332 = por %p330, %p331
    %p333 = scmp.ne.s32.totalorder %s325, %s327
    %p334 = scmp.eq.s32.totalorder %s34, 1
    %p335 = por %p333, %p334
    %p336 = scmp.ne.s32.totalorder %s327, %s328
    %p337 = scmp.eq.s32.totalorder %s34, 0
    %p338 = por %p336, %p337
    %p339 = scmp.ne.s32.totalorder %s327, %s328
    %p340 = scmp.eq.s32.totalorder %s35, 1
    %p341 = por %p339, %p340
    %p343 = scmp.ne.s32.totalorder %s328, %s342
    %p344 = scmp.eq.s32.totalorder %s35, 0
    %p345 = por %p343, %p344
    %s347 = sadd.s32 %s346, 1
    %p350 = scmp.eq.s32.totalorder %s29, 1
    %p351 = scmp.ne.s32.totalorder %s346, %s348
    %p352 = scmp.eq.s32.totalorder %s29, 0
    %p353 = por %p351, %p352
    %p354 = scmp.ne.s32.totalorder %s346, %s348
    %p355 = scmp.eq.s32.totalorder %s34, 1
    %p356 = por %p354, %p355
    %p357 = scmp.ne.s32.totalorder %s348, %s349
    %p358 = scmp.eq.s32.totalorder %s34, 0
    %p359 = por %p357, %p358
    %p360 = scmp.ne.s32.totalorder %s348, %s349
    %p361 = scmp.eq.s32.totalorder %s35, 1
    %p362 = por %p360, %p361
    %p364 = scmp.ne.s32.totalorder %s349, %s363
    %p365 = scmp.eq.s32.totalorder %s35, 0
    %p366 = por %p364, %p365
    %s368 = sadd.s32 %s367, 1
    %p371 = scmp.eq.s32.totalorder %s29, 1
    %p372 = scmp.ne.s32.totalorder %s367, %s369
    %p373 = scmp.eq.s32.totalorder %s29, 0
    %p374 = por %p372, %p373
    %p375 = scmp.ne.s32.totalorder %s367, %s369
    %p376 = scmp.eq.s32.totalorder %s34, 1
    %p377 = por %p375, %p376
    %p378 = scmp.ne.s32.totalorder %s369, %s370
    %p379 = scmp.eq.s32.totalorder %s34, 0
    %p380 = por %p378, %p379
    %p381 = scmp.ne.s32.totalorder %s369, %s370
    %p382 = scmp.eq.s32.totalorder %s35, 1
    %p383 = por %p381, %p382
    %p385 = scmp.ne.s32.totalorder %s370, %s384
    %p386 = scmp.eq.s32.totalorder %s35, 0
    %p387 = por %p385, %p386
    %s389 = sadd.s32 %s388, 1
    %p392 = scmp.eq.s32.totalorder %s29, 1
    %p393 = scmp.ne.s32.totalorder %s388, %s390
    %p394 = scmp.eq.s32.totalorder %s29, 0
    %p395 = por %p393, %p394
    %p396 = scmp.ne.s32.totalorder %s388, %s390
    %p397 = scmp.eq.s32.totalorder %s34, 1
    %p398 = por %p396, %p397
    %p399 = scmp.ne.s32.totalorder %s390, %s391
    %p400 = scmp.eq.s32.totalorder %s34, 0
    %p401 = por %p399, %p400
    %p402 = scmp.ne.s32.totalorder %s390, %s391
    %p403 = scmp.eq.s32.totalorder %s35, 1
    %p404 = por %p402, %p403
    %p406 = scmp.ne.s32.totalorder %s391, %s405
    %p407 = scmp.eq.s32.totalorder %s35, 0
    %p408 = por %p406, %p407
    %s410 = sadd.s32 %s409, 1
    %p413 = scmp.eq.s32.totalorder %s29, 1
    %p414 = scmp.ne.s32.totalorder %s409, %s411
    %p415 = scmp.eq.s32.totalorder %s29, 0
    %p416 = por %p414, %p415
    %p417 = scmp.ne.s32.totalorder %s409, %s411
    %p418 = scmp.eq.s32.totalorder %s34, 1
    %p419 = por %p417, %p418
    %p420 = scmp.ne.s32.totalorder %s411, %s412
    %p421 = scmp.eq.s32.totalorder %s34, 0
    %p422 = por %p420, %p421
    %p423 = scmp.ne.s32.totalorder %s411, %s412
    %p424 = scmp.eq.s32.totalorder %s35, 1
    %p425 = por %p423, %p424
    %p427 = scmp.ne.s32.totalorder %s412, %s426
    %p428 = scmp.eq.s32.totalorder %s35, 0
    %p429 = por %p427, %p428
    %s431 = sadd.s32 %s430, 1
    %p434 = scmp.eq.s32.totalorder %s29, 1
    %p435 = scmp.ne.s32.totalorder %s430, %s432
    %p436 = scmp.eq.s32.totalorder %s29, 0
    %p437 = por %p435, %p436
    %p438 = scmp.ne.s32.totalorder %s430, %s432
    %p439 = scmp.eq.s32.totalorder %s34, 1
    %p440 = por %p438, %p439
    %p441 = scmp.ne.s32.totalorder %s432, %s433
    %p442 = scmp.eq.s32.totalorder %s34, 0
    %p443 = por %p441, %p442
    %p444 = scmp.ne.s32.totalorder %s432, %s433
    %p445 = scmp.eq.s32.totalorder %s35, 1
    %p446 = por %p444, %p445
    %p448 = scmp.ne.s32.totalorder %s433, %s447
    %p449 = scmp.eq.s32.totalorder %s35, 0
    %p450 = por %p448, %p449
    %s452 = sadd.s32 %s451, 1
    %p455 = scmp.eq.s32.totalorder %s29, 1
    %p456 = scmp.ne.s32.totalorder %s451, %s453
    %p457 = scmp.eq.s32.totalorder %s29, 0
    %p458 = por %p456, %p457
    %p459 = scmp.ne.s32.totalorder %s451, %s453
    %p460 = scmp.eq.s32.totalorder %s34, 1
    %p461 = por %p459, %p460
    %p462 = scmp.ne.s32.totalorder %s453, %s454
    %p463 = scmp.eq.s32.totalorder %s34, 0
    %p464 = por %p462, %p463
    %p465 = scmp.ne.s32.totalorder %s453, %s454
    %p466 = scmp.eq.s32.totalorder %s35, 1
    %p467 = por %p465, %p466
    %p469 = scmp.ne.s32.totalorder %s454, %s468
    %p470 = scmp.eq.s32.totalorder %s35, 0
    %p471 = por %p469, %p470
    %s473 = sadd.s32 %s472, 1
    %p476 = scmp.eq.s32.totalorder %s29, 1
    %p477 = scmp.ne.s32.totalorder %s472, %s474
    %p478 = scmp.eq.s32.totalorder %s29, 0
    %p479 = por %p477, %p478
    %p480 = scmp.ne.s32.totalorder %s472, %s474
    %p481 = scmp.eq.s32.totalorder %s34, 1
    %p482 = por %p480, %p481
    %p483 = scmp.ne.s32.totalorder %s474, %s475
    %p484 = scmp.eq.s32.totalorder %s34, 0
    %p485 = por %p483, %p484
    %p486 = scmp.ne.s32.totalorder %s474, %s475
    %p487 = scmp.eq.s32.totalorder %s35, 1
    %p488 = por %p486, %p487
    %p490 = scmp.ne.s32.totalorder %s475, %s489
    %p491 = scmp.eq.s32.totalorder %s35, 0
    %p492 = por %p490, %p491
    %s494 = sadd.s32 %s493, 1
    %p497 = scmp.eq.s32.totalorder %s29, 1
    %p498 = scmp.ne.s32.totalorder %s493, %s495
    %p499 = scmp.eq.s32.totalorder %s29, 0
    %p500 = por %p498, %p499
    %p501 = scmp.ne.s32.totalorder %s493, %s495
    %p502 = scmp.eq.s32.totalorder %s34, 1
    %p503 = por %p501, %p502
    %p504 = scmp.ne.s32.totalorder %s495, %s496
    %p505 = scmp.eq.s32.totalorder %s34, 0
    %p506 = por %p504, %p505
    %p507 = scmp.ne.s32.totalorder %s495, %s496
    %p508 = scmp.eq.s32.totalorder %s35, 1
    %p509 = por %p507, %p508
    %p511 = scmp.ne.s32.totalorder %s496, %s510
    %p512 = scmp.eq.s32.totalorder %s35, 0
    %p513 = por %p511, %p512
    %s515 = sadd.s32 %s514, 1
    %p518 = scmp.eq.s32.totalorder %s29, 1
    %p519 = scmp.ne.s32.totalorder %s514, %s516
    %p520 = scmp.eq.s32.totalorder %s29, 0
    %p521 = por %p519, %p520
    %p522 = scmp.ne.s32.totalorder %s514, %s516
    %p523 = scmp.eq.s32.totalorder %s34, 1
    %p524 = por %p522, %p523
    %p525 = scmp.ne.s32.totalorder %s516, %s517
    %p526 = scmp.eq.s32.totalorder %s34, 0
    %p527 = por %p525, %p526
    %p528 = scmp.ne.s32.totalorder %s516, %s517
    %p529 = scmp.eq.s32.totalorder %s35, 1
    %p530 = por %p528, %p529
    %p532 = scmp.ne.s32.totalorder %s517, %s531
    %p533 = scmp.eq.s32.totalorder %s35, 0
    %p534 = por %p532, %p533
    %s535 = ssub.s32 %s29, %s36
    %p536 = scmp.eq.s32.totalorder %s535, 0
    %s538 = sadd.s32 %s537, 1
    %s539 = scalar_select %p536, %s537, %s538
    %p542 = pneg %p536
    %p543 = scmp.eq.s32.totalorder %s29, 1
    %p544 = por %p542, %p543
    %p545 = scmp.ne.s32.totalorder %s537, %s540
    %p546 = scmp.eq.s32.totalorder %s29, 0
    %p547 = por %p545, %p546
    %p548 = scmp.ne.s32.totalorder %s537, %s540
    %p549 = scmp.eq.s32.totalorder %s34, 1
    %p550 = por %p548, %p549
    %p551 = scmp.ne.s32.totalorder %s540, %s541
    %p552 = scmp.eq.s32.totalorder %s34, 0
    %p553 = por %p551, %p552
    %p554 = scmp.ne.s32.totalorder %s540, %s541
    %p555 = scmp.eq.s32.totalorder %s35, 1
    %p556 = por %p554, %p555
    %p558 = scmp.ne.s32.totalorder %s541, %s557
    %p559 = scmp.eq.s32.totalorder %s35, 0
    %p560 = por %p558, %p559
    %p561 = scmp.le.s32.totalorder 1, %s29
    %p562 = scmp.lt.s32.totalorder %s29, 3
    %p563 = pnand %p561, %p562
    %p564 = pneg %p563
    // Predicated region
    $region9: #{decoder_forward.3} parent=5 // pred_check
      _
    $region10: #{decoder_forward.3} parent=5 // pred_check_branch
      %566 = sbr.rel (%p563) target = $region12
    $region11: #{decoder_forward.3} parent=5 // pred_region
      %s567 = ssub.s32 %s29, 1
      // Predicated region
      $region13: #{decoder_forward.3} parent=11 // pred_check
        %p568 = pneg %p128
      $region14: #{decoder_forward.3} parent=11 // pred_check_branch
        %570 = sbr.rel (%p568) target = $region16
      $region15: #{decoder_forward.3} parent=11 // pred_region
        _
      $region16: #{decoder_forward.3} parent=11 // pred_fallthru
        _
      // Predicated region
      $region17: #{decoder_forward.3} parent=11 // pred_check
        %p571 = pneg %p149
      $region18: #{decoder_forward.3} parent=11 // pred_check_branch
        %573 = sbr.rel (%p571) target = $region20
      $region19: #{decoder_forward.3} parent=11 // pred_region
        _
      $region20: #{decoder_forward.3} parent=11 // pred_fallthru
        _
      // Predicated region
      $region21: #{decoder_forward.3} parent=11 // pred_check
        %p574 = pneg %p170
      $region22: #{decoder_forward.3} parent=11 // pred_check_branch
        %576 = sbr.rel (%p574) target = $region24
      $region23: #{decoder_forward.3} parent=11 // pred_region
        _
      $region24: #{decoder_forward.3} parent=11 // pred_fallthru
        _
      // Predicated region
      $region25: #{decoder_forward.3} parent=11 // pred_check
        %p577 = pneg %p191
      $region26: #{decoder_forward.3} parent=11 // pred_check_branch
        %579 = sbr.rel (%p577) target = $region28
      $region27: #{decoder_forward.3} parent=11 // pred_region
        _
      $region28: #{decoder_forward.3} parent=11 // pred_fallthru
        _
      // Predicated region
      $region29: #{decoder_forward.3} parent=11 // pred_check
        %p580 = pneg %p212
      $region30: #{decoder_forward.3} parent=11 // pred_check_branch
        %582 = sbr.rel (%p580) target = $region32
      $region31: #{decoder_forward.3} parent=11 // pred_region
        _
      $region32: #{decoder_forward.3} parent=11 // pred_fallthru
        _
      // Predicated region
      $region33: #{decoder_forward.3} parent=11 // pred_check
        %p583 = pneg %p233
      $region34: #{decoder_forward.3} parent=11 // pred_check_branch
        %585 = sbr.rel (%p583) target = $region36
      $region35: #{decoder_forward.3} parent=11 // pred_region
        _
      $region36: #{decoder_forward.3} parent=11 // pred_fallthru
        _
      // Predicated region
      $region37: #{decoder_forward.3} parent=11 // pred_check
        %p586 = pneg %p254
      $region38: #{decoder_forward.3} parent=11 // pred_check_branch
        %588 = sbr.rel (%p586) target = $region40
      $region39: #{decoder_forward.3} parent=11 // pred_region
        _
      $region40: #{decoder_forward.3} parent=11 // pred_fallthru
        _
      // Predicated region
      $region41: #{decoder_forward.3} parent=11 // pred_check
        %p589 = pneg %p275
      $region42: #{decoder_forward.3} parent=11 // pred_check_branch
        %591 = sbr.rel (%p589) target = $region44
      $region43: #{decoder_forward.3} parent=11 // pred_region
        _
      $region44: #{decoder_forward.3} parent=11 // pred_fallthru
        _
      // Predicated region
      $region45: #{decoder_forward.3} parent=11 // pred_check
        %p592 = pneg %p296
      $region46: #{decoder_forward.3} parent=11 // pred_check_branch
        %594 = sbr.rel (%p592) target = $region48
      $region47: #{decoder_forward.3} parent=11 // pred_region
        _
      $region48: #{decoder_forward.3} parent=11 // pred_fallthru
        _
      // Predicated region
      $region49: #{decoder_forward.3} parent=11 // pred_check
        %p595 = pneg %p317
      $region50: #{decoder_forward.3} parent=11 // pred_check_branch
        %597 = sbr.rel (%p595) target = $region52
      $region51: #{decoder_forward.3} parent=11 // pred_region
        _
      $region52: #{decoder_forward.3} parent=11 // pred_fallthru
        _
      // Predicated region
      $region53: #{decoder_forward.3} parent=11 // pred_check
        %p598 = pneg %p338
      $region54: #{decoder_forward.3} parent=11 // pred_check_branch
        %600 = sbr.rel (%p598) target = $region56
      $region55: #{decoder_forward.3} parent=11 // pred_region
        _
      $region56: #{decoder_forward.3} parent=11 // pred_fallthru
        _
      // Predicated region
      $region57: #{decoder_forward.3} parent=11 // pred_check
        %p601 = pneg %p359
      $region58: #{decoder_forward.3} parent=11 // pred_check_branch
        %603 = sbr.rel (%p601) target = $region60
      $region59: #{decoder_forward.3} parent=11 // pred_region
        _
      $region60: #{decoder_forward.3} parent=11 // pred_fallthru
        _
      // Predicated region
      $region61: #{decoder_forward.3} parent=11 // pred_check
        %p604 = pneg %p380
      $region62: #{decoder_forward.3} parent=11 // pred_check_branch
        %606 = sbr.rel (%p604) target = $region64
      $region63: #{decoder_forward.3} parent=11 // pred_region
        _
      $region64: #{decoder_forward.3} parent=11 // pred_fallthru
        _
      // Predicated region
      $region65: #{decoder_forward.3} parent=11 // pred_check
        %p607 = pneg %p401
      $region66: #{decoder_forward.3} parent=11 // pred_check_branch
        %609 = sbr.rel (%p607) target = $region68
      $region67: #{decoder_forward.3} parent=11 // pred_region
        _
      $region68: #{decoder_forward.3} parent=11 // pred_fallthru
        _
      // Predicated region
      $region69: #{decoder_forward.3} parent=11 // pred_check
        %p610 = pneg %p422
      $region70: #{decoder_forward.3} parent=11 // pred_check_branch
        %612 = sbr.rel (%p610) target = $region72
      $region71: #{decoder_forward.3} parent=11 // pred_region
        _
      $region72: #{decoder_forward.3} parent=11 // pred_fallthru
        _
      // Predicated region
      $region73: #{decoder_forward.3} parent=11 // pred_check
        %p613 = pneg %p443
      $region74: #{decoder_forward.3} parent=11 // pred_check_branch
        %615 = sbr.rel (%p613) target = $region76
      $region75: #{decoder_forward.3} parent=11 // pred_region
        _
      $region76: #{decoder_forward.3} parent=11 // pred_fallthru
        _
      // Predicated region
      $region77: #{decoder_forward.3} parent=11 // pred_check
        %p616 = pneg %p464
      $region78: #{decoder_forward.3} parent=11 // pred_check_branch
        %618 = sbr.rel (%p616) target = $region80
      $region79: #{decoder_forward.3} parent=11 // pred_region
        _
      $region80: #{decoder_forward.3} parent=11 // pred_fallthru
        _
      // Predicated region
      $region81: #{decoder_forward.3} parent=11 // pred_check
        %p619 = pneg %p485
      $region82: #{decoder_forward.3} parent=11 // pred_check_branch
        %621 = sbr.rel (%p619) target = $region84
      $region83: #{decoder_forward.3} parent=11 // pred_region
        _
      $region84: #{decoder_forward.3} parent=11 // pred_fallthru
        _
      // Predicated region
      $region85: #{decoder_forward.3} parent=11 // pred_check
        %p622 = pneg %p506
      $region86: #{decoder_forward.3} parent=11 // pred_check_branch
        %624 = sbr.rel (%p622) target = $region88
      $region87: #{decoder_forward.3} parent=11 // pred_region
        _
      $region88: #{decoder_forward.3} parent=11 // pred_fallthru
        _
      // Predicated region
      $region89: #{decoder_forward.3} parent=11 // pred_check
        %p625 = pneg %p527
      $region90: #{decoder_forward.3} parent=11 // pred_check_branch
        %627 = sbr.rel (%p625) target = $region92
      $region91: #{decoder_forward.3} parent=11 // pred_region
        _
      $region92: #{decoder_forward.3} parent=11 // pred_fallthru
        _
    $region12: #{decoder_forward.3} parent=5 // pred_fallthru
      _
    %p628 = scmp.lt.s32.totalorder %s29, 2
    // Predicated region
    $region93: #{decoder_forward.3} parent=5 // pred_check
      %p629 = pneg %p628
    $region94: #{decoder_forward.3} parent=5 // pred_check_branch
      %631 = sbr.rel (%p629) target = $region96
    $region95: #{decoder_forward.3} parent=5 // pred_region
      // Predicated region
      $region97: #{decoder_forward.3} parent=95 // pred_check
        %p632 = pneg %p49
      $region98: #{decoder_forward.3} parent=95 // pred_check_branch
        %634 = sbr.rel (%p632) target = $region100
      $region99: #{decoder_forward.3} parent=95 // pred_region
        %p635 = scmp.lt.s32.totalorder %s29, 1
        %s636 = scalar_select %p635, %s29, 1
        %s637 = smul.addr %s636, 8
        %s638 = scalar_lea.vmem %s0, %s637
      $region100: #{decoder_forward.3} parent=95 // pred_fallthru
        _
      // Predicated region
      $region101: #{decoder_forward.3} parent=95 // pred_check
        %p639 = pneg %p75
      $region102: #{decoder_forward.3} parent=95 // pred_check_branch
        %641 = sbr.rel (%p639) target = $region104
      $region103: #{decoder_forward.3} parent=95 // pred_region
        %p642 = scmp.lt.s32.totalorder %s29, 1
        %s643 = scalar_select %p642, %s29, 1
        %s644 = smul.addr %s643, 2
        %s645 = smul.addr %s644, 8
        %s646 = scalar_lea.vmem %s1, %s645
      $region104: #{decoder_forward.3} parent=95 // pred_fallthru
        _
      // Predicated region
      $region105: #{decoder_forward.3} parent=95 // pred_check
        %p647 = pneg %p101
      $region106: #{decoder_forward.3} parent=95 // pred_check_branch
        %649 = sbr.rel (%p647) target = $region108
      $region107: #{decoder_forward.3} parent=95 // pred_region
        %p650 = scmp.lt.s32.totalorder %s29, 1
        %s651 = scalar_select %p650, %s29, 1
        %s652 = scalar_lea.vmem %s2, %s651
      $region108: #{decoder_forward.3} parent=95 // pred_fallthru
        _
    $region96: #{decoder_forward.3} parent=5 // pred_fallthru
      _
    %p653 = scmp.le.s32.totalorder 1, %s29
    %p654 = scmp.lt.s32.totalorder %s29, 3
    %p655 = pnand %p653, %p654
    %p656 = pneg %p655
    // Predicated region
    $region109: #{decoder_forward.3} parent=5 // pred_check
      _
    $region110: #{decoder_forward.3} parent=5 // pred_check_branch
      %658 = sbr.rel (%p655) target = $region112
    $region111: #{decoder_forward.3} parent=5 // pred_region
      %s659 = ssub.s32 %s29, 1
      %p660 = scmp.lt.s32.totalorder %s34, 1
      %s661 = scalar_select %p660, %s34, 1
      %s662 = smul.addr %s661, 8
      %s663 = scalar_lea.vmem %s0, %s662
      %p664 = pneg %p55
      %p665 = pneg %p52
      %p666 = scmp.lt.s32.totalorder %s34, 1
      %s667 = scalar_select %p666, %s34, 1
      %s668 = smul.addr %s667, 2
      %s669 = smul.addr %s668, 8
      %s670 = scalar_lea.vmem %s1, %s669
      %p671 = pneg %p81
      %p672 = pneg %p78
      %p673 = scmp.lt.s32.totalorder %s34, 1
      %s674 = scalar_select %p673, %s34, 1
      %s675 = scalar_lea.vmem %s2, %s674
      %p676 = pneg %p107
      %p677 = pneg %p104
      %p678 = pneg %p128
      %p679 = pneg %p125
      %p680 = pneg %p149
      %p681 = pneg %p146
      %p682 = pneg %p170
      %p683 = pneg %p167
      %p684 = pneg %p191
      %p685 = pneg %p188
      %p686 = pneg %p212
      %p687 = pneg %p209
      %p688 = pneg %p233
      %p689 = pneg %p230
      %p690 = pneg %p254
      %p691 = pneg %p251
      %p692 = pneg %p275
      %p693 = pneg %p272
      %p694 = pneg %p296
      %p695 = pneg %p293
      %p696 = pneg %p317
      %p697 = pneg %p314
      %p698 = pneg %p338
      %p699 = pneg %p335
      %p700 = pneg %p359
      %p701 = pneg %p356
      %p702 = pneg %p380
      %p703 = pneg %p377
      %p704 = pneg %p401
      %p705 = pneg %p398
      %p706 = pneg %p422
      %p707 = pneg %p419
      %p708 = pneg %p443
      %p709 = pneg %p440
      %p710 = pneg %p464
      %p711 = pneg %p461
      %p712 = pneg %p485
      %p713 = pneg %p482
      %p714 = pneg %p506
      %p715 = pneg %p503
      %p716 = pneg %p527
      %p717 = pneg %p524
      %p718 = pneg %p553
      %p719 = pneg %p550
      %p720 = scmp.lt.s32.totalorder %s34, 1
      %s721 = scalar_select %p720, %s34, 1
      %s722 = smul.addr %s721, 8
      %s723 = scalar_lea.vmem %s23, %s722
      %p724 = scmp.lt.s32.totalorder %s34, 1
      %s725 = scalar_select %p724, %s34, 1
      %s726 = smul.addr %s725, 8
      %s727 = scalar_lea.vmem %s0, %s726
      %p728 = scmp.lt.s32.totalorder %s34, 1
      %s729 = scalar_select %p728, %s34, 1
      %s730 = smul.addr %s729, 2
      %s731 = smul.addr %s730, 8
      %s732 = scalar_lea.vmem %s1, %s731
      %p733 = scmp.lt.s32.totalorder %s34, 1
      %s734 = scalar_select %p733, %s34, 1
      %s735 = scalar_lea.vmem %s2, %s734
      %p736 = scmp.lt.s32.totalorder %s34, 1
      %s737 = scalar_select %p736, %s34, 1
      %s738 = smul.addr %s737, 8
      %s739 = scalar_lea.vmem %s23, %s738
      %v740 = vld [vmem:[%s727] sm:$0xff]
      %v741 = vld [vmem:[%s732] sm:$0xff]
      %v742 = vld [vmem:[%s732 + $0x8] sm:$0xff]
      %v743 = vld [vmem:[%s735] sm:$0x1]
      %v744 = vld [vmem:[%s3] sm:$0xff]
      %v745 = vld [vmem:[%s3 + $0x8] sm:$0xff]
      %v746 = vld [vmem:[%s3 + $0x10] sm:$0xff]
      %v747 = vld [vmem:[%s3 + $0x18] sm:$0xff]
      %v748 = vld [vmem:[%s4] sm:$0x1]
      %v750 = vlaneseq
      %v751 = vshrl.u32 %v750, 7
      %v752 = vsub.s32 0, %v751
      %v753 = vrot.slane %v748, %v752
      %vm755 = vcmask 261120
      %v757 = vsel %vm755, %v740, 0
      %759 = vmatprep.subr.mxu0 0.0
      %760 = vmatpush1.msra.mxu0 0.0
      %761 = vmatprep.subr.mxu0 0.0
      %762 = vmatpush1.msra.mxu0 0.0
      %763 = vmatprep.subr.mxu0 0.0
      %764 = vmatpush1.msra.mxu0 0.0
      %765 = vmatprep.subr.mxu0 0.0
      %766 = vmatpush1.msra.mxu0 0.0
      %767 = vmatprep.subr.mxu0 0.0
      %768 = vmatpush1.msra.mxu0 0.0
      %769 = vmatprep.subr.mxu0 0.0
      %770 = vmatpush1.msra.mxu0 0.0
      %771 = vmatprep.subr.mxu0 0.0
      %772 = vmatpush1.msra.mxu0 0.0
      %773 = vmatprep.subr.mxu0 0.0
      %774 = vmatpush1.msra.mxu0 0.0
      %775 = vmatprep.subr.mxu0 0.0
      %776 = vmatpush1.msra.mxu0 0.0
      %777 = vmatprep.subr.mxu0 0.0
      %778 = vmatpush1.msra.mxu0 0.0
      %779 = vmatprep.subr.mxu0 0.0
      %780 = vmatpush1.msra.mxu0 0.0
      %781 = vmatprep.subr.mxu0 0.0
      %782 = vmatpush1.msra.mxu0 0.0
      %783 = vmatprep.subr.mxu0 0.0
      %784 = vmatpush1.msra.mxu0 %v747
      %785 = vmatprep.subr.mxu0 0.0
      %786 = vmatpush1.msra.mxu0 %v746
      %787 = vmatprep.subr.mxu0 0.0
      %788 = vmatpush1.msra.mxu0 %v745
      %789 = vmatprep.subr.mxu0 0.0
      %790 = vmatpush1.msra.mxu0 %v744
      %791 = vmatprep.subr.mxu0 0.0
      %792 = vmatpush2.msra.mxu0 0.0
      %793 = vmatprep.subr.mxu0 0.0
      %794 = vmatpush2.msra.mxu0 0.0
      %795 = vmatprep.subr.mxu0 0.0
      %796 = vmatpush2.msra.mxu0 0.0
      %797 = vmatprep.subr.mxu0 0.0
      %798 = vmatpush2.msra.mxu0 0.0
      %799 = vmatprep.subr.mxu0 0.0
      %800 = vmatpush2.msra.mxu0 0.0
      %801 = vmatprep.subr.mxu0 0.0
      %802 = vmatpush2.msra.mxu0 0.0
      %803 = vmatprep.subr.mxu0 0.0
      %804 = vmatpush2.msra.mxu0 0.0
      %805 = vmatprep.subr.mxu0 0.0
      %806 = vmatpush2.msra.mxu0 0.0
      %807 = vmatprep.subr.mxu0 0.0
      %808 = vmatpush2.msra.mxu0 0.0
      %809 = vmatprep.subr.mxu0 0.0
      %810 = vmatpush2.msra.mxu0 0.0
      %811 = vmatprep.subr.mxu0 0.0
      %812 = vmatpush2.msra.mxu0 0.0
      %813 = vmatprep.subr.mxu0 0.0
      %814 = vmatpush2.msra.mxu0 0.0
      %815 = vmatprep.subr.mxu0 0.0
      %816 = vmatpush2.msra.mxu0 0.0
      %817 = vmatprep.subr.mxu0 0.0
      %818 = vmatpush2.msra.mxu0 0.0
      %819 = vmatprep.subr.mxu0 0.0
      %820 = vmatpush2.msra.mxu0 0.0
      %821 = vmatprep.subr.mxu0 0.0
      %822 = vmatpush2.msra.mxu0 0.0
      %823 = vmatprep.mubr.f32.mxu0 0.0
      %824 = vmatmul.mubr.f32.gmra.mxu0 %v757
      %v825 = vpop.f32.mrf.mxu0
      %v826 = vadd.f32 %v753, %v825
      %v827 = vpop.f32.mrf.mxu0
      %828 = vdwg.mxu0
      %v829 = vlaneseq
      %v830 = vshrl.u32 %v829, 7
      %v831 = vlaneseq
      %v832 = vand.u32 %v831, 127
      %vm833 = vcmp.le.s32.totalorder %v832, %v830
      %v834 = vsel %vm833, 0.0, -1e+30
      %v836 = vlaneseq
      %v837 = vshrl.u32 %v836, 7
      %v838 = vsub.s32 0, %v837
      %v839 = vrot.slane %v743, %v838
      %v841 = vadd.f32 %v834, %v839
      %v842 = vld [vmem:[%s5] sm:$0xff]
      %v843 = vld [vmem:[%s5 + $0x8] sm:$0xff]
      %v844 = vld [vmem:[%s5 + $0x10] sm:$0xff]
      %v845 = vld [vmem:[%s5 + $0x18] sm:$0xff]
      %847 = vrot.lane.b32.xlu0 %v826, 96
      %v848 = vpop.permute.xlu0 %847
      %vm849 = vcmask 64512
      %v850 = vsel %vm849, %v826, 0
      %v852 = vsel %vm849, %v848, 0
      %854 = vmatprep.subr.mxu0 0.0
      %855 = vmatpush1.xpose.msra.mxu0 0.0
      %856 = vmatprep.subr.mxu0 0.0
      %857 = vmatpush1.xpose.msra.mxu0 0.0
      %858 = vmatprep.subr.mxu0 0.0
      %859 = vmatpush1.xpose.msra.mxu0 0.0
      %860 = vmatprep.subr.mxu0 0.0
      %861 = vmatpush1.xpose.msra.mxu0 0.0
      %862 = vmatprep.subr.mxu0 0.0
      %863 = vmatpush1.xpose.msra.mxu0 0.0
      %864 = vmatprep.subr.mxu0 0.0
      %865 = vmatpush1.xpose.msra.mxu0 0.0
      %866 = vmatprep.subr.mxu0 0.0
      %867 = vmatpush1.xpose.msra.mxu0 0.0
      %868 = vmatprep.subr.mxu0 0.0
      %869 = vmatpush1.xpose.msra.mxu0 0.0
      %870 = vmatprep.subr.mxu0 0.0
      %871 = vmatpush1.xpose.msra.mxu0 0.0
      %872 = vmatprep.subr.mxu0 0.0
      %873 = vmatpush1.xpose.msra.mxu0 0.0
      %874 = vmatprep.subr.mxu0 0.0
      %875 = vmatpush1.xpose.msra.mxu0 0.0
      %876 = vmatprep.subr.mxu0 0.0
      %877 = vmatpush1.xpose.msra.mxu0 0.0
      %878 = vmatprep.subr.mxu0 0.0
      %879 = vmatpush1.xpose.msra.mxu0 0.0
      %880 = vmatprep.subr.mxu0 0.0
      %881 = vmatpush1.xpose.msra.mxu0 0.0
      %882 = vmatprep.subr.mxu0 0.0
      %883 = vmatpush1.xpose.msra.mxu0 0.0
      %884 = vmatprep.subr.mxu0 0.0
      %885 = vmatpush1.xpose.msra.mxu0 %v852
      %886 = vmatprep.subr.mxu0 0.0
      %887 = vmatpush2.xpose.msra.mxu0 0.0
      %888 = vmatprep.subr.mxu0 0.0
      %889 = vmatpush2.xpose.msra.mxu0 0.0
      %890 = vmatprep.subr.mxu0 0.0
      %891 = vmatpush2.xpose.msra.mxu0 0.0
      %892 = vmatprep.subr.mxu0 0.0
      %893 = vmatpush2.xpose.msra.mxu0 0.0
      %894 = vmatprep.subr.mxu0 0.0
      %895 = vmatpush2.xpose.msra.mxu0 0.0
      %896 = vmatprep.subr.mxu0 0.0
      %897 = vmatpush2.xpose.msra.mxu0 0.0
      %898 = vmatprep.subr.mxu0 0.0
      %899 = vmatpush2.xpose.msra.mxu0 0.0
      %900 = vmatprep.subr.mxu0 0.0
      %901 = vmatpush2.xpose.msra.mxu0 0.0
      %902 = vmatprep.subr.mxu0 0.0
      %903 = vmatpush2.xpose.msra.mxu0 0.0
      %904 = vmatprep.subr.mxu0 0.0
      %905 = vmatpush2.xpose.msra.mxu0 0.0
      %906 = vmatprep.subr.mxu0 0.0
      %907 = vmatpush2.xpose.msra.mxu0 0.0
      %908 = vmatprep.subr.mxu0 0.0
      %909 = vmatpush2.xpose.msra.mxu0 0.0
      %910 = vmatprep.subr.mxu0 0.0
      %911 = vmatpush2.xpose.msra.mxu0 0.0
      %912 = vmatprep.subr.mxu0 0.0
      %913 = vmatpush2.xpose.msra.mxu0 0.0
      %914 = vmatprep.subr.mxu0 0.0
      %915 = vmatpush2.xpose.msra.mxu0 0.0
      %916 = vmatprep.subr.mxu0 0.0
      %917 = vmatpush2.xpose.msra.mxu0 0.0
      %918 = vmatprep.mubr.f32.mxu0 0.0
      %919 = vmatmul.mubr.f32.gmra.mxu0 %v850
      %v920 = vpop.f32.mrf.mxu0
      %v921 = vadd.f32 0.0, %v920
      %v922 = vpop.f32.mrf.mxu0
      %923 = vdwg.mxu0
      %v924 = vmul.f32 %v921, 0.35355338
      %v925 = vadd.f32 %v924, %v841
      %v926 = vsel %vm849, %v925, -inf
      %927 = vmax.xlane.f32.xlu0 %v926
      %v928 = vpop.xlane.xlu0 %927
      %v929 = vsub.f32 %v925, %v928
      %v930 = vmul.f32 %v929, 1.442695
      %v931 = vpow.pop %v930
      %v932 = vsel %vm849, %v931, 0.0
      %933 = vadd.xlane.f32.xlu0 %v932
      %v934 = vpop.xlane.xlu0 %933
      %v935 = vrcp.pop %v934
      %v936 = vmul.f32 %v931, %v935
      %937 = vrot.lane.b32.xlu0 %v826, 64
      %v938 = vpop.permute.xlu0 %937
      %v941 = vsel %vm849, %v936, 0
      %943 = vmatprep.subr.mxu0 0.0
      %944 = vmatpush1.msra.mxu0 0.0
      %945 = vmatprep.subr.mxu0 0.0
      %946 = vmatpush1.msra.mxu0 0.0
      %947 = vmatprep.subr.mxu0 0.0
      %948 = vmatpush1.msra.mxu0 0.0
      %949 = vmatprep.subr.mxu0 0.0
      %950 = vmatpush1.msra.mxu0 0.0
      %951 = vmatprep.subr.mxu0 0.0
      %952 = vmatpush1.msra.mxu0 0.0
      %953 = vmatprep.subr.mxu0 0.0
      %954 = vmatpush1.msra.mxu0 0.0
      %955 = vmatprep.subr.mxu0 0.0
      %956 = vmatpush1.msra.mxu0 0.0
      %957 = vmatprep.subr.mxu0 0.0
      %958 = vmatpush1.msra.mxu0 0.0
      %959 = vmatprep.subr.mxu0 0.0
      %960 = vmatpush1.msra.mxu0 0.0
      %961 = vmatprep.subr.mxu0 0.0
      %962 = vmatpush1.msra.mxu0 0.0
      %963 = vmatprep.subr.mxu0 0.0
      %964 = vmatpush1.msra.mxu0 0.0
      %965 = vmatprep.subr.mxu0 0.0
      %966 = vmatpush1.msra.mxu0 0.0
      %967 = vmatprep.subr.mxu0 0.0
      %968 = vmatpush1.msra.mxu0 0.0
      %969 = vmatprep.subr.mxu0 0.0
      %970 = vmatpush1.msra.mxu0 0.0
      %971 = vmatprep.subr.mxu0 0.0
      %972 = vmatpush1.msra.mxu0 0.0
      %973 = vmatprep.subr.mxu0 0.0
      %974 = vmatpush1.msra.mxu0 %v938
      %975 = vmatprep.subr.mxu0 0.0
      %976 = vmatpush2.msra.mxu0 0.0
      %977 = vmatprep.subr.mxu0 0.0
      %978 = vmatpush2.msra.mxu0 0.0
      %979 = vmatprep.subr.mxu0 0.0
      %980 = vmatpush2.msra.mxu0 0.0
      %981 = vmatprep.subr.mxu0 0.0
      %982 = vmatpush2.msra.mxu0 0.0
      %983 = vmatprep.subr.mxu0 0.0
      %984 = vmatpush2.msra.mxu0 0.0
      %985 = vmatprep.subr.mxu0 0.0
      %986 = vmatpush2.msra.mxu0 0.0
      %987 = vmatprep.subr.mxu0 0.0
      %988 = vmatpush2.msra.mxu0 0.0
      %989 = vmatprep.subr.mxu0 0.0
      %990 = vmatpush2.msra.mxu0 0.0
      %991 = vmatprep.subr.mxu0 0.0
      %992 = vmatpush2.msra.mxu0 0.0
      %993 = vmatprep.subr.mxu0 0.0
      %994 = vmatpush2.msra.mxu0 0.0
      %995 = vmatprep.subr.mxu0 0.0
      %996 = vmatpush2.msra.mxu0 0.0
      %997 = vmatprep.subr.mxu0 0.0
      %998 = vmatpush2.msra.mxu0 0.0
      %999 = vmatprep.subr.mxu0 0.0
      %1000 = vmatpush2.msra.mxu0 0.0
      %1001 = vmatprep.subr.mxu0 0.0
      %1002 = vmatpush2.msra.mxu0 0.0
      %1003 = vmatprep.subr.mxu0 0.0
      %1004 = vmatpush2.msra.mxu0 0.0
      %1005 = vmatprep.subr.mxu0 0.0
      %1006 = vmatpush2.msra.mxu0 0.0
      %1007 = vmatprep.mubr.f32.mxu0 0.0
      %1008 = vmatmul.mubr.f32.gmra.mxu0 %v941
      %v1009 = vpop.f32.mrf.mxu0
      %v1010 = vadd.f32 0.0, %v1009
      %v1011 = vpop.f32.mrf.mxu0
      %1012 = vdwg.mxu0
      %1013 = vrot.lane.b32.xlu0 %v826, 120
      %v1014 = vpop.permute.xlu0 %1013
      %1015 = vrot.lane.b32.xlu0 %v826, 88
      %v1016 = vpop.permute.xlu0 %1015
      %v1017 = vsel %vm849, %v1014, 0
      %v1019 = vsel %vm849, %v1016, 0
      %1021 = vmatprep.subr.mxu0 0.0
      %1022 = vmatpush1.xpose.msra.mxu0 0.0
      %1023 = vmatprep.subr.mxu0 0.0
      %1024 = vmatpush1.xpose.msra.mxu0 0.0
      %1025 = vmatprep.subr.mxu0 0.0
      %1026 = vmatpush1.xpose.msra.mxu0 0.0
      %1027 = vmatprep.subr.mxu0 0.0
      %1028 = vmatpush1.xpose.msra.mxu0 0.0
      %1029 = vmatprep.subr.mxu0 0.0
      %1030 = vmatpush1.xpose.msra.mxu0 0.0
      %1031 = vmatprep.subr.mxu0 0.0
      %1032 = vmatpush1.xpose.msra.mxu0 0.0
      %1033 = vmatprep.subr.mxu0 0.0
      %1034 = vmatpush1.xpose.msra.mxu0 0.0
      %1035 = vmatprep.subr.mxu0 0.0
      %1036 = vmatpush1.xpose.msra.mxu0 0.0
      %1037 = vmatprep.subr.mxu0 0.0
      %1038 = vmatpush1.xpose.msra.mxu0 0.0
      %1039 = vmatprep.subr.mxu0 0.0
      %1040 = vmatpush1.xpose.msra.mxu0 0.0
      %1041 = vmatprep.subr.mxu0 0.0
      %1042 = vmatpush1.xpose.msra.mxu0 0.0
      %1043 = vmatprep.subr.mxu0 0.0
      %1044 = vmatpush1.xpose.msra.mxu0 0.0
      %1045 = vmatprep.subr.mxu0 0.0
      %1046 = vmatpush1.xpose.msra.mxu0 0.0
      %1047 = vmatprep.subr.mxu0 0.0
      %1048 = vmatpush1.xpose.msra.mxu0 0.0
      %1049 = vmatprep.subr.mxu0 0.0
      %1050 = vmatpush1.xpose.msra.mxu0 0.0
      %1051 = vmatprep.subr.mxu0 0.0
      %1052 = vmatpush1.xpose.msra.mxu0 %v1019
      %1053 = vmatprep.subr.mxu0 0.0
      %1054 = vmatpush2.xpose.msra.mxu0 0.0
      %1055 = vmatprep.subr.mxu0 0.0
      %1056 = vmatpush2.xpose.msra.mxu0 0.0
      %1057 = vmatprep.subr.mxu0 0.0
      %1058 = vmatpush2.xpose.msra.mxu0 0.0
      %1059 = vmatprep.subr.mxu0 0.0
      %1060 = vmatpush2.xpose.msra.mxu0 0.0
      %1061 = vmatprep.subr.mxu0 0.0
      %1062 = vmatpush2.xpose.msra.mxu0 0.0
      %1063 = vmatprep.subr.mxu0 0.0
      %1064 = vmatpush2.xpose.msra.mxu0 0.0
      %1065 = vmatprep.subr.mxu0 0.0
      %1066 = vmatpush2.xpose.msra.mxu0 0.0
      %1067 = vmatprep.subr.mxu0 0.0
      %1068 = vmatpush2.xpose.msra.mxu0 0.0
      %1069 = vmatprep.subr.mxu0 0.0
      %1070 = vmatpush2.xpose.msra.mxu0 0.0
      %1071 = vmatprep.subr.mxu0 0.0
      %1072 = vmatpush2.xpose.msra.mxu0 0.0
      %1073 = vmatprep.subr.mxu0 0.0
      %1074 = vmatpush2.xpose.msra.mxu0 0.0
      %1075 = vmatprep.subr.mxu0 0.0
      %1076 = vmatpush2.xpose.msra.mxu0 0.0
      %1077 = vmatprep.subr.mxu0 0.0
      %1078 = vmatpush2.xpose.msra.mxu0 0.0
      %1079 = vmatprep.subr.mxu0 0.0
      %1080 = vmatpush2.xpose.msra.mxu0 0.0
      %1081 = vmatprep.subr.mxu0 0.0
      %1082 = vmatpush2.xpose.msra.mxu0 0.0
      %1083 = vmatprep.subr.mxu0 0.0
      %1084 = vmatpush2.xpose.msra.mxu0 0.0
      %1085 = vmatprep.mubr.f32.mxu0 0.0
      %1086 = vmatmul.mubr.f32.gmra.mxu0 %v1017
      %v1087 = vpop.f32.mrf.mxu0
      %v1088 = vadd.f32 0.0, %v1087
      %v1089 = vpop.f32.mrf.mxu0
      %1090 = vdwg.mxu0
      %v1091 = vmul.f32 %v1088, 0.35355338
      %v1092 = vadd.f32 %v1091, %v841
      %v1093 = vsel %vm849, %v1092, -inf
      %1094 = vmax.xlane.f32.xlu0 %v1093
      %v1095 = vpop.xlane.xlu0 %1094
      %v1096 = vsub.f32 %v1092, %v1095
      %v1097 = vmul.f32 %v1096, 1.442695
      %v1098 = vpow.pop %v1097
      %v1099 = vsel %vm849, %v1098, 0.0
      %1100 = vadd.xlane.f32.xlu0 %v1099
      %v1101 = vpop.xlane.xlu0 %1100
      %v1102 = vrcp.pop %v1101
      %v1103 = vmul.f32 %v1098, %v1102
      %1104 = vrot.lane.b32.xlu0 %v826, 56
      %v1105 = vpop.permute.xlu0 %1104
      %v1108 = vsel %vm849, %v1103, 0
      %1110 = vmatprep.subr.mxu0 0.0
      %1111 = vmatpush1.msra.mxu0 0.0
      %1112 = vmatprep.subr.mxu0 0.0
      %1113 = vmatpush1.msra.mxu0 0.0
      %1114 = vmatprep.subr.mxu0 0.0
      %1115 = vmatpush1.msra.mxu0 0.0
      %1116 = vmatprep.subr.mxu0 0.0
      %1117 = vmatpush1.msra.mxu0 0.0
      %1118 = vmatprep.subr.mxu0 0.0
      %1119 = vmatpush1.msra.mxu0 0.0
      %1120 = vmatprep.subr.mxu0 0.0
      %1121 = vmatpush1.msra.mxu0 0.0
      %1122 = vmatprep.subr.mxu0 0.0
      %1123 = vmatpush1.msra.mxu0 0.0
      %1124 = vmatprep.subr.mxu0 0.0
      %1125 = vmatpush1.msra.mxu0 0.0
      %1126 = vmatprep.subr.mxu0 0.0
      %1127 = vmatpush1.msra.mxu0 0.0
      %1128 = vmatprep.subr.mxu0 0.0
      %1129 = vmatpush1.msra.mxu0 0.0
      %1130 = vmatprep.subr.mxu0 0.0
      %1131 = vmatpush1.msra.mxu0 0.0
      %1132 = vmatprep.subr.mxu0 0.0
      %1133 = vmatpush1.msra.mxu0 0.0
      %1134 = vmatprep.subr.mxu0 0.0
      %1135 = vmatpush1.msra.mxu0 0.0
      %1136 = vmatprep.subr.mxu0 0.0
      %1137 = vmatpush1.msra.mxu0 0.0
      %1138 = vmatprep.subr.mxu0 0.0
      %1139 = vmatpush1.msra.mxu0 0.0
      %1140 = vmatprep.subr.mxu0 0.0
      %1141 = vmatpush1.msra.mxu0 %v1105
      %1142 = vmatprep.subr.mxu0 0.0
      %1143 = vmatpush2.msra.mxu0 0.0
      %1144 = vmatprep.subr.mxu0 0.0
      %1145 = vmatpush2.msra.mxu0 0.0
      %1146 = vmatprep.subr.mxu0 0.0
      %1147 = vmatpush2.msra.mxu0 0.0
      %1148 = vmatprep.subr.mxu0 0.0
      %1149 = vmatpush2.msra.mxu0 0.0
      %1150 = vmatprep.subr.mxu0 0.0
      %1151 = vmatpush2.msra.mxu0 0.0
      %1152 = vmatprep.subr.mxu0 0.0
      %1153 = vmatpush2.msra.mxu0 0.0
      %1154 = vmatprep.subr.mxu0 0.0
      %1155 = vmatpush2.msra.mxu0 0.0
      %1156 = vmatprep.subr.mxu0 0.0
      %1157 = vmatpush2.msra.mxu0 0.0
      %1158 = vmatprep.subr.mxu0 0.0
      %1159 = vmatpush2.msra.mxu0 0.0
      %1160 = vmatprep.subr.mxu0 0.0
      %1161 = vmatpush2.msra.mxu0 0.0
      %1162 = vmatprep.subr.mxu0 0.0
      %1163 = vmatpush2.msra.mxu0 0.0
      %1164 = vmatprep.subr.mxu0 0.0
      %1165 = vmatpush2.msra.mxu0 0.0
      %1166 = vmatprep.subr.mxu0 0.0
      %1167 = vmatpush2.msra.mxu0 0.0
      %1168 = vmatprep.subr.mxu0 0.0
      %1169 = vmatpush2.msra.mxu0 0.0
      %1170 = vmatprep.subr.mxu0 0.0
      %1171 = vmatpush2.msra.mxu0 0.0
      %1172 = vmatprep.subr.mxu0 0.0
      %1173 = vmatpush2.msra.mxu0 0.0
      %1174 = vmatprep.mubr.f32.mxu0 0.0
      %1175 = vmatmul.mubr.f32.gmra.mxu0 %v1108
      %v1176 = vpop.f32.mrf.mxu0
      %v1177 = vadd.f32 0.0, %v1176
      %v1178 = vpop.f32.mrf.mxu0
      %1179 = vdwg.mxu0
      %v1181 = vsel %vm849, %v1177, 0
      %1183 = vmatprep.subr.mxu0 0.0
      %1184 = vmatpush1.msra.mxu0 0.0
      %1185 = vmatprep.subr.mxu0 0.0
      %1186 = vmatpush1.msra.mxu0 0.0
      %1187 = vmatprep.subr.mxu0 0.0
      %1188 = vmatpush1.msra.mxu0 0.0
      %1189 = vmatprep.subr.mxu0 0.0
      %1190 = vmatpush1.msra.mxu0 0.0
      %1191 = vmatprep.subr.mxu0 0.0
      %1192 = vmatpush1.msra.mxu0 0.0
      %1193 = vmatprep.subr.mxu0 0.0
      %1194 = vmatpush1.msra.mxu0 0.0
      %1195 = vmatprep.subr.mxu0 0.0
      %1196 = vmatpush1.msra.mxu0 0.0
      %1197 = vmatprep.subr.mxu0 0.0
      %1198 = vmatpush1.msra.mxu0 0.0
      %1199 = vmatprep.subr.mxu0 0.0
      %1200 = vmatpush1.msra.mxu0 0.0
      %1201 = vmatprep.subr.mxu0 0.0
      %1202 = vmatpush1.msra.mxu0 0.0
      %1203 = vmatprep.subr.mxu0 0.0
      %1204 = vmatpush1.msra.mxu0 0.0
      %1205 = vmatprep.subr.mxu0 0.0
      %1206 = vmatpush1.msra.mxu0 0.0
      %1207 = vmatprep.subr.mxu0 0.0
      %1208 = vmatpush1.msra.mxu0 0.0
      %1209 = vmatprep.subr.mxu0 0.0
      %1210 = vmatpush1.msra.mxu0 0.0
      %1211 = vmatprep.subr.mxu0 0.0
      %1212 = vmatpush1.msra.mxu0 0.0
      %1213 = vmatprep.subr.mxu0 0.0
      %1214 = vmatpush1.msra.mxu0 %v843
      %1215 = vmatprep.subr.mxu0 0.0
      %1216 = vmatpush2.msra.mxu0 0.0
      %1217 = vmatprep.subr.mxu0 0.0
      %1218 = vmatpush2.msra.mxu0 0.0
      %1219 = vmatprep.subr.mxu0 0.0
      %1220 = vmatpush2.msra.mxu0 0.0
      %1221 = vmatprep.subr.mxu0 0.0
      %1222 = vmatpush2.msra.mxu0 0.0
      %1223 = vmatprep.subr.mxu0 0.0
      %1224 = vmatpush2.msra.mxu0 0.0
      %1225 = vmatprep.subr.mxu0 0.0
      %1226 = vmatpush2.msra.mxu0 0.0
      %1227 = vmatprep.subr.mxu0 0.0
      %1228 = vmatpush2.msra.mxu0 0.0
      %1229 = vmatprep.subr.mxu0 0.0
      %1230 = vmatpush2.msra.mxu0 0.0
      %1231 = vmatprep.subr.mxu0 0.0
      %1232 = vmatpush2.msra.mxu0 0.0
      %1233 = vmatprep.subr.mxu0 0.0
      %1234 = vmatpush2.msra.mxu0 0.0
      %1235 = vmatprep.subr.mxu0 0.0
      %1236 = vmatpush2.msra.mxu0 0.0
      %1237 = vmatprep.subr.mxu0 0.0
      %1238 = vmatpush2.msra.mxu0 0.0
      %1239 = vmatprep.subr.mxu0 0.0
      %1240 = vmatpush2.msra.mxu0 0.0
      %1241 = vmatprep.subr.mxu0 0.0
      %1242 = vmatpush2.msra.mxu0 0.0
      %1243 = vmatprep.subr.mxu0 0.0
      %1244 = vmatpush2.msra.mxu0 0.0
      %1245 = vmatprep.subr.mxu0 0.0
      %1246 = vmatpush2.msra.mxu0 0.0
      %1247 = vmatprep.mubr.f32.mxu0 0.0
      %1248 = vmatmul.mubr.f32.gmra.mxu0 %v1181
      %v1249 = vpop.f32.mrf.mxu0
      %v1250 = vadd.f32 0.0, %v1249
      %v1251 = vpop.f32.mrf.mxu0
      %1252 = vdwg.mxu0
      %v1254 = vsel %vm849, %v1010, 0
      %1256 = vmatprep.subr.mxu0 0.0
      %1257 = vmatpush1.msra.mxu0 0.0
      %1258 = vmatprep.subr.mxu0 0.0
      %1259 = vmatpush1.msra.mxu0 0.0
      %1260 = vmatprep.subr.mxu0 0.0
      %1261 = vmatpush1.msra.mxu0 0.0
      %1262 = vmatprep.subr.mxu0 0.0
      %1263 = vmatpush1.msra.mxu0 0.0
      %1264 = vmatprep.subr.mxu0 0.0
      %1265 = vmatpush1.msra.mxu0 0.0
      %1266 = vmatprep.subr.mxu0 0.0
      %1267 = vmatpush1.msra.mxu0 0.0
      %1268 = vmatprep.subr.mxu0 0.0
      %1269 = vmatpush1.msra.mxu0 0.0
      %1270 = vmatprep.subr.mxu0 0.0
      %1271 = vmatpush1.msra.mxu0 0.0
      %1272 = vmatprep.subr.mxu0 0.0
      %1273 = vmatpush1.msra.mxu0 0.0
      %1274 = vmatprep.subr.mxu0 0.0
      %1275 = vmatpush1.msra.mxu0 0.0
      %1276 = vmatprep.subr.mxu0 0.0
      %1277 = vmatpush1.msra.mxu0 0.0
      %1278 = vmatprep.subr.mxu0 0.0
      %1279 = vmatpush1.msra.mxu0 0.0
      %1280 = vmatprep.subr.mxu0 0.0
      %1281 = vmatpush1.msra.mxu0 0.0
      %1282 = vmatprep.subr.mxu0 0.0
      %1283 = vmatpush1.msra.mxu0 0.0
      %1284 = vmatprep.subr.mxu0 0.0
      %1285 = vmatpush1.msra.mxu0 0.0
      %1286 = vmatprep.subr.mxu0 0.0
      %1287 = vmatpush1.msra.mxu0 %v842
      %1288 = vmatprep.subr.mxu0 0.0
      %1289 = vmatpush2.msra.mxu0 0.0
      %1290 = vmatprep.subr.mxu0 0.0
      %1291 = vmatpush2.msra.mxu0 0.0
      %1292 = vmatprep.subr.mxu0 0.0
      %1293 = vmatpush2.msra.mxu0 0.0
      %1294 = vmatprep.subr.mxu0 0.0
      %1295 = vmatpush2.msra.mxu0 0.0
      %1296 = vmatprep.subr.mxu0 0.0
      %1297 = vmatpush2.msra.mxu0 0.0
      %1298 = vmatprep.subr.mxu0 0.0
      %1299 = vmatpush2.msra.mxu0 0.0
      %1300 = vmatprep.subr.mxu0 0.0
      %1301 = vmatpush2.msra.mxu0 0.0
      %1302 = vmatprep.subr.mxu0 0.0
      %1303 = vmatpush2.msra.mxu0 0.0
      %1304 = vmatprep.subr.mxu0 0.0
      %1305 = vmatpush2.msra.mxu0 0.0
      %1306 = vmatprep.subr.mxu0 0.0
      %1307 = vmatpush2.msra.mxu0 0.0
      %1308 = vmatprep.subr.mxu0 0.0
      %1309 = vmatpush2.msra.mxu0 0.0
      %1310 = vmatprep.subr.mxu0 0.0
      %1311 = vmatpush2.msra.mxu0 0.0
      %1312 = vmatprep.subr.mxu0 0.0
      %1313 = vmatpush2.msra.mxu0 0.0
      %1314 = vmatprep.subr.mxu0 0.0
      %1315 = vmatpush2.msra.mxu0 0.0
      %1316 = vmatprep.subr.mxu0 0.0
      %1317 = vmatpush2.msra.mxu0 0.0
      %1318 = vmatprep.subr.mxu0 0.0
      %1319 = vmatpush2.msra.mxu0 0.0
      %1320 = vmatprep.mubr.f32.mxu0 0.0
      %1321 = vmatmul.mubr.f32.gmra.mxu0 %v1254
      %v1322 = vpop.f32.mrf.mxu0
      %v1323 = vadd.f32 %v1250, %v1322
      %v1324 = vpop.f32.mrf.mxu0
      %1325 = vdwg.mxu0
      %1326 = vrot.lane.b32.xlu0 %v826, 112
      %v1327 = vpop.permute.xlu0 %1326
      %1328 = vrot.lane.b32.xlu0 %v826, 80
      %v1329 = vpop.permute.xlu0 %1328
      %v1330 = vsel %vm849, %v1327, 0
      %v1332 = vsel %vm849, %v1329, 0
      %1334 = vmatprep.subr.mxu0 0.0
      %1335 = vmatpush1.xpose.msra.mxu0 0.0
      %1336 = vmatprep.subr.mxu0 0.0
      %1337 = vmatpush1.xpose.msra.mxu0 0.0
      %1338 = vmatprep.subr.mxu0 0.0
      %1339 = vmatpush1.xpose.msra.mxu0 0.0
      %1340 = vmatprep.subr.mxu0 0.0
      %1341 = vmatpush1.xpose.msra.mxu0 0.0
      %1342 = vmatprep.subr.mxu0 0.0
      %1343 = vmatpush1.xpose.msra.mxu0 0.0
      %1344 = vmatprep.subr.mxu0 0.0
      %1345 = vmatpush1.xpose.msra.mxu0 0.0
      %1346 = vmatprep.subr.mxu0 0.0
      %1347 = vmatpush1.xpose.msra.mxu0 0.0
      %1348 = vmatprep.subr.mxu0 0.0
      %1349 = vmatpush1.xpose.msra.mxu0 0.0
      %1350 = vmatprep.subr.mxu0 0.0
      %1351 = vmatpush1.xpose.msra.mxu0 0.0
      %1352 = vmatprep.subr.mxu0 0.0
      %1353 = vmatpush1.xpose.msra.mxu0 0.0
      %1354 = vmatprep.subr.mxu0 0.0
      %1355 = vmatpush1.xpose.msra.mxu0 0.0
      %1356 = vmatprep.subr.mxu0 0.0
      %1357 = vmatpush1.xpose.msra.mxu0 0.0
      %1358 = vmatprep.subr.mxu0 0.0
      %1359 = vmatpush1.xpose.msra.mxu0 0.0
      %1360 = vmatprep.subr.mxu0 0.0
      %1361 = vmatpush1.xpose.msra.mxu0 0.0
      %1362 = vmatprep.subr.mxu0 0.0
      %1363 = vmatpush1.xpose.msra.mxu0 0.0
      %1364 = vmatprep.subr.mxu0 0.0
      %1365 = vmatpush1.xpose.msra.mxu0 %v1332
      %1366 = vmatprep.subr.mxu0 0.0
      %1367 = vmatpush2.xpose.msra.mxu0 0.0
      %1368 = vmatprep.subr.mxu0 0.0
      %1369 = vmatpush2.xpose.msra.mxu0 0.0
      %1370 = vmatprep.subr.mxu0 0.0
      %1371 = vmatpush2.xpose.msra.mxu0 0.0
      %1372 = vmatprep.subr.mxu0 0.0
      %1373 = vmatpush2.xpose.msra.mxu0 0.0
      %1374 = vmatprep.subr.mxu0 0.0
      %1375 = vmatpush2.xpose.msra.mxu0 0.0
      %1376 = vmatprep.subr.mxu0 0.0
      %1377 = vmatpush2.xpose.msra.mxu0 0.0
      %1378 = vmatprep.subr.mxu0 0.0
      %1379 = vmatpush2.xpose.msra.mxu0 0.0
      %1380 = vmatprep.subr.mxu0 0.0
      %1381 = vmatpush2.xpose.msra.mxu0 0.0
      %1382 = vmatprep.subr.mxu0 0.0
      %1383 = vmatpush2.xpose.msra.mxu0 0.0
      %1384 = vmatprep.subr.mxu0 0.0
      %1385 = vmatpush2.xpose.msra.mxu0 0.0
      %1386 = vmatprep.subr.mxu0 0.0
      %1387 = vmatpush2.xpose.msra.mxu0 0.0
      %1388 = vmatprep.subr.mxu0 0.0
      %1389 = vmatpush2.xpose.msra.mxu0 0.0
      %1390 = vmatprep.subr.mxu0 0.0
      %1391 = vmatpush2.xpose.msra.mxu0 0.0
      %1392 = vmatprep.subr.mxu0 0.0
      %1393 = vmatpush2.xpose.msra.mxu0 0.0
      %1394 = vmatprep.subr.mxu0 0.0
      %1395 = vmatpush2.xpose.msra.mxu0 0.0
      %1396 = vmatprep.subr.mxu0 0.0
      %1397 = vmatpush2.xpose.msra.mxu0 0.0
      %1398 = vmatprep.mubr.f32.mxu0 0.0
      %1399 = vmatmul.mubr.f32.gmra.mxu0 %v1330
      %v1400 = vpop.f32.mrf.mxu0
      %v1401 = vadd.f32 0.0, %v1400
      %v1402 = vpop.f32.mrf.mxu0
      %1403 = vdwg.mxu0
      %v1404 = vmul.f32 %v1401, 0.35355338
      %v1405 = vadd.f32 %v1404, %v841
      %v1406 = vsel %vm849, %v1405, -inf
      %1407 = vmax.xlane.f32.xlu0 %v1406
      %v1408 = vpop.xlane.xlu0 %1407
      %v1409 = vsub.f32 %v1405, %v1408
      %v1410 = vmul.f32 %v1409, 1.442695
      %v1411 = vpow.pop %v1410
      %v1412 = vsel %vm849, %v1411, 0.0
      %1413 = vadd.xlane.f32.xlu0 %v1412
      %v1414 = vpop.xlane.xlu0 %1413
      %v1415 = vrcp.pop %v1414
      %v1416 = vmul.f32 %v1411, %v1415
      %1417 = vrot.lane.b32.xlu0 %v826, 48
      %v1418 = vpop.permute.xlu0 %1417
      %v1421 = vsel %vm849, %v1416, 0
      %1423 = vmatprep.subr.mxu0 0.0
      %1424 = vmatpush1.msra.mxu0 0.0
      %1425 = vmatprep.subr.mxu0 0.0
      %1426 = vmatpush1.msra.mxu0 0.0
      %1427 = vmatprep.subr.mxu0 0.0
      %1428 = vmatpush1.msra.mxu0 0.0
      %1429 = vmatprep.subr.mxu0 0.0
      %1430 = vmatpush1.msra.mxu0 0.0
      %1431 = vmatprep.subr.mxu0 0.0
      %1432 = vmatpush1.msra.mxu0 0.0
      %1433 = vmatprep.subr.mxu0 0.0
      %1434 = vmatpush1.msra.mxu0 0.0
      %1435 = vmatprep.subr.mxu0 0.0
      %1436 = vmatpush1.msra.mxu0 0.0
      %1437 = vmatprep.subr.mxu0 0.0
      %1438 = vmatpush1.msra.mxu0 0.0
      %1439 = vmatprep.subr.mxu0 0.0
      %1440 = vmatpush1.msra.mxu0 0.0
      %1441 = vmatprep.subr.mxu0 0.0
      %1442 = vmatpush1.msra.mxu0 0.0
      %1443 = vmatprep.subr.mxu0 0.0
      %1444 = vmatpush1.msra.mxu0 0.0
      %1445 = vmatprep.subr.mxu0 0.0
      %1446 = vmatpush1.msra.mxu0 0.0
      %1447 = vmatprep.subr.mxu0 0.0
      %1448 = vmatpush1.msra.mxu0 0.0
      %1449 = vmatprep.subr.mxu0 0.0
      %1450 = vmatpush1.msra.mxu0 0.0
      %1451 = vmatprep.subr.mxu0 0.0
      %1452 = vmatpush1.msra.mxu0 0.0
      %1453 = vmatprep.subr.mxu0 0.0
      %1454 = vmatpush1.msra.mxu0 %v1418
      %1455 = vmatprep.subr.mxu0 0.0
      %1456 = vmatpush2.msra.mxu0 0.0
      %1457 = vmatprep.subr.mxu0 0.0
      %1458 = vmatpush2.msra.mxu0 0.0
      %1459 = vmatprep.subr.mxu0 0.0
      %1460 = vmatpush2.msra.mxu0 0.0
      %1461 = vmatprep.subr.mxu0 0.0
      %1462 = vmatpush2.msra.mxu0 0.0
      %1463 = vmatprep.subr.mxu0 0.0
      %1464 = vmatpush2.msra.mxu0 0.0
      %1465 = vmatprep.subr.mxu0 0.0
      %1466 = vmatpush2.msra.mxu0 0.0
      %1467 = vmatprep.subr.mxu0 0.0
      %1468 = vmatpush2.msra.mxu0 0.0
      %1469 = vmatprep.subr.mxu0 0.0
      %1470 = vmatpush2.msra.mxu0 0.0
      %1471 = vmatprep.subr.mxu0 0.0
      %1472 = vmatpush2.msra.mxu0 0.0
      %1473 = vmatprep.subr.mxu0 0.0
      %1474 = vmatpush2.msra.mxu0 0.0
      %1475 = vmatprep.subr.mxu0 0.0
      %1476 = vmatpush2.msra.mxu0 0.0
      %1477 = vmatprep.subr.mxu0 0.0
      %1478 = vmatpush2.msra.mxu0 0.0
      %1479 = vmatprep.subr.mxu0 0.0
      %1480 = vmatpush2.msra.mxu0 0.0
      %1481 = vmatprep.subr.mxu0 0.0
      %1482 = vmatpush2.msra.mxu0 0.0
      %1483 = vmatprep.subr.mxu0 0.0
      %1484 = vmatpush2.msra.mxu0 0.0
      %1485 = vmatprep.subr.mxu0 0.0
      %1486 = vmatpush2.msra.mxu0 0.0
      %1487 = vmatprep.mubr.f32.mxu0 0.0
      %1488 = vmatmul.mubr.f32.gmra.mxu0 %v1421
      %v1489 = vpop.f32.mrf.mxu0
      %v1490 = vadd.f32 0.0, %v1489
      %v1491 = vpop.f32.mrf.mxu0
      %1492 = vdwg.mxu0
      %v1494 = vsel %vm849, %v1490, 0
      %1496 = vmatprep.subr.mxu0 0.0
      %1497 = vmatpush1.msra.mxu0 0.0
      %1498 = vmatprep.subr.mxu0 0.0
      %1499 = vmatpush1.msra.mxu0 0.0
      %1500 = vmatprep.subr.mxu0 0.0
      %1501 = vmatpush1.msra.mxu0 0.0
      %1502 = vmatprep.subr.mxu0 0.0
      %1503 = vmatpush1.msra.mxu0 0.0
      %1504 = vmatprep.subr.mxu0 0.0
      %1505 = vmatpush1.msra.mxu0 0.0
      %1506 = vmatprep.subr.mxu0 0.0
      %1507 = vmatpush1.msra.mxu0 0.0
      %1508 = vmatprep.subr.mxu0 0.0
      %1509 = vmatpush1.msra.mxu0 0.0
      %1510 = vmatprep.subr.mxu0 0.0
      %1511 = vmatpush1.msra.mxu0 0.0
      %1512 = vmatprep.subr.mxu0 0.0
      %1513 = vmatpush1.msra.mxu0 0.0
      %1514 = vmatprep.subr.mxu0 0.0
      %1515 = vmatpush1.msra.mxu0 0.0
      %1516 = vmatprep.subr.mxu0 0.0
      %1517 = vmatpush1.msra.mxu0 0.0
      %1518 = vmatprep.subr.mxu0 0.0
      %1519 = vmatpush1.msra.mxu0 0.0
      %1520 = vmatprep.subr.mxu0 0.0
      %1521 = vmatpush1.msra.mxu0 0.0
      %1522 = vmatprep.subr.mxu0 0.0
      %1523 = vmatpush1.msra.mxu0 0.0
      %1524 = vmatprep.subr.mxu0 0.0
      %1525 = vmatpush1.msra.mxu0 0.0
      %1526 = vmatprep.subr.mxu0 0.0
      %1527 = vmatpush1.msra.mxu0 %v844
      %1528 = vmatprep.subr.mxu0 0.0
      %1529 = vmatpush2.msra.mxu0 0.0
      %1530 = vmatprep.subr.mxu0 0.0
      %1531 = vmatpush2.msra.mxu0 0.0
      %1532 = vmatprep.subr.mxu0 0.0
      %1533 = vmatpush2.msra.mxu0 0.0
      %1534 = vmatprep.subr.mxu0 0.0
      %1535 = vmatpush2.msra.mxu0 0.0
      %1536 = vmatprep.subr.mxu0 0.0
      %1537 = vmatpush2.msra.mxu0 0.0
      %1538 = vmatprep.subr.mxu0 0.0
      %1539 = vmatpush2.msra.mxu0 0.0
      %1540 = vmatprep.subr.mxu0 0.0
      %1541 = vmatpush2.msra.mxu0 0.0
      %1542 = vmatprep.subr.mxu0 0.0
      %1543 = vmatpush2.msra.mxu0 0.0
      %1544 = vmatprep.subr.mxu0 0.0
      %1545 = vmatpush2.msra.mxu0 0.0
      %1546 = vmatprep.subr.mxu0 0.0
      %1547 = vmatpush2.msra.mxu0 0.0
      %1548 = vmatprep.subr.mxu0 0.0
      %1549 = vmatpush2.msra.mxu0 0.0
      %1550 = vmatprep.subr.mxu0 0.0
      %1551 = vmatpush2.msra.mxu0 0.0
      %1552 = vmatprep.subr.mxu0 0.0
      %1553 = vmatpush2.msra.mxu0 0.0
      %1554 = vmatprep.subr.mxu0 0.0
      %1555 = vmatpush2.msra.mxu0 0.0
      %1556 = vmatprep.subr.mxu0 0.0
      %1557 = vmatpush2.msra.mxu0 0.0
      %1558 = vmatprep.subr.mxu0 0.0
      %1559 = vmatpush2.msra.mxu0 0.0
      %1560 = vmatprep.mubr.f32.mxu0 0.0
      %1561 = vmatmul.mubr.f32.gmra.mxu0 %v1494
      %v1562 = vpop.f32.mrf.mxu0
      %v1563 = vadd.f32 0.0, %v1562
      %v1564 = vpop.f32.mrf.mxu0
      %1565 = vdwg.mxu0
      %v1566 = vadd.f32 %v1323, %v1563
      %1567 = vrot.lane.b32.xlu0 %v826, 104
      %v1568 = vpop.permute.xlu0 %1567
      %1569 = vrot.lane.b32.xlu0 %v826, 72
      %v1570 = vpop.permute.xlu0 %1569
      %v1571 = vsel %vm849, %v1568, 0
      %v1573 = vsel %vm849, %v1570, 0
      %1575 = vmatprep.subr.mxu0 0.0
      %1576 = vmatpush1.xpose.msra.mxu0 0.0
      %1577 = vmatprep.subr.mxu0 0.0
      %1578 = vmatpush1.xpose.msra.mxu0 0.0
      %1579 = vmatprep.subr.mxu0 0.0
      %1580 = vmatpush1.xpose.msra.mxu0 0.0
      %1581 = vmatprep.subr.mxu0 0.0
      %1582 = vmatpush1.xpose.msra.mxu0 0.0
      %1583 = vmatprep.subr.mxu0 0.0
      %1584 = vmatpush1.xpose.msra.mxu0 0.0
      %1585 = vmatprep.subr.mxu0 0.0
      %1586 = vmatpush1.xpose.msra.mxu0 0.0
      %1587 = vmatprep.subr.mxu0 0.0
      %1588 = vmatpush1.xpose.msra.mxu0 0.0
      %1589 = vmatprep.subr.mxu0 0.0
      %1590 = vmatpush1.xpose.msra.mxu0 0.0
      %1591 = vmatprep.subr.mxu0 0.0
      %1592 = vmatpush1.xpose.msra.mxu0 0.0
      %1593 = vmatprep.subr.mxu0 0.0
      %1594 = vmatpush1.xpose.msra.mxu0 0.0
      %1595 = vmatprep.subr.mxu0 0.0
      %1596 = vmatpush1.xpose.msra.mxu0 0.0
      %1597 = vmatprep.subr.mxu0 0.0
      %1598 = vmatpush1.xpose.msra.mxu0 0.0
      %1599 = vmatprep.subr.mxu0 0.0
      %1600 = vmatpush1.xpose.msra.mxu0 0.0
      %1601 = vmatprep.subr.mxu0 0.0
      %1602 = vmatpush1.xpose.msra.mxu0 0.0
      %1603 = vmatprep.subr.mxu0 0.0
      %1604 = vmatpush1.xpose.msra.mxu0 0.0
      %1605 = vmatprep.subr.mxu0 0.0
      %1606 = vmatpush1.xpose.msra.mxu0 %v1573
      %1607 = vmatprep.subr.mxu0 0.0
      %1608 = vmatpush2.xpose.msra.mxu0 0.0
      %1609 = vmatprep.subr.mxu0 0.0
      %1610 = vmatpush2.xpose.msra.mxu0 0.0
      %1611 = vmatprep.subr.mxu0 0.0
      %1612 = vmatpush2.xpose.msra.mxu0 0.0
      %1613 = vmatprep.subr.mxu0 0.0
      %1614 = vmatpush2.xpose.msra.mxu0 0.0
      %1615 = vmatprep.subr.mxu0 0.0
      %1616 = vmatpush2.xpose.msra.mxu0 0.0
      %1617 = vmatprep.subr.mxu0 0.0
      %1618 = vmatpush2.xpose.msra.mxu0 0.0
      %1619 = vmatprep.subr.mxu0 0.0
      %1620 = vmatpush2.xpose.msra.mxu0 0.0
      %1621 = vmatprep.subr.mxu0 0.0
      %1622 = vmatpush2.xpose.msra.mxu0 0.0
      %1623 = vmatprep.subr.mxu0 0.0
      %1624 = vmatpush2.xpose.msra.mxu0 0.0
      %1625 = vmatprep.subr.mxu0 0.0
      %1626 = vmatpush2.xpose.msra.mxu0 0.0
      %1627 = vmatprep.subr.mxu0 0.0
      %1628 = vmatpush2.xpose.msra.mxu0 0.0
      %1629 = vmatprep.subr.mxu0 0.0
      %1630 = vmatpush2.xpose.msra.mxu0 0.0
      %1631 = vmatprep.subr.mxu0 0.0
      %1632 = vmatpush2.xpose.msra.mxu0 0.0
      %1633 = vmatprep.subr.mxu0 0.0
      %1634 = vmatpush2.xpose.msra.mxu0 0.0
      %1635 = vmatprep.subr.mxu0 0.0
      %1636 = vmatpush2.xpose.msra.mxu0 0.0
      %1637 = vmatprep.subr.mxu0 0.0
      %1638 = vmatpush2.xpose.msra.mxu0 0.0
      %1639 = vmatprep.mubr.f32.mxu0 0.0
      %1640 = vmatmul.mubr.f32.gmra.mxu0 %v1571
      %v1641 = vpop.f32.mrf.mxu0
      %v1642 = vadd.f32 0.0, %v1641
      %v1643 = vpop.f32.mrf.mxu0
      %1644 = vdwg.mxu0
      %v1645 = vmul.f32 %v1642, 0.35355338
      %v1646 = vadd.f32 %v1645, %v841
      %v1647 = vsel %vm849, %v1646, -inf
      %1648 = vmax.xlane.f32.xlu0 %v1647
      %v1649 = vpop.xlane.xlu0 %1648
      %v1650 = vsub.f32 %v1646, %v1649
      %v1651 = vmul.f32 %v1650, 1.442695
      %v1652 = vpow.pop %v1651
      %v1653 = vsel %vm849, %v1652, 0.0
      %1654 = vadd.xlane.f32.xlu0 %v1653
      %v1655 = vpop.xlane.xlu0 %1654
      %v1656 = vrcp.pop %v1655
      %v1657 = vmul.f32 %v1652, %v1656
      %1658 = vrot.lane.b32.xlu0 %v826, 40
      %v1659 = vpop.permute.xlu0 %1658
      %v1662 = vsel %vm849, %v1657, 0
      %1664 = vmatprep.subr.mxu0 0.0
      %1665 = vmatpush1.msra.mxu0 0.0
      %1666 = vmatprep.subr.mxu0 0.0
      %1667 = vmatpush1.msra.mxu0 0.0
      %1668 = vmatprep.subr.mxu0 0.0
      %1669 = vmatpush1.msra.mxu0 0.0
      %1670 = vmatprep.subr.mxu0 0.0
      %1671 = vmatpush1.msra.mxu0 0.0
      %1672 = vmatprep.subr.mxu0 0.0
      %1673 = vmatpush1.msra.mxu0 0.0
      %1674 = vmatprep.subr.mxu0 0.0
      %1675 = vmatpush1.msra.mxu0 0.0
      %1676 = vmatprep.subr.mxu0 0.0
      %1677 = vmatpush1.msra.mxu0 0.0
      %1678 = vmatprep.subr.mxu0 0.0
      %1679 = vmatpush1.msra.mxu0 0.0
      %1680 = vmatprep.subr.mxu0 0.0
      %1681 = vmatpush1.msra.mxu0 0.0
      %1682 = vmatprep.subr.mxu0 0.0
      %1683 = vmatpush1.msra.mxu0 0.0
      %1684 = vmatprep.subr.mxu0 0.0
      %1685 = vmatpush1.msra.mxu0 0.0
      %1686 = vmatprep.subr.mxu0 0.0
      %1687 = vmatpush1.msra.mxu0 0.0
      %1688 = vmatprep.subr.mxu0 0.0
      %1689 = vmatpush1.msra.mxu0 0.0
      %1690 = vmatprep.subr.mxu0 0.0
      %1691 = vmatpush1.msra.mxu0 0.0
      %1692 = vmatprep.subr.mxu0 0.0
      %1693 = vmatpush1.msra.mxu0 0.0
      %1694 = vmatprep.subr.mxu0 0.0
      %1695 = vmatpush1.msra.mxu0 %v1659
      %1696 = vmatprep.subr.mxu0 0.0
      %1697 = vmatpush2.msra.mxu0 0.0
      %1698 = vmatprep.subr.mxu0 0.0
      %1699 = vmatpush2.msra.mxu0 0.0
      %1700 = vmatprep.subr.mxu0 0.0
      %1701 = vmatpush2.msra.mxu0 0.0
      %1702 = vmatprep.subr.mxu0 0.0
      %1703 = vmatpush2.msra.mxu0 0.0
      %1704 = vmatprep.subr.mxu0 0.0
      %1705 = vmatpush2.msra.mxu0 0.0
      %1706 = vmatprep.subr.mxu0 0.0
      %1707 = vmatpush2.msra.mxu0 0.0
      %1708 = vmatprep.subr.mxu0 0.0
      %1709 = vmatpush2.msra.mxu0 0.0
      %1710 = vmatprep.subr.mxu0 0.0
      %1711 = vmatpush2.msra.mxu0 0.0
      %1712 = vmatprep.subr.mxu0 0.0
      %1713 = vmatpush2.msra.mxu0 0.0
      %1714 = vmatprep.subr.mxu0 0.0
      %1715 = vmatpush2.msra.mxu0 0.0
      %1716 = vmatprep.subr.mxu0 0.0
      %1717 = vmatpush2.msra.mxu0 0.0
      %1718 = vmatprep.subr.mxu0 0.0
      %1719 = vmatpush2.msra.mxu0 0.0
      %1720 = vmatprep.subr.mxu0 0.0
      %1721 = vmatpush2.msra.mxu0 0.0
      %1722 = vmatprep.subr.mxu0 0.0
      %1723 = vmatpush2.msra.mxu0 0.0
      %1724 = vmatprep.subr.mxu0 0.0
      %1725 = vmatpush2.msra.mxu0 0.0
      %1726 = vmatprep.subr.mxu0 0.0
      %1727 = vmatpush2.msra.mxu0 0.0
      %1728 = vmatprep.mubr.f32.mxu0 0.0
      %1729 = vmatmul.mubr.f32.gmra.mxu0 %v1662
      %v1730 = vpop.f32.mrf.mxu0
      %v1731 = vadd.f32 0.0, %v1730
      %v1732 = vpop.f32.mrf.mxu0
      %1733 = vdwg.mxu0
      %v1735 = vsel %vm849, %v1731, 0
      %1737 = vmatprep.subr.mxu0 0.0
      %1738 = vmatpush1.msra.mxu0 0.0
      %1739 = vmatprep.subr.mxu0 0.0
      %1740 = vmatpush1.msra.mxu0 0.0
      %1741 = vmatprep.subr.mxu0 0.0
      %1742 = vmatpush1.msra.mxu0 0.0
      %1743 = vmatprep.subr.mxu0 0.0
      %1744 = vmatpush1.msra.mxu0 0.0
      %1745 = vmatprep.subr.mxu0 0.0
      %1746 = vmatpush1.msra.mxu0 0.0
      %1747 = vmatprep.subr.mxu0 0.0
      %1748 = vmatpush1.msra.mxu0 0.0
      %1749 = vmatprep.subr.mxu0 0.0
      %1750 = vmatpush1.msra.mxu0 0.0
      %1751 = vmatprep.subr.mxu0 0.0
      %1752 = vmatpush1.msra.mxu0 0.0
      %1753 = vmatprep.subr.mxu0 0.0
      %1754 = vmatpush1.msra.mxu0 0.0
      %1755 = vmatprep.subr.mxu0 0.0
      %1756 = vmatpush1.msra.mxu0 0.0
      %1757 = vmatprep.subr.mxu0 0.0
      %1758 = vmatpush1.msra.mxu0 0.0
      %1759 = vmatprep.subr.mxu0 0.0
      %1760 = vmatpush1.msra.mxu0 0.0
      %1761 = vmatprep.subr.mxu0 0.0
      %1762 = vmatpush1.msra.mxu0 0.0
      %1763 = vmatprep.subr.mxu0 0.0
      %1764 = vmatpush1.msra.mxu0 0.0
      %1765 = vmatprep.subr.mxu0 0.0
      %1766 = vmatpush1.msra.mxu0 0.0
      %1767 = vmatprep.subr.mxu0 0.0
      %1768 = vmatpush1.msra.mxu0 %v845
      %1769 = vmatprep.subr.mxu0 0.0
      %1770 = vmatpush2.msra.mxu0 0.0
      %1771 = vmatprep.subr.mxu0 0.0
      %1772 = vmatpush2.msra.mxu0 0.0
      %1773 = vmatprep.subr.mxu0 0.0
      %1774 = vmatpush2.msra.mxu0 0.0
      %1775 = vmatprep.subr.mxu0 0.0
      %1776 = vmatpush2.msra.mxu0 0.0
      %1777 = vmatprep.subr.mxu0 0.0
      %1778 = vmatpush2.msra.mxu0 0.0
      %1779 = vmatprep.subr.mxu0 0.0
      %1780 = vmatpush2.msra.mxu0 0.0
      %1781 = vmatprep.subr.mxu0 0.0
      %1782 = vmatpush2.msra.mxu0 0.0
      %1783 = vmatprep.subr.mxu0 0.0
      %1784 = vmatpush2.msra.mxu0 0.0
      %1785 = vmatprep.subr.mxu0 0.0
      %1786 = vmatpush2.msra.mxu0 0.0
      %1787 = vmatprep.subr.mxu0 0.0
      %1788 = vmatpush2.msra.mxu0 0.0
      %1789 = vmatprep.subr.mxu0 0.0
      %1790 = vmatpush2.msra.mxu0 0.0
      %1791 = vmatprep.subr.mxu0 0.0
      %1792 = vmatpush2.msra.mxu0 0.0
      %1793 = vmatprep.subr.mxu0 0.0
      %1794 = vmatpush2.msra.mxu0 0.0
      %1795 = vmatprep.subr.mxu0 0.0
      %1796 = vmatpush2.msra.mxu0 0.0
      %1797 = vmatprep.subr.mxu0 0.0
      %1798 = vmatpush2.msra.mxu0 0.0
      %1799 = vmatprep.subr.mxu0 0.0
      %1800 = vmatpush2.msra.mxu0 0.0
      %1801 = vmatprep.mubr.f32.mxu0 0.0
      %1802 = vmatmul.mubr.f32.gmra.mxu0 %v1735
      %v1803 = vpop.f32.mrf.mxu0
      %v1804 = vadd.f32 0.0, %v1803
      %v1805 = vpop.f32.mrf.mxu0
      %1806 = vdwg.mxu0
      %v1807 = vadd.f32 %v1566, %v1804
      %v1808 = vld [vmem:[%s6] sm:$0x1]
      %v1810 = vlaneseq
      %v1811 = vshrl.u32 %v1810, 7
      %v1812 = vsub.s32 0, %v1811
      %v1813 = vrot.slane %v1808, %v1812
      %v1815 = vadd.f32 %v1807, %v1813
      %v1816 = vadd.f32 %v740, %v1815
      %v1817 = vld [vmem:[%s17] sm:$0x1]
      %v1818 = vld [vmem:[%s18] sm:$0x1]
      %v1819 = vsel %vm755, %v1816, 0.0
      %1820 = vadd.xlane.f32.xlu0 %v1819
      %v1821 = vpop.xlane.xlu0 %1820
      %v1822 = vrcp.pop 32.0
      %v1823 = vmul.f32 %v1821, %v1822
      %v1824 = vsub.f32 %v1816, %v1823
      %v1825 = vmul.f32 %v1824, %v1824
      %v1826 = vsel %vm755, %v1825, 0.0
      %1827 = vadd.xlane.f32.xlu0 %v1826
      %v1828 = vpop.xlane.xlu0 %1827
      %v1829 = vmul.f32 %v1828, %v1822
      %v1830 = vadd.f32 %v1829, 1e-05
      %v1831 = vrsqrt.pop %v1830
      %v1832 = vmul.f32 %v1824, %v1831
      %v1834 = vlaneseq
      %v1835 = vshrl.u32 %v1834, 7
      %v1836 = vsub.s32 0, %v1835
      %v1837 = vrot.slane %v1817, %v1836
      %v1839 = vmul.f32 %v1832, %v1837
      %v1841 = vlaneseq
      %v1842 = vshrl.u32 %v1841, 7
      %v1843 = vsub.s32 0, %v1842
      %v1844 = vrot.slane %v1818, %v1843
      %v1846 = vadd.f32 %v1839, %v1844
      %v1847 = vld [vmem:[%s7] sm:$0xff]
      %v1848 = vld [vmem:[%s7 + $0x8] sm:$0xff]
      %v1849 = vld [vmem:[%s7 + $0x10] sm:$0xff]
      %v1850 = vld [vmem:[%s7 + $0x18] sm:$0xff]
      %v1851 = vld [vmem:[%s8] sm:$0x1]
      %v1853 = vlaneseq
      %v1854 = vshrl.u32 %v1853, 7
      %v1855 = vsub.s32 0, %v1854
      %v1856 = vrot.slane %v1851, %v1855
      %v1859 = vsel %vm755, %v1846, 0
      %1861 = vmatprep.subr.mxu0 0.0
      %1862 = vmatpush1.msra.mxu0 0.0
      %1863 = vmatprep.subr.mxu0 0.0
      %1864 = vmatpush1.msra.mxu0 0.0
      %1865 = vmatprep.subr.mxu0 0.0
      %1866 = vmatpush1.msra.mxu0 0.0
      %1867 = vmatprep.subr.mxu0 0.0
      %1868 = vmatpush1.msra.mxu0 0.0
      %1869 = vmatprep.subr.mxu0 0.0
      %1870 = vmatpush1.msra.mxu0 0.0
      %1871 = vmatprep.subr.mxu0 0.0
      %1872 = vmatpush1.msra.mxu0 0.0
      %1873 = vmatprep.subr.mxu0 0.0
      %1874 = vmatpush1.msra.mxu0 0.0
      %1875 = vmatprep.subr.mxu0 0.0
      %1876 = vmatpush1.msra.mxu0 0.0
      %1877 = vmatprep.subr.mxu0 0.0
      %1878 = vmatpush1.msra.mxu0 0.0
      %1879 = vmatprep.subr.mxu0 0.0
      %1880 = vmatpush1.msra.mxu0 0.0
      %1881 = vmatprep.subr.mxu0 0.0
      %1882 = vmatpush1.msra.mxu0 0.0
      %1883 = vmatprep.subr.mxu0 0.0
      %1884 = vmatpush1.msra.mxu0 0.0
      %1885 = vmatprep.subr.mxu0 0.0
      %1886 = vmatpush1.msra.mxu0 %v1850
      %1887 = vmatprep.subr.mxu0 0.0
      %1888 = vmatpush1.msra.mxu0 %v1849
      %1889 = vmatprep.subr.mxu0 0.0
      %1890 = vmatpush1.msra.mxu0 %v1848
      %1891 = vmatprep.subr.mxu0 0.0
      %1892 = vmatpush1.msra.mxu0 %v1847
      %1893 = vmatprep.subr.mxu0 0.0
      %1894 = vmatpush2.msra.mxu0 0.0
      %1895 = vmatprep.subr.mxu0 0.0
      %1896 = vmatpush2.msra.mxu0 0.0
      %1897 = vmatprep.subr.mxu0 0.0
      %1898 = vmatpush2.msra.mxu0 0.0
      %1899 = vmatprep.subr.mxu0 0.0
      %1900 = vmatpush2.msra.mxu0 0.0
      %1901 = vmatprep.subr.mxu0 0.0
      %1902 = vmatpush2.msra.mxu0 0.0
      %1903 = vmatprep.subr.mxu0 0.0
      %1904 = vmatpush2.msra.mxu0 0.0
      %1905 = vmatprep.subr.mxu0 0.0
      %1906 = vmatpush2.msra.mxu0 0.0
      %1907 = vmatprep.subr.mxu0 0.0
      %1908 = vmatpush2.msra.mxu0 0.0
      %1909 = vmatprep.subr.mxu0 0.0
      %1910 = vmatpush2.msra.mxu0 0.0
      %1911 = vmatprep.subr.mxu0 0.0
      %1912 = vmatpush2.msra.mxu0 0.0
      %1913 = vmatprep.subr.mxu0 0.0
      %1914 = vmatpush2.msra.mxu0 0.0
      %1915 = vmatprep.subr.mxu0 0.0
      %1916 = vmatpush2.msra.mxu0 0.0
      %1917 = vmatprep.subr.mxu0 0.0
      %1918 = vmatpush2.msra.mxu0 0.0
      %1919 = vmatprep.subr.mxu0 0.0
      %1920 = vmatpush2.msra.mxu0 0.0
      %1921 = vmatprep.subr.mxu0 0.0
      %1922 = vmatpush2.msra.mxu0 0.0
      %1923 = vmatprep.subr.mxu0 0.0
      %1924 = vmatpush2.msra.mxu0 0.0
      %1925 = vmatprep.mubr.f32.mxu0 0.0
      %1926 = vmatmul.mubr.f32.gmra.mxu0 %v1859
      %v1927 = vpop.f32.mrf.mxu0
      %v1928 = vadd.f32 %v1856, %v1927
      %v1929 = vpop.f32.mrf.mxu0
      %1930 = vdwg.mxu0
      %v1931 = vld [vmem:[%s9] sm:$0xff]
      %v1932 = vld [vmem:[%s9 + $0x8] sm:$0xff]
      %v1933 = vld [vmem:[%s9 + $0x10] sm:$0xff]
      %v1934 = vld [vmem:[%s9 + $0x18] sm:$0xff]
      %v1935 = vld [vmem:[%s10] sm:$0x1]
      %v1937 = vlaneseq
      %v1938 = vshrl.u32 %v1937, 7
      %v1939 = vsub.s32 0, %v1938
      %v1940 = vrot.slane %v1935, %v1939
      %v1943 = vsel %vm755, %v741, 0
      %v1946 = vsel %vm755, %v742, 0
      %1948 = vmatprep.subr.mxu0 0.0
      %1949 = vmatpush1.msra.mxu0 0.0
      %1950 = vmatprep.subr.mxu0 0.0
      %1951 = vmatpush1.msra.mxu0 0.0
      %1952 = vmatprep.subr.mxu0 0.0
      %1953 = vmatpush1.msra.mxu0 0.0
      %1954 = vmatprep.subr.mxu0 0.0
      %1955 = vmatpush1.msra.mxu0 0.0
      %1956 = vmatprep.subr.mxu0 0.0
      %1957 = vmatpush1.msra.mxu0 0.0
      %1958 = vmatprep.subr.mxu0 0.0
      %1959 = vmatpush1.msra.mxu0 0.0
      %1960 = vmatprep.subr.mxu0 0.0
      %1961 = vmatpush1.msra.mxu0 0.0
      %1962 = vmatprep.subr.mxu0 0.0
      %1963 = vmatpush1.msra.mxu0 0.0
      %1964 = vmatprep.subr.mxu0 0.0
      %1965 = vmatpush1.msra.mxu0 0.0
      %1966 = vmatprep.subr.mxu0 0.0
      %1967 = vmatpush1.msra.mxu0 0.0
      %1968 = vmatprep.subr.mxu0 0.0
      %1969 = vmatpush1.msra.mxu0 0.0
      %1970 = vmatprep.subr.mxu0 0.0
      %1971 = vmatpush1.msra.mxu0 0.0
      %1972 = vmatprep.subr.mxu0 0.0
      %1973 = vmatpush1.msra.mxu0 %v1934
      %1974 = vmatprep.subr.mxu0 0.0
      %1975 = vmatpush1.msra.mxu0 %v1933
      %1976 = vmatprep.subr.mxu0 0.0
      %1977 = vmatpush1.msra.mxu0 %v1932
      %1978 = vmatprep.subr.mxu0 0.0
      %1979 = vmatpush1.msra.mxu0 %v1931
      %1980 = vmatprep.subr.mxu0 0.0
      %1981 = vmatpush2.msra.mxu0 0.0
      %1982 = vmatprep.subr.mxu0 0.0
      %1983 = vmatpush2.msra.mxu0 0.0
      %1984 = vmatprep.subr.mxu0 0.0
      %1985 = vmatpush2.msra.mxu0 0.0
      %1986 = vmatprep.subr.mxu0 0.0
      %1987 = vmatpush2.msra.mxu0 0.0
      %1988 = vmatprep.subr.mxu0 0.0
      %1989 = vmatpush2.msra.mxu0 0.0
      %1990 = vmatprep.subr.mxu0 0.0
      %1991 = vmatpush2.msra.mxu0 0.0
      %1992 = vmatprep.subr.mxu0 0.0
      %1993 = vmatpush2.msra.mxu0 0.0
      %1994 = vmatprep.subr.mxu0 0.0
      %1995 = vmatpush2.msra.mxu0 0.0
      %1996 = vmatprep.subr.mxu0 0.0
      %1997 = vmatpush2.msra.mxu0 0.0
      %1998 = vmatprep.subr.mxu0 0.0
      %1999 = vmatpush2.msra.mxu0 0.0
      %2000 = vmatprep.subr.mxu0 0.0
      %2001 = vmatpush2.msra.mxu0 0.0
      %2002 = vmatprep.subr.mxu0 0.0
      %2003 = vmatpush2.msra.mxu0 0.0
      %2004 = vmatprep.subr.mxu0 0.0
      %2005 = vmatpush2.msra.mxu0 0.0
      %2006 = vmatprep.subr.mxu0 0.0
      %2007 = vmatpush2.msra.mxu0 0.0
      %2008 = vmatprep.subr.mxu0 0.0
      %2009 = vmatpush2.msra.mxu0 0.0
      %2010 = vmatprep.subr.mxu0 0.0
      %2011 = vmatpush2.msra.mxu0 0.0
      %2012 = vmatprep.mubr.f32.mxu0 0.0
      %2013 = vmatmul.mubr.f32.gmra.mxu0 %v1943
      %v2014 = vpop.f32.mrf.mxu0
      %v2015 = vadd.f32 %v1940, %v2014
      %v2016 = vpop.f32.mrf.mxu0
      %2017 = vmatprep.mubr.f32.mxu0 0.0
      %2018 = vmatmul.mubr.f32.gmra.mxu0 %v1946
      %v2019 = vpop.f32.mrf.mxu0
      %v2020 = vadd.f32 %v1940, %v2019
      %v2021 = vpop.f32.mrf.mxu0
      %2022 = vdwg.mxu0
      %v2023 = vld [vmem:[%s11] sm:$0xff]
      %v2024 = vld [vmem:[%s11 + $0x8] sm:$0xff]
      %v2025 = vld [vmem:[%s11 + $0x10] sm:$0xff]
      %v2026 = vld [vmem:[%s11 + $0x18] sm:$0xff]
      %v2028 = vsel %vm849, %v1928, 0
      %v2031 = vsel %vm849, %v2015, 0
      %v2034 = vsel %vm849, %v2020, 0
      %2036 = vmatprep.subr.mxu0 0.0
      %2037 = vmatpush1.xpose.msra.mxu0 0.0
      %2038 = vmatprep.subr.mxu0 0.0
      %2039 = vmatpush1.xpose.msra.mxu0 0.0
      %2040 = vmatprep.subr.mxu0 0.0
      %2041 = vmatpush1.xpose.msra.mxu0 0.0
      %2042 = vmatprep.subr.mxu0 0.0
      %2043 = vmatpush1.xpose.msra.mxu0 0.0
      %2044 = vmatprep.subr.mxu0 0.0
      %2045 = vmatpush1.xpose.msra.mxu0 0.0
      %2046 = vmatprep.subr.mxu0 0.0
      %2047 = vmatpush1.xpose.msra.mxu0 0.0
      %2048 = vmatprep.subr.mxu0 0.0
      %2049 = vmatpush1.xpose.msra.mxu0 0.0
      %2050 = vmatprep.subr.mxu0 0.0
      %2051 = vmatpush1.xpose.msra.mxu0 0.0
      %2052 = vmatprep.subr.mxu0 0.0
      %2053 = vmatpush1.xpose.msra.mxu0 0.0
      %2054 = vmatprep.subr.mxu0 0.0
      %2055 = vmatpush1.xpose.msra.mxu0 0.0
      %2056 = vmatprep.subr.mxu0 0.0
      %2057 = vmatpush1.xpose.msra.mxu0 0.0
      %2058 = vmatprep.subr.mxu0 0.0
      %2059 = vmatpush1.xpose.msra.mxu0 0.0
      %2060 = vmatprep.subr.mxu0 0.0
      %2061 = vmatpush1.xpose.msra.mxu0 0.0
      %2062 = vmatprep.subr.mxu0 0.0
      %2063 = vmatpush1.xpose.msra.mxu0 0.0
      %2064 = vmatprep.subr.mxu0 0.0
      %2065 = vmatpush1.xpose.msra.mxu0 %v2034
      %2066 = vmatprep.subr.mxu0 0.0
      %2067 = vmatpush1.xpose.msra.mxu0 %v2031
      %2068 = vmatprep.subr.mxu0 0.0
      %2069 = vmatpush2.xpose.msra.mxu0 0.0
      %2070 = vmatprep.subr.mxu0 0.0
      %2071 = vmatpush2.xpose.msra.mxu0 0.0
      %2072 = vmatprep.subr.mxu0 0.0
      %2073 = vmatpush2.xpose.msra.mxu0 0.0
      %2074 = vmatprep.subr.mxu0 0.0
      %2075 = vmatpush2.xpose.msra.mxu0 0.0
      %2076 = vmatprep.subr.mxu0 0.0
      %2077 = vmatpush2.xpose.msra.mxu0 0.0
      %2078 = vmatprep.subr.mxu0 0.0
      %2079 = vmatpush2.xpose.msra.mxu0 0.0
      %2080 = vmatprep.subr.mxu0 0.0
      %2081 = vmatpush2.xpose.msra.mxu0 0.0
      %2082 = vmatprep.subr.mxu0 0.0
      %2083 = vmatpush2.xpose.msra.mxu0 0.0
      %2084 = vmatprep.subr.mxu0 0.0
      %2085 = vmatpush2.xpose.msra.mxu0 0.0
      %2086 = vmatprep.subr.mxu0 0.0
      %2087 = vmatpush2.xpose.msra.mxu0 0.0
      %2088 = vmatprep.subr.mxu0 0.0
      %2089 = vmatpush2.xpose.msra.mxu0 0.0
      %2090 = vmatprep.subr.mxu0 0.0
      %2091 = vmatpush2.xpose.msra.mxu0 0.0
      %2092 = vmatprep.subr.mxu0 0.0
      %2093 = vmatpush2.xpose.msra.mxu0 0.0
      %2094 = vmatprep.subr.mxu0 0.0
      %2095 = vmatpush2.xpose.msra.mxu0 0.0
      %2096 = vmatprep.subr.mxu0 0.0
      %2097 = vmatpush2.xpose.msra.mxu0 0.0
      %2098 = vmatprep.subr.mxu0 0.0
      %2099 = vmatpush2.xpose.msra.mxu0 0.0
      %2100 = vmatprep.mubr.f32.mxu0 0.0
      %2101 = vmatmul.mubr.f32.gmra.mxu0 %v2028
      %v2102 = vpop.f32.mrf.mxu0
      %v2103 = vadd.f32 0.0, %v2102
      %v2104 = vpop.f32.mrf.mxu0
      %2105 = vdwg.mxu0
      %v2106 = vmul.f32 %v2103, 0.35355338
      %vm2107 = vcmask 130048
      %v2108 = vsel %vm2107, %v2106, -inf
      %2109 = vmax.xlane.f32.xlu0 %v2108
      %v2110 = vpop.xlane.xlu0 %2109
      %v2111 = vsub.f32 %v2106, %v2110
      %v2112 = vmul.f32 %v2111, 1.442695
      %v2113 = vpow.pop %v2112
      %v2114 = vsel %vm2107, %v2113, 0.0
      %2115 = vadd.xlane.f32.xlu0 %v2114
      %v2116 = vpop.xlane.xlu0 %2115
      %v2117 = vrcp.pop %v2116
      %v2118 = vmul.f32 %v2113, %v2117
      %2119 = vrot.lane.b32.xlu0 %v2015, 96
      %v2120 = vpop.permute.xlu0 %2119
      %2121 = vrot.lane.b32.xlu0 %v2020, 96
      %v2122 = vpop.permute.xlu0 %2121
      %v2126 = vsel %vm2107, %v2118, 0
      %2128 = vmatprep.subr.mxu0 0.0
      %2129 = vmatpush1.msra.mxu0 0.0
      %2130 = vmatprep.subr.mxu0 0.0
      %2131 = vmatpush1.msra.mxu0 0.0
      %2132 = vmatprep.subr.mxu0 0.0
      %2133 = vmatpush1.msra.mxu0 0.0
      %2134 = vmatprep.subr.mxu0 0.0
      %2135 = vmatpush1.msra.mxu0 0.0
      %2136 = vmatprep.subr.mxu0 0.0
      %2137 = vmatpush1.msra.mxu0 0.0
      %2138 = vmatprep.subr.mxu0 0.0
      %2139 = vmatpush1.msra.mxu0 0.0
      %2140 = vmatprep.subr.mxu0 0.0
      %2141 = vmatpush1.msra.mxu0 0.0
      %2142 = vmatprep.subr.mxu0 0.0
      %2143 = vmatpush1.msra.mxu0 0.0
      %2144 = vmatprep.subr.mxu0 0.0
      %2145 = vmatpush1.msra.mxu0 0.0
      %2146 = vmatprep.subr.mxu0 0.0
      %2147 = vmatpush1.msra.mxu0 0.0
      %2148 = vmatprep.subr.mxu0 0.0
      %2149 = vmatpush1.msra.mxu0 0.0
      %2150 = vmatprep.subr.mxu0 0.0
      %2151 = vmatpush1.msra.mxu0 0.0
      %2152 = vmatprep.subr.mxu0 0.0
      %2153 = vmatpush1.msra.mxu0 0.0
      %2154 = vmatprep.subr.mxu0 0.0
      %2155 = vmatpush1.msra.mxu0 0.0
      %2156 = vmatprep.subr.mxu0 0.0
      %2157 = vmatpush1.msra.mxu0 %v2122
      %2158 = vmatprep.subr.mxu0 0.0
      %2159 = vmatpush1.msra.mxu0 %v2120
      %2160 = vmatprep.subr.mxu0 0.0
      %2161 = vmatpush2.msra.mxu0 0.0
      %2162 = vmatprep.subr.mxu0 0.0
      %2163 = vmatpush2.msra.mxu0 0.0
      %2164 = vmatprep.subr.mxu0 0.0
      %2165 = vmatpush2.msra.mxu0 0.0
      %2166 = vmatprep.subr.mxu0 0.0
      %2167 = vmatpush2.msra.mxu0 0.0
      %2168 = vmatprep.subr.mxu0 0.0
      %2169 = vmatpush2.msra.mxu0 0.0
      %2170 = vmatprep.subr.mxu0 0.0
      %2171 = vmatpush2.msra.mxu0 0.0
      %2172 = vmatprep.subr.mxu0 0.0
      %2173 = vmatpush2.msra.mxu0 0.0
      %2174 = vmatprep.subr.mxu0 0.0
      %2175 = vmatpush2.msra.mxu0 0.0
      %2176 = vmatprep.subr.mxu0 0.0
      %2177 = vmatpush2.msra.mxu0 0.0
      %2178 = vmatprep.subr.mxu0 0.0
      %2179 = vmatpush2.msra.mxu0 0.0
      %2180 = vmatprep.subr.mxu0 0.0
      %2181 = vmatpush2.msra.mxu0 0.0
      %2182 = vmatprep.subr.mxu0 0.0
      %2183 = vmatpush2.msra.mxu0 0.0
      %2184 = vmatprep.subr.mxu0 0.0
      %2185 = vmatpush2.msra.mxu0 0.0
      %2186 = vmatprep.subr.mxu0 0.0
      %2187 = vmatpush2.msra.mxu0 0.0
      %2188 = vmatprep.subr.mxu0 0.0
      %2189 = vmatpush2.msra.mxu0 0.0
      %2190 = vmatprep.subr.mxu0 0.0
      %2191 = vmatpush2.msra.mxu0 0.0
      %2192 = vmatprep.mubr.f32.mxu0 0.0
      %2193 = vmatmul.mubr.f32.gmra.mxu0 %v2126
      %v2194 = vpop.f32.mrf.mxu0
      %v2195 = vadd.f32 0.0, %v2194
      %v2196 = vpop.f32.mrf.mxu0
      %2197 = vdwg.mxu0
      %2198 = vrot.lane.b32.xlu0 %v1928, 120
      %v2199 = vpop.permute.xlu0 %2198
      %2200 = vrot.lane.b32.xlu0 %v2015, 120
      %v2201 = vpop.permute.xlu0 %2200
      %2202 = vrot.lane.b32.xlu0 %v2020, 120
      %v2203 = vpop.permute.xlu0 %2202
      %v2204 = vsel %vm849, %v2199, 0
      %v2206 = vsel %vm849, %v2201, 0
      %v2208 = vsel %vm849, %v2203, 0
      %2210 = vmatprep.subr.mxu0 0.0
      %2211 = vmatpush1.xpose.msra.mxu0 0.0
      %2212 = vmatprep.subr.mxu0 0.0
      %2213 = vmatpush1.xpose.msra.mxu0 0.0
      %2214 = vmatprep.subr.mxu0 0.0
      %2215 = vmatpush1.xpose.msra.mxu0 0.0
      %2216 = vmatprep.subr.mxu0 0.0
      %2217 = vmatpush1.xpose.msra.mxu0 0.0
      %2218 = vmatprep.subr.mxu0 0.0
      %2219 = vmatpush1.xpose.msra.mxu0 0.0
      %2220 = vmatprep.subr.mxu0 0.0
      %2221 = vmatpush1.xpose.msra.mxu0 0.0
      %2222 = vmatprep.subr.mxu0 0.0
      %2223 = vmatpush1.xpose.msra.mxu0 0.0
      %2224 = vmatprep.subr.mxu0 0.0
      %2225 = vmatpush1.xpose.msra.mxu0 0.0
      %2226 = vmatprep.subr.mxu0 0.0
      %2227 = vmatpush1.xpose.msra.mxu0 0.0
      %2228 = vmatprep.subr.mxu0 0.0
      %2229 = vmatpush1.xpose.msra.mxu0 0.0
      %2230 = vmatprep.subr.mxu0 0.0
      %2231 = vmatpush1.xpose.msra.mxu0 0.0
      %2232 = vmatprep.subr.mxu0 0.0
      %2233 = vmatpush1.xpose.msra.mxu0 0.0
      %2234 = vmatprep.subr.mxu0 0.0
      %2235 = vmatpush1.xpose.msra.mxu0 0.0
      %2236 = vmatprep.subr.mxu0 0.0
      %2237 = vmatpush1.xpose.msra.mxu0 0.0
      %2238 = vmatprep.subr.mxu0 0.0
      %2239 = vmatpush1.xpose.msra.mxu0 %v2208
      %2240 = vmatprep.subr.mxu0 0.0
      %2241 = vmatpush1.xpose.msra.mxu0 %v2206
      %2242 = vmatprep.subr.mxu0 0.0
      %2243 = vmatpush2.xpose.msra.mxu0 0.0
      %2244 = vmatprep.subr.mxu0 0.0
      %2245 = vmatpush2.xpose.msra.mxu0 0.0
      %2246 = vmatprep.subr.mxu0 0.0
      %2247 = vmatpush2.xpose.msra.mxu0 0.0
      %2248 = vmatprep.subr.mxu0 0.0
      %2249 = vmatpush2.xpose.msra.mxu0 0.0
      %2250 = vmatprep.subr.mxu0 0.0
      %2251 = vmatpush2.xpose.msra.mxu0 0.0
      %2252 = vmatprep.subr.mxu0 0.0
      %2253 = vmatpush2.xpose.msra.mxu0 0.0
      %2254 = vmatprep.subr.mxu0 0.0
      %2255 = vmatpush2.xpose.msra.mxu0 0.0
      %2256 = vmatprep.subr.mxu0 0.0
      %2257 = vmatpush2.xpose.msra.mxu0 0.0
      %2258 = vmatprep.subr.mxu0 0.0
      %2259 = vmatpush2.xpose.msra.mxu0 0.0
      %2260 = vmatprep.subr.mxu0 0.0
      %2261 = vmatpush2.xpose.msra.mxu0 0.0
      %2262 = vmatprep.subr.mxu0 0.0
      %2263 = vmatpush2.xpose.msra.mxu0 0.0
      %2264 = vmatprep.subr.mxu0 0.0
      %2265 = vmatpush2.xpose.msra.mxu0 0.0
      %2266 = vmatprep.subr.mxu0 0.0
      %2267 = vmatpush2.xpose.msra.mxu0 0.0
      %2268 = vmatprep.subr.mxu0 0.0
      %2269 = vmatpush2.xpose.msra.mxu0 0.0
      %2270 = vmatprep.subr.mxu0 0.0
      %2271 = vmatpush2.xpose.msra.mxu0 0.0
      %2272 = vmatprep.subr.mxu0 0.0
      %2273 = vmatpush2.xpose.msra.mxu0 0.0
      %2274 = vmatprep.mubr.f32.mxu0 0.0
      %2275 = vmatmul.mubr.f32.gmra.mxu0 %v2204
      %v2276 = vpop.f32.mrf.mxu0
      %v2277 = vadd.f32 0.0, %v2276
      %v2278 = vpop.f32.mrf.mxu0
      %2279 = vdwg.mxu0
      %v2280 = vmul.f32 %v2277, 0.35355338
      %v2281 = vsel %vm2107, %v2280, -inf
      %2282 = vmax.xlane.f32.xlu0 %v2281
      %v2283 = vpop.xlane.xlu0 %2282
      %v2284 = vsub.f32 %v2280, %v2283
      %v2285 = vmul.f32 %v2284, 1.442695
      %v2286 = vpow.pop %v2285
      %v2287 = vsel %vm2107, %v2286, 0.0
      %2288 = vadd.xlane.f32.xlu0 %v2287
      %v2289 = vpop.xlane.xlu0 %2288
      %v2290 = vrcp.pop %v2289
      %v2291 = vmul.f32 %v2286, %v2290
      %2292 = vrot.lane.b32.xlu0 %v2015, 88
      %v2293 = vpop.permute.xlu0 %2292
      %2294 = vrot.lane.b32.xlu0 %v2020, 88
      %v2295 = vpop.permute.xlu0 %2294
      %v2299 = vsel %vm2107, %v2291, 0
      %2301 = vmatprep.subr.mxu0 0.0
      %2302 = vmatpush1.msra.mxu0 0.0
      %2303 = vmatprep.subr.mxu0 0.0
      %2304 = vmatpush1.msra.mxu0 0.0
      %2305 = vmatprep.subr.mxu0 0.0
      %2306 = vmatpush1.msra.mxu0 0.0
      %2307 = vmatprep.subr.mxu0 0.0
      %2308 = vmatpush1.msra.mxu0 0.0
      %2309 = vmatprep.subr.mxu0 0.0
      %2310 = vmatpush1.msra.mxu0 0.0
      %2311 = vmatprep.subr.mxu0 0.0
      %2312 = vmatpush1.msra.mxu0 0.0
      %2313 = vmatprep.subr.mxu0 0.0
      %2314 = vmatpush1.msra.mxu0 0.0
      %2315 = vmatprep.subr.mxu0 0.0
      %2316 = vmatpush1.msra.mxu0 0.0
      %2317 = vmatprep.subr.mxu0 0.0
      %2318 = vmatpush1.msra.mxu0 0.0
      %2319 = vmatprep.subr.mxu0 0.0
      %2320 = vmatpush1.msra.mxu0 0.0
      %2321 = vmatprep.subr.mxu0 0.0
      %2322 = vmatpush1.msra.mxu0 0.0
      %2323 = vmatprep.subr.mxu0 0.0
      %2324 = vmatpush1.msra.mxu0 0.0
      %2325 = vmatprep.subr.mxu0 0.0
      %2326 = vmatpush1.msra.mxu0 0.0
      %2327 = vmatprep.subr.mxu0 0.0
      %2328 = vmatpush1.msra.mxu0 0.0
      %2329 = vmatprep.subr.mxu0 0.0
      %2330 = vmatpush1.msra.mxu0 %v2295
      %2331 = vmatprep.subr.mxu0 0.0
      %2332 = vmatpush1.msra.mxu0 %v2293
      %2333 = vmatprep.subr.mxu0 0.0
      %2334 = vmatpush2.msra.mxu0 0.0
      %2335 = vmatprep.subr.mxu0 0.0
      %2336 = vmatpush2.msra.mxu0 0.0
      %2337 = vmatprep.subr.mxu0 0.0
      %2338 = vmatpush2.msra.mxu0 0.0
      %2339 = vmatprep.subr.mxu0 0.0
      %2340 = vmatpush2.msra.mxu0 0.0
      %2341 = vmatprep.subr.mxu0 0.0
      %2342 = vmatpush2.msra.mxu0 0.0
      %2343 = vmatprep.subr.mxu0 0.0
      %2344 = vmatpush2.msra.mxu0 0.0
      %2345 = vmatprep.subr.mxu0 0.0
      %2346 = vmatpush2.msra.mxu0 0.0
      %2347 = vmatprep.subr.mxu0 0.0
      %2348 = vmatpush2.msra.mxu0 0.0
      %2349 = vmatprep.subr.mxu0 0.0
      %2350 = vmatpush2.msra.mxu0 0.0
      %2351 = vmatprep.subr.mxu0 0.0
      %2352 = vmatpush2.msra.mxu0 0.0
      %2353 = vmatprep.subr.mxu0 0.0
      %2354 = vmatpush2.msra.mxu0 0.0
      %2355 = vmatprep.subr.mxu0 0.0
      %2356 = vmatpush2.msra.mxu0 0.0
      %2357 = vmatprep.subr.mxu0 0.0
      %2358 = vmatpush2.msra.mxu0 0.0
      %2359 = vmatprep.subr.mxu0 0.0
      %2360 = vmatpush2.msra.mxu0 0.0
      %2361 = vmatprep.subr.mxu0 0.0
      %2362 = vmatpush2.msra.mxu0 0.0
      %2363 = vmatprep.subr.mxu0 0.0
      %2364 = vmatpush2.msra.mxu0 0.0
      %2365 = vmatprep.mubr.f32.mxu0 0.0
      %2366 = vmatmul.mubr.f32.gmra.mxu0 %v2299
      %v2367 = vpop.f32.mrf.mxu0
      %v2368 = vadd.f32 0.0, %v2367
      %v2369 = vpop.f32.mrf.mxu0
      %2370 = vdwg.mxu0
      %v2372 = vsel %vm849, %v2368, 0
      %2374 = vmatprep.subr.mxu0 0.0
      %2375 = vmatpush1.msra.mxu0 0.0
      %2376 = vmatprep.subr.mxu0 0.0
      %2377 = vmatpush1.msra.mxu0 0.0
      %2378 = vmatprep.subr.mxu0 0.0
      %2379 = vmatpush1.msra.mxu0 0.0
      %2380 = vmatprep.subr.mxu0 0.0
      %2381 = vmatpush1.msra.mxu0 0.0
      %2382 = vmatprep.subr.mxu0 0.0
      %2383 = vmatpush1.msra.mxu0 0.0
      %2384 = vmatprep.subr.mxu0 0.0
      %2385 = vmatpush1.msra.mxu0 0.0
      %2386 = vmatprep.subr.mxu0 0.0
      %2387 = vmatpush1.msra.mxu0 0.0
      %2388 = vmatprep.subr.mxu0 0.0
      %2389 = vmatpush1.msra.mxu0 0.0
      %2390 = vmatprep.subr.mxu0 0.0
      %2391 = vmatpush1.msra.mxu0 0.0
      %2392 = vmatprep.subr.mxu0 0.0
      %2393 = vmatpush1.msra.mxu0 0.0
      %2394 = vmatprep.subr.mxu0 0.0
      %2395 = vmatpush1.msra.mxu0 0.0
      %2396 = vmatprep.subr.mxu0 0.0
      %2397 = vmatpush1.msra.mxu0 0.0
      %2398 = vmatprep.subr.mxu0 0.0
      %2399 = vmatpush1.msra.mxu0 0.0
      %2400 = vmatprep.subr.mxu0 0.0
      %2401 = vmatpush1.msra.mxu0 0.0
      %2402 = vmatprep.subr.mxu0 0.0
      %2403 = vmatpush1.msra.mxu0 0.0
      %2404 = vmatprep.subr.mxu0 0.0
      %2405 = vmatpush1.msra.mxu0 %v2024
      %2406 = vmatprep.subr.mxu0 0.0
      %2407 = vmatpush2.msra.mxu0 0.0
      %2408 = vmatprep.subr.mxu0 0.0
      %2409 = vmatpush2.msra.mxu0 0.0
      %2410 = vmatprep.subr.mxu0 0.0
      %2411 = vmatpush2.msra.mxu0 0.0
      %2412 = vmatprep.subr.mxu0 0.0
      %2413 = vmatpush2.msra.mxu0 0.0
      %2414 = vmatprep.subr.mxu0 0.0
      %2415 = vmatpush2.msra.mxu0 0.0
      %2416 = vmatprep.subr.mxu0 0.0
      %2417 = vmatpush2.msra.mxu0 0.0
      %2418 = vmatprep.subr.mxu0 0.0
      %2419 = vmatpush2.msra.mxu0 0.0
      %2420 = vmatprep.subr.mxu0 0.0
      %2421 = vmatpush2.msra.mxu0 0.0
      %2422 = vmatprep.subr.mxu0 0.0
      %2423 = vmatpush2.msra.mxu0 0.0
      %2424 = vmatprep.subr.mxu0 0.0
      %2425 = vmatpush2.msra.mxu0 0.0
      %2426 = vmatprep.subr.mxu0 0.0
      %2427 = vmatpush2.msra.mxu0 0.0
      %2428 = vmatprep.subr.mxu0 0.0
      %2429 = vmatpush2.msra.mxu0 0.0
      %2430 = vmatprep.subr.mxu0 0.0
      %2431 = vmatpush2.msra.mxu0 0.0
      %2432 = vmatprep.subr.mxu0 0.0
      %2433 = vmatpush2.msra.mxu0 0.0
      %2434 = vmatprep.subr.mxu0 0.0
      %2435 = vmatpush2.msra.mxu0 0.0
      %2436 = vmatprep.subr.mxu0 0.0
      %2437 = vmatpush2.msra.mxu0 0.0
      %2438 = vmatprep.mubr.f32.mxu0 0.0
      %2439 = vmatmul.mubr.f32.gmra.mxu0 %v2372
      %v2440 = vpop.f32.mrf.mxu0
      %v2441 = vadd.f32 0.0, %v2440
      %v2442 = vpop.f32.mrf.mxu0
      %2443 = vdwg.mxu0
      %v2445 = vsel %vm849, %v2195, 0
      %2447 = vmatprep.subr.mxu0 0.0
      %2448 = vmatpush1.msra.mxu0 0.0
      %2449 = vmatprep.subr.mxu0 0.0
      %2450 = vmatpush1.msra.mxu0 0.0
      %2451 = vmatprep.subr.mxu0 0.0
      %2452 = vmatpush1.msra.mxu0 0.0
      %2453 = vmatprep.subr.mxu0 0.0
      %2454 = vmatpush1.msra.mxu0 0.0
      %2455 = vmatprep.subr.mxu0 0.0
      %2456 = vmatpush1.msra.mxu0 0.0
      %2457 = vmatprep.subr.mxu0 0.0
      %2458 = vmatpush1.msra.mxu0 0.0
      %2459 = vmatprep.subr.mxu0 0.0
      %2460 = vmatpush1.msra.mxu0 0.0
      %2461 = vmatprep.subr.mxu0 0.0
      %2462 = vmatpush1.msra.mxu0 0.0
      %2463 = vmatprep.subr.mxu0 0.0
      %2464 = vmatpush1.msra.mxu0 0.0
      %2465 = vmatprep.subr.mxu0 0.0
      %2466 = vmatpush1.msra.mxu0 0.0
      %2467 = vmatprep.subr.mxu0 0.0
      %2468 = vmatpush1.msra.mxu0 0.0
      %2469 = vmatprep.subr.mxu0 0.0
      %2470 = vmatpush1.msra.mxu0 0.0
      %2471 = vmatprep.subr.mxu0 0.0
      %2472 = vmatpush1.msra.mxu0 0.0
      %2473 = vmatprep.subr.mxu0 0.0
      %2474 = vmatpush1.msra.mxu0 0.0
      %2475 = vmatprep.subr.mxu0 0.0
      %2476 = vmatpush1.msra.mxu0 0.0
      %2477 = vmatprep.subr.mxu0 0.0
      %2478 = vmatpush1.msra.mxu0 %v2023
      %2479 = vmatprep.subr.mxu0 0.0
      %2480 = vmatpush2.msra.mxu0 0.0
      %2481 = vmatprep.subr.mxu0 0.0
      %2482 = vmatpush2.msra.mxu0 0.0
      %2483 = vmatprep.subr.mxu0 0.0
      %2484 = vmatpush2.msra.mxu0 0.0
      %2485 = vmatprep.subr.mxu0 0.0
      %2486 = vmatpush2.msra.mxu0 0.0
      %2487 = vmatprep.subr.mxu0 0.0
      %2488 = vmatpush2.msra.mxu0 0.0
      %2489 = vmatprep.subr.mxu0 0.0
      %2490 = vmatpush2.msra.mxu0 0.0
      %2491 = vmatprep.subr.mxu0 0.0
      %2492 = vmatpush2.msra.mxu0 0.0
      %2493 = vmatprep.subr.mxu0 0.0
      %2494 = vmatpush2.msra.mxu0 0.0
      %2495 = vmatprep.subr.mxu0 0.0
      %2496 = vmatpush2.msra.mxu0 0.0
      %2497 = vmatprep.subr.mxu0 0.0
      %2498 = vmatpush2.msra.mxu0 0.0
      %2499 = vmatprep.subr.mxu0 0.0
      %2500 = vmatpush2.msra.mxu0 0.0
      %2501 = vmatprep.subr.mxu0 0.0
      %2502 = vmatpush2.msra.mxu0 0.0
      %2503 = vmatprep.subr.mxu0 0.0
      %2504 = vmatpush2.msra.mxu0 0.0
      %2505 = vmatprep.subr.mxu0 0.0
      %2506 = vmatpush2.msra.mxu0 0.0
      %2507 = vmatprep.subr.mxu0 0.0
      %2508 = vmatpush2.msra.mxu0 0.0
      %2509 = vmatprep.subr.mxu0 0.0
      %2510 = vmatpush2.msra.mxu0 0.0
      %2511 = vmatprep.mubr.f32.mxu0 0.0
      %2512 = vmatmul.mubr.f32.gmra.mxu0 %v2445
      %v2513 = vpop.f32.mrf.mxu0
      %v2514 = vadd.f32 %v2441, %v2513
      %v2515 = vpop.f32.mrf.mxu0
      %2516 = vdwg.mxu0
      %2517 = vrot.lane.b32.xlu0 %v1928, 112
      %v2518 = vpop.permute.xlu0 %2517
      %2519 = vrot.lane.b32.xlu0 %v2015, 112
      %v2520 = vpop.permute.xlu0 %2519
      %2521 = vrot.lane.b32.xlu0 %v2020, 112
      %v2522 = vpop.permute.xlu0 %2521
      %v2523 = vsel %vm849, %v2518, 0
      %v2525 = vsel %vm849, %v2520, 0
      %v2527 = vsel %vm849, %v2522, 0
      %2529 = vmatprep.subr.mxu0 0.0
      %2530 = vmatpush1.xpose.msra.mxu0 0.0
      %2531 = vmatprep.subr.mxu0 0.0
      %2532 = vmatpush1.xpose.msra.mxu0 0.0
      %2533 = vmatprep.subr.mxu0 0.0
      %2534 = vmatpush1.xpose.msra.mxu0 0.0
      %2535 = vmatprep.subr.mxu0 0.0
      %2536 = vmatpush1.xpose.msra.mxu0 0.0
      %2537 = vmatprep.subr.mxu0 0.0
      %2538 = vmatpush1.xpose.msra.mxu0 0.0
      %2539 = vmatprep.subr.mxu0 0.0
      %2540 = vmatpush1.xpose.msra.mxu0 0.0
      %2541 = vmatprep.subr.mxu0 0.0
      %2542 = vmatpush1.xpose.msra.mxu0 0.0
      %2543 = vmatprep.subr.mxu0 0.0
      %2544 = vmatpush1.xpose.msra.mxu0 0.0
      %2545 = vmatprep.subr.mxu0 0.0
      %2546 = vmatpush1.xpose.msra.mxu0 0.0
      %2547 = vmatprep.subr.mxu0 0.0
      %2548 = vmatpush1.xpose.msra.mxu0 0.0
      %2549 = vmatprep.subr.mxu0 0.0
      %2550 = vmatpush1.xpose.msra.mxu0 0.0
      %2551 = vmatprep.subr.mxu0 0.0
      %2552 = vmatpush1.xpose.msra.mxu0 0.0
      %2553 = vmatprep.subr.mxu0 0.0
      %2554 = vmatpush1.xpose.msra.mxu0 0.0
      %2555 = vmatprep.subr.mxu0 0.0
      %2556 = vmatpush1.xpose.msra.mxu0 0.0
      %2557 = vmatprep.subr.mxu0 0.0
      %2558 = vmatpush1.xpose.msra.mxu0 %v2527
      %2559 = vmatprep.subr.mxu0 0.0
      %2560 = vmatpush1.xpose.msra.mxu0 %v2525
      %2561 = vmatprep.subr.mxu0 0.0
      %2562 = vmatpush2.xpose.msra.mxu0 0.0
      %2563 = vmatprep.subr.mxu0 0.0
      %2564 = vmatpush2.xpose.msra.mxu0 0.0
      %2565 = vmatprep.subr.mxu0 0.0
      %2566 = vmatpush2.xpose.msra.mxu0 0.0
      %2567 = vmatprep.subr.mxu0 0.0
      %2568 = vmatpush2.xpose.msra.mxu0 0.0
      %2569 = vmatprep.subr.mxu0 0.0
      %2570 = vmatpush2.xpose.msra.mxu0 0.0
      %2571 = vmatprep.subr.mxu0 0.0
      %2572 = vmatpush2.xpose.msra.mxu0 0.0
      %2573 = vmatprep.subr.mxu0 0.0
      %2574 = vmatpush2.xpose.msra.mxu0 0.0
      %2575 = vmatprep.subr.mxu0 0.0
      %2576 = vmatpush2.xpose.msra.mxu0 0.0
      %2577 = vmatprep.subr.mxu0 0.0
      %2578 = vmatpush2.xpose.msra.mxu0 0.0
      %2579 = vmatprep.subr.mxu0 0.0
      %2580 = vmatpush2.xpose.msra.mxu0 0.0
      %2581 = vmatprep.subr.mxu0 0.0
      %2582 = vmatpush2.xpose.msra.mxu0 0.0
      %2583 = vmatprep.subr.mxu0 0.0
      %2584 = vmatpush2.xpose.msra.mxu0 0.0
      %2585 = vmatprep.subr.mxu0 0.0
      %2586 = vmatpush2.xpose.msra.mxu0 0.0
      %2587 = vmatprep.subr.mxu0 0.0
      %2588 = vmatpush2.xpose.msra.mxu0 0.0
      %2589 = vmatprep.subr.mxu0 0.0
      %2590 = vmatpush2.xpose.msra.mxu0 0.0
      %2591 = vmatprep.subr.mxu0 0.0
      %2592 = vmatpush2.xpose.msra.mxu0 0.0
      %2593 = vmatprep.mubr.f32.mxu0 0.0
      %2594 = vmatmul.mubr.f32.gmra.mxu0 %v2523
      %v2595 = vpop.f32.mrf.mxu0
      %v2596 = vadd.f32 0.0, %v2595
      %v2597 = vpop.f32.mrf.mxu0
      %2598 = vdwg.mxu0
      %v2599 = vmul.f32 %v2596, 0.35355338
      %v2600 = vsel %vm2107, %v2599, -inf
      %2601 = vmax.xlane.f32.xlu0 %v2600
      %v2602 = vpop.xlane.xlu0 %2601
      %v2603 = vsub.f32 %v2599, %v2602
      %v2604 = vmul.f32 %v2603, 1.442695
      %v2605 = vpow.pop %v2604
      %v2606 = vsel %vm2107, %v2605, 0.0
      %2607 = vadd.xlane.f32.xlu0 %v2606
      %v2608 = vpop.xlane.xlu0 %2607
      %v2609 = vrcp.pop %v2608
      %v2610 = vmul.f32 %v2605, %v2609
      %2611 = vrot.lane.b32.xlu0 %v2015, 80
      %v2612 = vpop.permute.xlu0 %2611
      %2613 = vrot.lane.b32.xlu0 %v2020, 80
      %v2614 = vpop.permute.xlu0 %2613
      %v2618 = vsel %vm2107, %v2610, 0
      %2620 = vmatprep.subr.mxu0 0.0
      %2621 = vmatpush1.msra.mxu0 0.0
      %2622 = vmatprep.subr.mxu0 0.0
      %2623 = vmatpush1.msra.mxu0 0.0
      %2624 = vmatprep.subr.mxu0 0.0
      %2625 = vmatpush1.msra.mxu0 0.0
      %2626 = vmatprep.subr.mxu0 0.0
      %2627 = vmatpush1.msra.mxu0 0.0
      %2628 = vmatprep.subr.mxu0 0.0
      %2629 = vmatpush1.msra.mxu0 0.0
      %2630 = vmatprep.subr.mxu0 0.0
      %2631 = vmatpush1.msra.mxu0 0.0
      %2632 = vmatprep.subr.mxu0 0.0
      %2633 = vmatpush1.msra.mxu0 0.0
      %2634 = vmatprep.subr.mxu0 0.0
      %2635 = vmatpush1.msra.mxu0 0.0
      %2636 = vmatprep.subr.mxu0 0.0
      %2637 = vmatpush1.msra.mxu0 0.0
      %2638 = vmatprep.subr.mxu0 0.0
      %2639 = vmatpush1.msra.mxu0 0.0
      %2640 = vmatprep.subr.mxu0 0.0
      %2641 = vmatpush1.msra.mxu0 0.0
      %2642 = vmatprep.subr.mxu0 0.0
      %2643 = vmatpush1.msra.mxu0 0.0
      %2644 = vmatprep.subr.mxu0 0.0
      %2645 = vmatpush1.msra.mxu0 0.0
      %2646 = vmatprep.subr.mxu0 0.0
      %2647 = vmatpush1.msra.mxu0 0.0
      %2648 = vmatprep.subr.mxu0 0.0
      %2649 = vmatpush1.msra.mxu0 %v2614
      %2650 = vmatprep.subr.mxu0 0.0
      %2651 = vmatpush1.msra.mxu0 %v2612
      %2652 = vmatprep.subr.mxu0 0.0
      %2653 = vmatpush2.msra.mxu0 0.0
      %2654 = vmatprep.subr.mxu0 0.0
      %2655 = vmatpush2.msra.mxu0 0.0
      %2656 = vmatprep.subr.mxu0 0.0
      %2657 = vmatpush2.msra.mxu0 0.0
      %2658 = vmatprep.subr.mxu0 0.0
      %2659 = vmatpush2.msra.mxu0 0.0
      %2660 = vmatprep.subr.mxu0 0.0
      %2661 = vmatpush2.msra.mxu0 0.0
      %2662 = vmatprep.subr.mxu0 0.0
      %2663 = vmatpush2.msra.mxu0 0.0
      %2664 = vmatprep.subr.mxu0 0.0
      %2665 = vmatpush2.msra.mxu0 0.0
      %2666 = vmatprep.subr.mxu0 0.0
      %2667 = vmatpush2.msra.mxu0 0.0
      %2668 = vmatprep.subr.mxu0 0.0
      %2669 = vmatpush2.msra.mxu0 0.0
      %2670 = vmatprep.subr.mxu0 0.0
      %2671 = vmatpush2.msra.mxu0 0.0
      %2672 = vmatprep.subr.mxu0 0.0
      %2673 = vmatpush2.msra.mxu0 0.0
      %2674 = vmatprep.subr.mxu0 0.0
      %2675 = vmatpush2.msra.mxu0 0.0
      %2676 = vmatprep.subr.mxu0 0.0
      %2677 = vmatpush2.msra.mxu0 0.0
      %2678 = vmatprep.subr.mxu0 0.0
      %2679 = vmatpush2.msra.mxu0 0.0
      %2680 = vmatprep.subr.mxu0 0.0
      %2681 = vmatpush2.msra.mxu0 0.0
      %2682 = vmatprep.subr.mxu0 0.0
      %2683 = vmatpush2.msra.mxu0 0.0
      %2684 = vmatprep.mubr.f32.mxu0 0.0
      %2685 = vmatmul.mubr.f32.gmra.mxu0 %v2618
      %v2686 = vpop.f32.mrf.mxu0
      %v2687 = vadd.f32 0.0, %v2686
      %v2688 = vpop.f32.mrf.mxu0
      %2689 = vdwg.mxu0
      %v2691 = vsel %vm849, %v2687, 0
      %2693 = vmatprep.subr.mxu0 0.0
      %2694 = vmatpush1.msra.mxu0 0.0
      %2695 = vmatprep.subr.mxu0 0.0
      %2696 = vmatpush1.msra.mxu0 0.0
      %2697 = vmatprep.subr.mxu0 0.0
      %2698 = vmatpush1.msra.mxu0 0.0
      %2699 = vmatprep.subr.mxu0 0.0
      %2700 = vmatpush1.msra.mxu0 0.0
      %2701 = vmatprep.subr.mxu0 0.0
      %2702 = vmatpush1.msra.mxu0 0.0
      %2703 = vmatprep.subr.mxu0 0.0
      %2704 = vmatpush1.msra.mxu0 0.0
      %2705 = vmatprep.subr.mxu0 0.0
      %2706 = vmatpush1.msra.mxu0 0.0
      %2707 = vmatprep.subr.mxu0 0.0
      %2708 = vmatpush1.msra.mxu0 0.0
      %2709 = vmatprep.subr.mxu0 0.0
      %2710 = vmatpush1.msra.mxu0 0.0
      %2711 = vmatprep.subr.mxu0 0.0
      %2712 = vmatpush1.msra.mxu0 0.0
      %2713 = vmatprep.subr.mxu0 0.0
      %2714 = vmatpush1.msra.mxu0 0.0
      %2715 = vmatprep.subr.mxu0 0.0
      %2716 = vmatpush1.msra.mxu0 0.0
      %2717 = vmatprep.subr.mxu0 0.0
      %2718 = vmatpush1.msra.mxu0 0.0
      %2719 = vmatprep.subr.mxu0 0.0
      %2720 = vmatpush1.msra.mxu0 0.0
      %2721 = vmatprep.subr.mxu0 0.0
      %2722 = vmatpush1.msra.mxu0 0.0
      %2723 = vmatprep.subr.mxu0 0.0
      %2724 = vmatpush1.msra.mxu0 %v2025
      %2725 = vmatprep.subr.mxu0 0.0
      %2726 = vmatpush2.msra.mxu0 0.0
      %2727 = vmatprep.subr.mxu0 0.0
      %2728 = vmatpush2.msra.mxu0 0.0
      %2729 = vmatprep.subr.mxu0 0.0
      %2730 = vmatpush2.msra.mxu0 0.0
      %2731 = vmatprep.subr.mxu0 0.0
      %2732 = vmatpush2.msra.mxu0 0.0
      %2733 = vmatprep.subr.mxu0 0.0
      %2734 = vmatpush2.msra.mxu0 0.0
      %2735 = vmatprep.subr.mxu0 0.0
      %2736 = vmatpush2.msra.mxu0 0.0
      %2737 = vmatprep.subr.mxu0 0.0
      %2738 = vmatpush2.msra.mxu0 0.0
      %2739 = vmatprep.subr.mxu0 0.0
      %2740 = vmatpush2.msra.mxu0 0.0
      %2741 = vmatprep.subr.mxu0 0.0
      %2742 = vmatpush2.msra.mxu0 0.0
      %2743 = vmatprep.subr.mxu0 0.0
      %2744 = vmatpush2.msra.mxu0 0.0
      %2745 = vmatprep.subr.mxu0 0.0
      %2746 = vmatpush2.msra.mxu0 0.0
      %2747 = vmatprep.subr.mxu0 0.0
      %2748 = vmatpush2.msra.mxu0 0.0
      %2749 = vmatprep.subr.mxu0 0.0
      %2750 = vmatpush2.msra.mxu0 0.0
      %2751 = vmatprep.subr.mxu0 0.0
      %2752 = vmatpush2.msra.mxu0 0.0
      %2753 = vmatprep.subr.mxu0 0.0
      %2754 = vmatpush2.msra.mxu0 0.0
      %2755 = vmatprep.subr.mxu0 0.0
      %2756 = vmatpush2.msra.mxu0 0.0
      %2757 = vmatprep.mubr.f32.mxu0 0.0
      %2758 = vmatmul.mubr.f32.gmra.mxu0 %v2691
      %v2759 = vpop.f32.mrf.mxu0
      %v2760 = vadd.f32 0.0, %v2759
      %v2761 = vpop.f32.mrf.mxu0
      %2762 = vdwg.mxu0
      %v2763 = vadd.f32 %v2514, %v2760
      %2764 = vrot.lane.b32.xlu0 %v1928, 104
      %v2765 = vpop.permute.xlu0 %2764
      %2766 = vrot.lane.b32.xlu0 %v2015, 104
      %v2767 = vpop.permute.xlu0 %2766
      %2768 = vrot.lane.b32.xlu0 %v2020, 104
      %v2769 = vpop.permute.xlu0 %2768
      %v2770 = vsel %vm849, %v2765, 0
      %v2772 = vsel %vm849, %v2767, 0
      %v2774 = vsel %vm849, %v2769, 0
      %2776 = vmatprep.subr.mxu0 0.0
      %2777 = vmatpush1.xpose.msra.mxu0 0.0
      %2778 = vmatprep.subr.mxu0 0.0
      %2779 = vmatpush1.xpose.msra.mxu0 0.0
      %2780 = vmatprep.subr.mxu0 0.0
      %2781 = vmatpush1.xpose.msra.mxu0 0.0
      %2782 = vmatprep.subr.mxu0 0.0
      %2783 = vmatpush1.xpose.msra.mxu0 0.0
      %2784 = vmatprep.subr.mxu0 0.0
      %2785 = vmatpush1.xpose.msra.mxu0 0.0
      %2786 = vmatprep.subr.mxu0 0.0
      %2787 = vmatpush1.xpose.msra.mxu0 0.0
      %2788 = vmatprep.subr.mxu0 0.0
      %2789 = vmatpush1.xpose.msra.mxu0 0.0
      %2790 = vmatprep.subr.mxu0 0.0
      %2791 = vmatpush1.xpose.msra.mxu0 0.0
      %2792 = vmatprep.subr.mxu0 0.0
      %2793 = vmatpush1.xpose.msra.mxu0 0.0
      %2794 = vmatprep.subr.mxu0 0.0
      %2795 = vmatpush1.xpose.msra.mxu0 0.0
      %2796 = vmatprep.subr.mxu0 0.0
      %2797 = vmatpush1.xpose.msra.mxu0 0.0
      %2798 = vmatprep.subr.mxu0 0.0
      %2799 = vmatpush1.xpose.msra.mxu0 0.0
      %2800 = vmatprep.subr.mxu0 0.0
      %2801 = vmatpush1.xpose.msra.mxu0 0.0
      %2802 = vmatprep.subr.mxu0 0.0
      %2803 = vmatpush1.xpose.msra.mxu0 0.0
      %2804 = vmatprep.subr.mxu0 0.0
      %2805 = vmatpush1.xpose.msra.mxu0 %v2774
      %2806 = vmatprep.subr.mxu0 0.0
      %2807 = vmatpush1.xpose.msra.mxu0 %v2772
      %2808 = vmatprep.subr.mxu0 0.0
      %2809 = vmatpush2.xpose.msra.mxu0 0.0
      %2810 = vmatprep.subr.mxu0 0.0
      %2811 = vmatpush2.xpose.msra.mxu0 0.0
      %2812 = vmatprep.subr.mxu0 0.0
      %2813 = vmatpush2.xpose.msra.mxu0 0.0
      %2814 = vmatprep.subr.mxu0 0.0
      %2815 = vmatpush2.xpose.msra.mxu0 0.0
      %2816 = vmatprep.subr.mxu0 0.0
      %2817 = vmatpush2.xpose.msra.mxu0 0.0
      %2818 = vmatprep.subr.mxu0 0.0
      %2819 = vmatpush2.xpose.msra.mxu0 0.0
      %2820 = vmatprep.subr.mxu0 0.0
      %2821 = vmatpush2.xpose.msra.mxu0 0.0
      %2822 = vmatprep.subr.mxu0 0.0
      %2823 = vmatpush2.xpose.msra.mxu0 0.0
      %2824 = vmatprep.subr.mxu0 0.0
      %2825 = vmatpush2.xpose.msra.mxu0 0.0
      %2826 = vmatprep.subr.mxu0 0.0
      %2827 = vmatpush2.xpose.msra.mxu0 0.0
      %2828 = vmatprep.subr.mxu0 0.0
      %2829 = vmatpush2.xpose.msra.mxu0 0.0
      %2830 = vmatprep.subr.mxu0 0.0
      %2831 = vmatpush2.xpose.msra.mxu0 0.0
      %2832 = vmatprep.subr.mxu0 0.0
      %2833 = vmatpush2.xpose.msra.mxu0 0.0
      %2834 = vmatprep.subr.mxu0 0.0
      %2835 = vmatpush2.xpose.msra.mxu0 0.0
      %2836 = vmatprep.subr.mxu0 0.0
      %2837 = vmatpush2.xpose.msra.mxu0 0.0
      %2838 = vmatprep.subr.mxu0 0.0
      %2839 = vmatpush2.xpose.msra.mxu0 0.0
      %2840 = vmatprep.mubr.f32.mxu0 0.0
      %2841 = vmatmul.mubr.f32.gmra.mxu0 %v2770
      %v2842 = vpop.f32.mrf.mxu0
      %v2843 = vadd.f32 0.0, %v2842
      %v2844 = vpop.f32.mrf.mxu0
      %2845 = vdwg.mxu0
      %v2846 = vmul.f32 %v2843, 0.35355338
      %v2847 = vsel %vm2107, %v2846, -inf
      %2848 = vmax.xlane.f32.xlu0 %v2847
      %v2849 = vpop.xlane.xlu0 %2848
      %v2850 = vsub.f32 %v2846, %v2849
      %v2851 = vmul.f32 %v2850, 1.442695
      %v2852 = vpow.pop %v2851
      %v2853 = vsel %vm2107, %v2852, 0.0
      %2854 = vadd.xlane.f32.xlu0 %v2853
      %v2855 = vpop.xlane.xlu0 %2854
      %v2856 = vrcp.pop %v2855
      %v2857 = vmul.f32 %v2852, %v2856
      %2858 = vrot.lane.b32.xlu0 %v2015, 72
      %v2859 = vpop.permute.xlu0 %2858
      %2860 = vrot.lane.b32.xlu0 %v2020, 72
      %v2861 = vpop.permute.xlu0 %2860
      %v2865 = vsel %vm2107, %v2857, 0
      %2867 = vmatprep.subr.mxu0 0.0
      %2868 = vmatpush1.msra.mxu0 0.0
      %2869 = vmatprep.subr.mxu0 0.0
      %2870 = vmatpush1.msra.mxu0 0.0
      %2871 = vmatprep.subr.mxu0 0.0
      %2872 = vmatpush1.msra.mxu0 0.0
      %2873 = vmatprep.subr.mxu0 0.0
      %2874 = vmatpush1.msra.mxu0 0.0
      %2875 = vmatprep.subr.mxu0 0.0
      %2876 = vmatpush1.msra.mxu0 0.0
      %2877 = vmatprep.subr.mxu0 0.0
      %2878 = vmatpush1.msra.mxu0 0.0
      %2879 = vmatprep.subr.mxu0 0.0
      %2880 = vmatpush1.msra.mxu0 0.0
      %2881 = vmatprep.subr.mxu0 0.0
      %2882 = vmatpush1.msra.mxu0 0.0
      %2883 = vmatprep.subr.mxu0 0.0
      %2884 = vmatpush1.msra.mxu0 0.0
      %2885 = vmatprep.subr.mxu0 0.0
      %2886 = vmatpush1.msra.mxu0 0.0
      %2887 = vmatprep.subr.mxu0 0.0
      %2888 = vmatpush1.msra.mxu0 0.0
      %2889 = vmatprep.subr.mxu0 0.0
      %2890 = vmatpush1.msra.mxu0 0.0
      %2891 = vmatprep.subr.mxu0 0.0
      %2892 = vmatpush1.msra.mxu0 0.0
      %2893 = vmatprep.subr.mxu0 0.0
      %2894 = vmatpush1.msra.mxu0 0.0
      %2895 = vmatprep.subr.mxu0 0.0
      %2896 = vmatpush1.msra.mxu0 %v2861
      %2897 = vmatprep.subr.mxu0 0.0
      %2898 = vmatpush1.msra.mxu0 %v2859
      %2899 = vmatprep.subr.mxu0 0.0
      %2900 = vmatpush2.msra.mxu0 0.0
      %2901 = vmatprep.subr.mxu0 0.0
      %2902 = vmatpush2.msra.mxu0 0.0
      %2903 = vmatprep.subr.mxu0 0.0
      %2904 = vmatpush2.msra.mxu0 0.0
      %2905 = vmatprep.subr.mxu0 0.0
      %2906 = vmatpush2.msra.mxu0 0.0
      %2907 = vmatprep.subr.mxu0 0.0
      %2908 = vmatpush2.msra.mxu0 0.0
      %2909 = vmatprep.subr.mxu0 0.0
      %2910 = vmatpush2.msra.mxu0 0.0
      %2911 = vmatprep.subr.mxu0 0.0
      %2912 = vmatpush2.msra.mxu0 0.0
      %2913 = vmatprep.subr.mxu0 0.0
      %2914 = vmatpush2.msra.mxu0 0.0
      %2915 = vmatprep.subr.mxu0 0.0
      %2916 = vmatpush2.msra.mxu0 0.0
      %2917 = vmatprep.subr.mxu0 0.0
      %2918 = vmatpush2.msra.mxu0 0.0
      %2919 = vmatprep.subr.mxu0 0.0
      %2920 = vmatpush2.msra.mxu0 0.0
      %2921 = vmatprep.subr.mxu0 0.0
      %2922 = vmatpush2.msra.mxu0 0.0
      %2923 = vmatprep.subr.mxu0 0.0
      %2924 = vmatpush2.msra.mxu0 0.0
      %2925 = vmatprep.subr.mxu0 0.0
      %2926 = vmatpush2.msra.mxu0 0.0
      %2927 = vmatprep.subr.mxu0 0.0
      %2928 = vmatpush2.msra.mxu0 0.0
      %2929 = vmatprep.subr.mxu0 0.0
      %2930 = vmatpush2.msra.mxu0 0.0
      %2931 = vmatprep.mubr.f32.mxu0 0.0
      %2932 = vmatmul.mubr.f32.gmra.mxu0 %v2865
      %v2933 = vpop.f32.mrf.mxu0
      %v2934 = vadd.f32 0.0, %v2933
      %v2935 = vpop.f32.mrf.mxu0
      %2936 = vdwg.mxu0
      %v2938 = vsel %vm849, %v2934, 0
      %2940 = vmatprep.subr.mxu0 0.0
      %2941 = vmatpush1.msra.mxu0 0.0
      %2942 = vmatprep.subr.mxu0 0.0
      %2943 = vmatpush1.msra.mxu0 0.0
      %2944 = vmatprep.subr.mxu0 0.0
      %2945 = vmatpush1.msra.mxu0 0.0
      %2946 = vmatprep.subr.mxu0 0.0
      %2947 = vmatpush1.msra.mxu0 0.0
      %2948 = vmatprep.subr.mxu0 0.0
      %2949 = vmatpush1.msra.mxu0 0.0
      %2950 = vmatprep.subr.mxu0 0.0
      %2951 = vmatpush1.msra.mxu0 0.0
      %2952 = vmatprep.subr.mxu0 0.0
      %2953 = vmatpush1.msra.mxu0 0.0
      %2954 = vmatprep.subr.mxu0 0.0
      %2955 = vmatpush1.msra.mxu0 0.0
      %2956 = vmatprep.subr.mxu0 0.0
      %2957 = vmatpush1.msra.mxu0 0.0
      %2958 = vmatprep.subr.mxu0 0.0
      %2959 = vmatpush1.msra.mxu0 0.0
      %2960 = vmatprep.subr.mxu0 0.0
      %2961 = vmatpush1.msra.mxu0 0.0
      %2962 = vmatprep.subr.mxu0 0.0
      %2963 = vmatpush1.msra.mxu0 0.0
      %2964 = vmatprep.subr.mxu0 0.0
      %2965 = vmatpush1.msra.mxu0 0.0
      %2966 = vmatprep.subr.mxu0 0.0
      %2967 = vmatpush1.msra.mxu0 0.0
      %2968 = vmatprep.subr.mxu0 0.0
      %2969 = vmatpush1.msra.mxu0 0.0
      %2970 = vmatprep.subr.mxu0 0.0
      %2971 = vmatpush1.msra.mxu0 %v2026
      %2972 = vmatprep.subr.mxu0 0.0
      %2973 = vmatpush2.msra.mxu0 0.0
      %2974 = vmatprep.subr.mxu0 0.0
      %2975 = vmatpush2.msra.mxu0 0.0
      %2976 = vmatprep.subr.mxu0 0.0
      %2977 = vmatpush2.msra.mxu0 0.0
      %2978 = vmatprep.subr.mxu0 0.0
      %2979 = vmatpush2.msra.mxu0 0.0
      %2980 = vmatprep.subr.mxu0 0.0
      %2981 = vmatpush2.msra.mxu0 0.0
      %2982 = vmatprep.subr.mxu0 0.0
      %2983 = vmatpush2.msra.mxu0 0.0
      %2984 = vmatprep.subr.mxu0 0.0
      %2985 = vmatpush2.msra.mxu0 0.0
      %2986 = vmatprep.subr.mxu0 0.0
      %2987 = vmatpush2.msra.mxu0 0.0
      %2988 = vmatprep.subr.mxu0 0.0
      %2989 = vmatpush2.msra.mxu0 0.0
      %2990 = vmatprep.subr.mxu0 0.0
      %2991 = vmatpush2.msra.mxu0 0.0
      %2992 = vmatprep.subr.mxu0 0.0
      %2993 = vmatpush2.msra.mxu0 0.0
      %2994 = vmatprep.subr.mxu0 0.0
      %2995 = vmatpush2.msra.mxu0 0.0
      %2996 = vmatprep.subr.mxu0 0.0
      %2997 = vmatpush2.msra.mxu0 0.0
      %2998 = vmatprep.subr.mxu0 0.0
      %2999 = vmatpush2.msra.mxu0 0.0
      %3000 = vmatprep.subr.mxu0 0.0
      %3001 = vmatpush2.msra.mxu0 0.0
      %3002 = vmatprep.subr.mxu0 0.0
      %3003 = vmatpush2.msra.mxu0 0.0
      %3004 = vmatprep.mubr.f32.mxu0 0.0
      %3005 = vmatmul.mubr.f32.gmra.mxu0 %v2938
      %v3006 = vpop.f32.mrf.mxu0
      %v3007 = vadd.f32 0.0, %v3006
      %v3008 = vpop.f32.mrf.mxu0
      %3009 = vdwg.mxu0
      %v3010 = vadd.f32 %v2763, %v3007
      %v3011 = vld [vmem:[%s12] sm:$0x1]
      %v3013 = vlaneseq
      %v3014 = vshrl.u32 %v3013, 7
      %v3015 = vsub.s32 0, %v3014
      %v3016 = vrot.slane %v3011, %v3015
      %v3018 = vadd.f32 %v3010, %v3016
      %v3019 = vadd.f32 %v1846, %v3018
      %v3020 = vld [vmem:[%s19] sm:$0x1]
      %v3021 = vld [vmem:[%s20] sm:$0x1]
      %v3022 = vsel %vm755, %v3019, 0.0
      %3023 = vadd.xlane.f32.xlu0 %v3022
      %v3024 = vpop.xlane.xlu0 %3023
      %v3025 = vmul.f32 %v3024, %v1822
      %v3026 = vsub.f32 %v3019, %v3025
      %v3027 = vmul.f32 %v3026, %v3026
      %v3028 = vsel %vm755, %v3027, 0.0
      %3029 = vadd.xlane.f32.xlu0 %v3028
      %v3030 = vpop.xlane.xlu0 %3029
      %v3031 = vmul.f32 %v3030, %v1822
      %v3032 = vadd.f32 %v3031, 1e-05
      %v3033 = vrsqrt.pop %v3032
      %v3034 = vmul.f32 %v3026, %v3033
      %v3036 = vlaneseq
      %v3037 = vshrl.u32 %v3036, 7
      %v3038 = vsub.s32 0, %v3037
      %v3039 = vrot.slane %v3020, %v3038
      %v3041 = vmul.f32 %v3034, %v3039
      %v3043 = vlaneseq
      %v3044 = vshrl.u32 %v3043, 7
      %v3045 = vsub.s32 0, %v3044
      %v3046 = vrot.slane %v3021, %v3045
      %v3048 = vadd.f32 %v3041, %v3046
      %v3049 = vld [vmem:[%s13] sm:$0xff]
      %v3050 = vld [vmem:[%s13 + $0x8] sm:$0xff]
      %v3051 = vld [vmem:[%s13 + $0x10] sm:$0xff]
      %v3052 = vld [vmem:[%s13 + $0x18] sm:$0xff]
      %v3053 = vld [vmem:[%s13 + $0x20] sm:$0xff]
      %v3054 = vld [vmem:[%s13 + $0x28] sm:$0xff]
      %v3055 = vld [vmem:[%s13 + $0x30] sm:$0xff]
      %v3056 = vld [vmem:[%s13 + $0x38] sm:$0xff]
      %v3057 = vld [vmem:[%s13 + $0x40] sm:$0xff]
      %v3058 = vld [vmem:[%s13 + $0x48] sm:$0xff]
      %v3059 = vld [vmem:[%s13 + $0x50] sm:$0xff]
      %v3060 = vld [vmem:[%s13 + $0x58] sm:$0xff]
      %v3061 = vld [vmem:[%s13 + $0x60] sm:$0xff]
      %v3062 = vld [vmem:[%s13 + $0x68] sm:$0xff]
      %v3063 = vld [vmem:[%s13 + $0x70] sm:$0xff]
      %v3064 = vld [vmem:[%s13 + $0x78] sm:$0xff]
      %v3065 = vld [vmem:[%s13 + $0x80] sm:$0xff]
      %v3066 = vld [vmem:[%s13 + $0x88] sm:$0xff]
      %v3067 = vld [vmem:[%s13 + $0x90] sm:$0xff]
      %v3068 = vld [vmem:[%s13 + $0x98] sm:$0xff]
      %v3069 = vld [vmem:[%s13 + $0xa0] sm:$0xff]
      %v3070 = vld [vmem:[%s13 + $0xa8] sm:$0xff]
      %v3071 = vld [vmem:[%s13 + $0xb0] sm:$0xff]
      %v3072 = vld [vmem:[%s13 + $0xb8] sm:$0xff]
      %v3073 = vld [vmem:[%s13 + $0xc0] sm:$0xff]
      %v3074 = vld [vmem:[%s13 + $0xc8] sm:$0xff]
      %v3075 = vld [vmem:[%s13 + $0xd0] sm:$0xff]
      %v3076 = vld [vmem:[%s13 + $0xd8] sm:$0xff]
      %v3077 = vld [vmem:[%s13 + $0xe0] sm:$0xff]
      %v3078 = vld [vmem:[%s13 + $0xe8] sm:$0xff]
      %v3079 = vld [vmem:[%s13 + $0xf0] sm:$0xff]
      %v3080 = vld [vmem:[%s13 + $0xf8] sm:$0xff]
      %v3081 = vld [vmem:[%s13 + $0x100] sm:$0xff]
      %v3082 = vld [vmem:[%s13 + $0x108] sm:$0xff]
      %v3083 = vld [vmem:[%s13 + $0x110] sm:$0xff]
      %v3084 = vld [vmem:[%s13 + $0x118] sm:$0xff]
      %v3085 = vld [vmem:[%s13 + $0x120] sm:$0xff]
      %v3086 = vld [vmem:[%s13 + $0x128] sm:$0xff]
      %v3087 = vld [vmem:[%s13 + $0x130] sm:$0xff]
      %v3088 = vld [vmem:[%s13 + $0x138] sm:$0xff]
      %v3089 = vld [vmem:[%s13 + $0x140] sm:$0xff]
      %v3090 = vld [vmem:[%s13 + $0x148] sm:$0xff]
      %v3091 = vld [vmem:[%s13 + $0x150] sm:$0xff]
      %v3092 = vld [vmem:[%s13 + $0x158] sm:$0xff]
      %v3093 = vld [vmem:[%s13 + $0x160] sm:$0xff]
      %v3094 = vld [vmem:[%s13 + $0x168] sm:$0xff]
      %v3095 = vld [vmem:[%s13 + $0x170] sm:$0xff]
      %v3096 = vld [vmem:[%s13 + $0x178] sm:$0xff]
      %v3097 = vld [vmem:[%s13 + $0x180] sm:$0xff]
      %v3098 = vld [vmem:[%s13 + $0x188] sm:$0xff]
      %v3099 = vld [vmem:[%s13 + $0x190] sm:$0xff]
      %v3100 = vld [vmem:[%s13 + $0x198] sm:$0xff]
      %v3101 = vld [vmem:[%s13 + $0x1a0] sm:$0xff]
      %v3102 = vld [vmem:[%s13 + $0x1a8] sm:$0xff]
      %v3103 = vld [vmem:[%s13 + $0x1b0] sm:$0xff]
      %v3104 = vld [vmem:[%s13 + $0x1b8] sm:$0xff]
      %v3105 = vld [vmem:[%s13 + $0x1c0] sm:$0xff]
      %v3106 = vld [vmem:[%s13 + $0x1c8] sm:$0xff]
      %v3107 = vld [vmem:[%s13 + $0x1d0] sm:$0xff]
      %v3108 = vld [vmem:[%s13 + $0x1d8] sm:$0xff]
      %v3109 = vld [vmem:[%s13 + $0x1e0] sm:$0xff]
      %v3110 = vld [vmem:[%s13 + $0x1e8] sm:$0xff]
      %v3111 = vld [vmem:[%s13 + $0x1f0] sm:$0xff]
      %v3112 = vld [vmem:[%s13 + $0x1f8] sm:$0xff]
      %v3113 = vld [vmem:[%s14] sm:$0xff]
      %v3114 = vld [vmem:[%s14 + $0x8] sm:$0xff]
      %v3117 = vlaneseq
      %v3118 = vshrl.u32 %v3117, 7
      %v3119 = vsub.s32 0, %v3118
      %v3120 = vrot.slane %v3113, %v3119
      %v3121 = vlaneseq
      %v3122 = vshrl.u32 %v3121, 7
      %v3123 = vsub.s32 1, %v3122
      %v3124 = vrot.slane %v3113, %v3123
      %v3125 = vlaneseq
      %v3126 = vshrl.u32 %v3125, 7
      %v3127 = vsub.s32 2, %v3126
      %v3128 = vrot.slane %v3113, %v3127
      %v3129 = vlaneseq
      %v3130 = vshrl.u32 %v3129, 7
      %v3131 = vsub.s32 3, %v3130
      %v3132 = vrot.slane %v3113, %v3131
      %v3133 = vlaneseq
      %v3134 = vshrl.u32 %v3133, 7
      %v3135 = vsub.s32 4, %v3134
      %v3136 = vrot.slane %v3113, %v3135
      %v3137 = vlaneseq
      %v3138 = vshrl.u32 %v3137, 7
      %v3139 = vsub.s32 5, %v3138
      %v3140 = vrot.slane %v3113, %v3139
      %v3141 = vlaneseq
      %v3142 = vshrl.u32 %v3141, 7
      %v3143 = vsub.s32 6, %v3142
      %v3144 = vrot.slane %v3113, %v3143
      %v3145 = vlaneseq
      %v3146 = vshrl.u32 %v3145, 7
      %v3147 = vsub.s32 7, %v3146
      %v3148 = vrot.slane %v3113, %v3147
      %v3149 = vlaneseq
      %v3150 = vshrl.u32 %v3149, 7
      %v3151 = vsub.s32 0, %v3150
      %v3152 = vrot.slane %v3114, %v3151
      %v3153 = vlaneseq
      %v3154 = vshrl.u32 %v3153, 7
      %v3155 = vsub.s32 1, %v3154
      %v3156 = vrot.slane %v3114, %v3155
      %v3157 = vlaneseq
      %v3158 = vshrl.u32 %v3157, 7
      %v3159 = vsub.s32 2, %v3158
      %v3160 = vrot.slane %v3114, %v3159
      %v3161 = vlaneseq
      %v3162 = vshrl.u32 %v3161, 7
      %v3163 = vsub.s32 3, %v3162
      %v3164 = vrot.slane %v3114, %v3163
      %v3165 = vlaneseq
      %v3166 = vshrl.u32 %v3165, 7
      %v3167 = vsub.s32 4, %v3166
      %v3168 = vrot.slane %v3114, %v3167
      %v3169 = vlaneseq
      %v3170 = vshrl.u32 %v3169, 7
      %v3171 = vsub.s32 5, %v3170
      %v3172 = vrot.slane %v3114, %v3171
      %v3173 = vlaneseq
      %v3174 = vshrl.u32 %v3173, 7
      %v3175 = vsub.s32 6, %v3174
      %v3176 = vrot.slane %v3114, %v3175
      %v3177 = vlaneseq
      %v3178 = vshrl.u32 %v3177, 7
      %v3179 = vsub.s32 7, %v3178
      %v3180 = vrot.slane %v3114, %v3179
      %v3198 = vsel %vm755, %v3048, 0
      %3200 = vmatprep.subr.mxu0 0.0
      %3201 = vmatpush1.msra.mxu0 0.0
      %3202 = vmatprep.subr.mxu0 0.0
      %3203 = vmatpush1.msra.mxu0 0.0
      %3204 = vmatprep.subr.mxu0 0.0
      %3205 = vmatpush1.msra.mxu0 0.0
      %3206 = vmatprep.subr.mxu0 0.0
      %3207 = vmatpush1.msra.mxu0 0.0
      %3208 = vmatprep.subr.mxu0 0.0
      %3209 = vmatpush1.msra.mxu0 0.0
      %3210 = vmatprep.subr.mxu0 0.0
      %3211 = vmatpush1.msra.mxu0 0.0
      %3212 = vmatprep.subr.mxu0 0.0
      %3213 = vmatpush1.msra.mxu0 0.0
      %3214 = vmatprep.subr.mxu0 0.0
      %3215 = vmatpush1.msra.mxu0 0.0
      %3216 = vmatprep.subr.mxu0 0.0
      %3217 = vmatpush1.msra.mxu0 0.0
      %3218 = vmatprep.subr.mxu0 0.0
      %3219 = vmatpush1.msra.mxu0 0.0
      %3220 = vmatprep.subr.mxu0 0.0
      %3221 = vmatpush1.msra.mxu0 0.0
      %3222 = vmatprep.subr.mxu0 0.0
      %3223 = vmatpush1.msra.mxu0 0.0
      %3224 = vmatprep.subr.mxu0 %v3098
      %3225 = vmatpush1.msra.mxu0 %v3097
      %3226 = vmatprep.subr.mxu0 %v3082
      %3227 = vmatpush1.msra.mxu0 %v3081
      %3228 = vmatprep.subr.mxu0 %v3066
      %3229 = vmatpush1.msra.mxu0 %v3065
      %3230 = vmatprep.subr.mxu0 %v3050
      %3231 = vmatpush1.msra.mxu0 %v3049
      %3232 = vmatprep.subr.mxu0 0.0
      %3233 = vmatpush2.msra.mxu0 0.0
      %3234 = vmatprep.subr.mxu0 0.0
      %3235 = vmatpush2.msra.mxu0 0.0
      %3236 = vmatprep.subr.mxu0 0.0
      %3237 = vmatpush2.msra.mxu0 0.0
      %3238 = vmatprep.subr.mxu0 0.0
      %3239 = vmatpush2.msra.mxu0 0.0
      %3240 = vmatprep.subr.mxu0 0.0
      %3241 = vmatpush2.msra.mxu0 0.0
      %3242 = vmatprep.subr.mxu0 0.0
      %3243 = vmatpush2.msra.mxu0 0.0
      %3244 = vmatprep.subr.mxu0 0.0
      %3245 = vmatpush2.msra.mxu0 0.0
      %3246 = vmatprep.subr.mxu0 0.0
      %3247 = vmatpush2.msra.mxu0 0.0
      %3248 = vmatprep.subr.mxu0 0.0
      %3249 = vmatpush2.msra.mxu0 0.0
      %3250 = vmatprep.subr.mxu0 0.0
      %3251 = vmatpush2.msra.mxu0 0.0
      %3252 = vmatprep.subr.mxu0 0.0
      %3253 = vmatpush2.msra.mxu0 0.0
      %3254 = vmatprep.subr.mxu0 0.0
      %3255 = vmatpush2.msra.mxu0 0.0
      %3256 = vmatprep.subr.mxu0 0.0
      %3257 = vmatpush2.msra.mxu0 0.0
      %3258 = vmatprep.subr.mxu0 0.0
      %3259 = vmatpush2.msra.mxu0 0.0
      %3260 = vmatprep.subr.mxu0 0.0
      %3261 = vmatpush2.msra.mxu0 0.0
      %3262 = vmatprep.subr.mxu0 0.0
      %3263 = vmatpush2.msra.mxu0 0.0
      %3264 = vmatprep.mubr.f32.mxu0 0.0
      %3265 = vmatmul.mubr.f32.gmra.mxu0 %v3198
      %v3266 = vpop.f32.mrf.mxu0
      %v3267 = vadd.f32 %v3120, %v3266
      %v3268 = vpop.f32.mrf.mxu0
      %v3269 = vadd.f32 %v3124, %v3268
      %3270 = vdwg.mxu0
      %3271 = vmatprep.subr.mxu0 0.0
      %3272 = vmatpush1.msra.mxu0 0.0
      %3273 = vmatprep.subr.mxu0 0.0
      %3274 = vmatpush1.msra.mxu0 0.0
      %3275 = vmatprep.subr.mxu0 0.0
      %3276 = vmatpush1.msra.mxu0 0.0
      %3277 = vmatprep.subr.mxu0 0.0
      %3278 = vmatpush1.msra.mxu0 0.0
      %3279 = vmatprep.subr.mxu0 0.0
      %3280 = vmatpush1.msra.mxu0 0.0
      %3281 = vmatprep.subr.mxu0 0.0
      %3282 = vmatpush1.msra.mxu0 0.0
      %3283 = vmatprep.subr.mxu0 0.0
      %3284 = vmatpush1.msra.mxu0 0.0
      %3285 = vmatprep.subr.mxu0 0.0
      %3286 = vmatpush1.msra.mxu0 0.0
      %3287 = vmatprep.subr.mxu0 0.0
      %3288 = vmatpush1.msra.mxu0 0.0
      %3289 = vmatprep.subr.mxu0 0.0
      %3290 = vmatpush1.msra.mxu0 0.0
      %3291 = vmatprep.subr.mxu0 0.0
      %3292 = vmatpush1.msra.mxu0 0.0
      %3293 = vmatprep.subr.mxu0 0.0
      %3294 = vmatpush1.msra.mxu0 0.0
      %3295 = vmatprep.subr.mxu0 %v3100
      %3296 = vmatpush1.msra.mxu0 %v3099
      %3297 = vmatprep.subr.mxu0 %v3084
      %3298 = vmatpush1.msra.mxu0 %v3083
      %3299 = vmatprep.subr.mxu0 %v3068
      %3300 = vmatpush1.msra.mxu0 %v3067
      %3301 = vmatprep.subr.mxu0 %v3052
      %3302 = vmatpush1.msra.mxu0 %v3051
      %3303 = vmatprep.subr.mxu0 0.0
      %3304 = vmatpush2.msra.mxu0 0.0
      %3305 = vmatprep.subr.mxu0 0.0
      %3306 = vmatpush2.msra.mxu0 0.0
      %3307 = vmatprep.subr.mxu0 0.0
      %3308 = vmatpush2.msra.mxu0 0.0
      %3309 = vmatprep.subr.mxu0 0.0
      %3310 = vmatpush2.msra.mxu0 0.0
      %3311 = vmatprep.subr.mxu0 0.0
      %3312 = vmatpush2.msra.mxu0 0.0
      %3313 = vmatprep.subr.mxu0 0.0
      %3314 = vmatpush2.msra.mxu0 0.0
      %3315 = vmatprep.subr.mxu0 0.0
      %3316 = vmatpush2.msra.mxu0 0.0
      %3317 = vmatprep.subr.mxu0 0.0
      %3318 = vmatpush2.msra.mxu0 0.0
      %3319 = vmatprep.subr.mxu0 0.0
      %3320 = vmatpush2.msra.mxu0 0.0
      %3321 = vmatprep.subr.mxu0 0.0
      %3322 = vmatpush2.msra.mxu0 0.0
      %3323 = vmatprep.subr.mxu0 0.0
      %3324 = vmatpush2.msra.mxu0 0.0
      %3325 = vmatprep.subr.mxu0 0.0
      %3326 = vmatpush2.msra.mxu0 0.0
      %3327 = vmatprep.subr.mxu0 0.0
      %3328 = vmatpush2.msra.mxu0 0.0
      %3329 = vmatprep.subr.mxu0 0.0
      %3330 = vmatpush2.msra.mxu0 0.0
      %3331 = vmatprep.subr.mxu0 0.0
      %3332 = vmatpush2.msra.mxu0 0.0
      %3333 = vmatprep.subr.mxu0 0.0
      %3334 = vmatpush2.msra.mxu0 0.0
      %3335 = vmatprep.mubr.f32.mxu0 0.0
      %3336 = vmatmul.mubr.f32.gmra.mxu0 %v3198
      %v3337 = vpop.f32.mrf.mxu0
      %v3338 = vadd.f32 %v3128, %v3337
      %v3339 = vpop.f32.mrf.mxu0
      %v3340 = vadd.f32 %v3132, %v3339
      %3341 = vdwg.mxu0
      %3342 = vmatprep.subr.mxu0 0.0
      %3343 = vmatpush1.msra.mxu0 0.0
      %3344 = vmatprep.subr.mxu0 0.0
      %3345 = vmatpush1.msra.mxu0 0.0
      %3346 = vmatprep.subr.mxu0 0.0
      %3347 = vmatpush1.msra.mxu0 0.0
      %3348 = vmatprep.subr.mxu0 0.0
      %3349 = vmatpush1.msra.mxu0 0.0
      %3350 = vmatprep.subr.mxu0 0.0
      %3351 = vmatpush1.msra.mxu0 0.0
      %3352 = vmatprep.subr.mxu0 0.0
      %3353 = vmatpush1.msra.mxu0 0.0
      %3354 = vmatprep.subr.mxu0 0.0
      %3355 = vmatpush1.msra.mxu0 0.0
      %3356 = vmatprep.subr.mxu0 0.0
      %3357 = vmatpush1.msra.mxu0 0.0
      %3358 = vmatprep.subr.mxu0 0.0
      %3359 = vmatpush1.msra.mxu0 0.0
      %3360 = vmatprep.subr.mxu0 0.0
      %3361 = vmatpush1.msra.mxu0 0.0
      %3362 = vmatprep.subr.mxu0 0.0
      %3363 = vmatpush1.msra.mxu0 0.0
      %3364 = vmatprep.subr.mxu0 0.0
      %3365 = vmatpush1.msra.mxu0 0.0
      %3366 = vmatprep.subr.mxu0 %v3102
      %3367 = vmatpush1.msra.mxu0 %v3101
      %3368 = vmatprep.subr.mxu0 %v3086
      %3369 = vmatpush1.msra.mxu0 %v3085
      %3370 = vmatprep.subr.mxu0 %v3070
      %3371 = vmatpush1.msra.mxu0 %v3069
      %3372 = vmatprep.subr.mxu0 %v3054
      %3373 = vmatpush1.msra.mxu0 %v3053
      %3374 = vmatprep.subr.mxu0 0.0
      %3375 = vmatpush2.msra.mxu0 0.0
      %3376 = vmatprep.subr.mxu0 0.0
      %3377 = vmatpush2.msra.mxu0 0.0
      %3378 = vmatprep.subr.mxu0 0.0
      %3379 = vmatpush2.msra.mxu0 0.0
      %3380 = vmatprep.subr.mxu0 0.0
      %3381 = vmatpush2.msra.mxu0 0.0
      %3382 = vmatprep.subr.mxu0 0.0
      %3383 = vmatpush2.msra.mxu0 0.0
      %3384 = vmatprep.subr.mxu0 0.0
      %3385 = vmatpush2.msra.mxu0 0.0
      %3386 = vmatprep.subr.mxu0 0.0
      %3387 = vmatpush2.msra.mxu0 0.0
      %3388 = vmatprep.subr.mxu0 0.0
      %3389 = vmatpush2.msra.mxu0 0.0
      %3390 = vmatprep.subr.mxu0 0.0
      %3391 = vmatpush2.msra.mxu0 0.0
      %3392 = vmatprep.subr.mxu0 0.0
      %3393 = vmatpush2.msra.mxu0 0.0
      %3394 = vmatprep.subr.mxu0 0.0
      %3395 = vmatpush2.msra.mxu0 0.0
      %3396 = vmatprep.subr.mxu0 0.0
      %3397 = vmatpush2.msra.mxu0 0.0
      %3398 = vmatprep.subr.mxu0 0.0
      %3399 = vmatpush2.msra.mxu0 0.0
      %3400 = vmatprep.subr.mxu0 0.0
      %3401 = vmatpush2.msra.mxu0 0.0
      %3402 = vmatprep.subr.mxu0 0.0
      %3403 = vmatpush2.msra.mxu0 0.0
      %3404 = vmatprep.subr.mxu0 0.0
      %3405 = vmatpush2.msra.mxu0 0.0
      %3406 = vmatprep.mubr.f32.mxu0 0.0
      %3407 = vmatmul.mubr.f32.gmra.mxu0 %v3198
      %v3408 = vpop.f32.mrf.mxu0
      %v3409 = vadd.f32 %v3136, %v3408
      %v3410 = vpop.f32.mrf.mxu0
      %v3411 = vadd.f32 %v3140, %v3410
      %3412 = vdwg.mxu0
      %3413 = vmatprep.subr.mxu0 0.0
      %3414 = vmatpush1.msra.mxu0 0.0
      %3415 = vmatprep.subr.mxu0 0.0
      %3416 = vmatpush1.msra.mxu0 0.0
      %3417 = vmatprep.subr.mxu0 0.0
      %3418 = vmatpush1.msra.mxu0 0.0
      %3419 = vmatprep.subr.mxu0 0.0
      %3420 = vmatpush1.msra.mxu0 0.0
      %3421 = vmatprep.subr.mxu0 0.0
      %3422 = vmatpush1.msra.mxu0 0.0
      %3423 = vmatprep.subr.mxu0 0.0
      %3424 = vmatpush1.msra.mxu0 0.0
      %3425 = vmatprep.subr.mxu0 0.0
      %3426 = vmatpush1.msra.mxu0 0.0
      %3427 = vmatprep.subr.mxu0 0.0
      %3428 = vmatpush1.msra.mxu0 0.0
      %3429 = vmatprep.subr.mxu0 0.0
      %3430 = vmatpush1.msra.mxu0 0.0
      %3431 = vmatprep.subr.mxu0 0.0
      %3432 = vmatpush1.msra.mxu0 0.0
      %3433 = vmatprep.subr.mxu0 0.0
      %3434 = vmatpush1.msra.mxu0 0.0
      %3435 = vmatprep.subr.mxu0 0.0
      %3436 = vmatpush1.msra.mxu0 0.0
      %3437 = vmatprep.subr.mxu0 %v3104
      %3438 = vmatpush1.msra.mxu0 %v3103
      %3439 = vmatprep.subr.mxu0 %v3088
      %3440 = vmatpush1.msra.mxu0 %v3087
      %3441 = vmatprep.subr.mxu0 %v3072
      %3442 = vmatpush1.msra.mxu0 %v3071
      %3443 = vmatprep.subr.mxu0 %v3056
      %3444 = vmatpush1.msra.mxu0 %v3055
      %3445 = vmatprep.subr.mxu0 0.0
      %3446 = vmatpush2.msra.mxu0 0.0
      %3447 = vmatprep.subr.mxu0 0.0
      %3448 = vmatpush2.msra.mxu0 0.0
      %3449 = vmatprep.subr.mxu0 0.0
      %3450 = vmatpush2.msra.mxu0 0.0
      %3451 = vmatprep.subr.mxu0 0.0
      %3452 = vmatpush2.msra.mxu0 0.0
      %3453 = vmatprep.subr.mxu0 0.0
      %3454 = vmatpush2.msra.mxu0 0.0
      %3455 = vmatprep.subr.mxu0 0.0
      %3456 = vmatpush2.msra.mxu0 0.0
      %3457 = vmatprep.subr.mxu0 0.0
      %3458 = vmatpush2.msra.mxu0 0.0
      %3459 = vmatprep.subr.mxu0 0.0
      %3460 = vmatpush2.msra.mxu0 0.0
      %3461 = vmatprep.subr.mxu0 0.0
      %3462 = vmatpush2.msra.mxu0 0.0
      %3463 = vmatprep.subr.mxu0 0.0
      %3464 = vmatpush2.msra.mxu0 0.0
      %3465 = vmatprep.subr.mxu0 0.0
      %3466 = vmatpush2.msra.mxu0 0.0
      %3467 = vmatprep.subr.mxu0 0.0
      %3468 = vmatpush2.msra.mxu0 0.0
      %3469 = vmatprep.subr.mxu0 0.0
      %3470 = vmatpush2.msra.mxu0 0.0
      %3471 = vmatprep.subr.mxu0 0.0
      %3472 = vmatpush2.msra.mxu0 0.0
      %3473 = vmatprep.subr.mxu0 0.0
      %3474 = vmatpush2.msra.mxu0 0.0
      %3475 = vmatprep.subr.mxu0 0.0
      %3476 = vmatpush2.msra.mxu0 0.0
      %3477 = vmatprep.mubr.f32.mxu0 0.0
      %3478 = vmatmul.mubr.f32.gmra.mxu0 %v3198
      %v3479 = vpop.f32.mrf.mxu0
      %v3480 = vadd.f32 %v3144, %v3479
      %v3481 = vpop.f32.mrf.mxu0
      %v3482 = vadd.f32 %v3148, %v3481
      %3483 = vdwg.mxu0
      %3484 = vmatprep.subr.mxu0 0.0
      %3485 = vmatpush1.msra.mxu0 0.0
      %3486 = vmatprep.subr.mxu0 0.0
      %3487 = vmatpush1.msra.mxu0 0.0
      %3488 = vmatprep.subr.mxu0 0.0
      %3489 = vmatpush1.msra.mxu0 0.0
      %3490 = vmatprep.subr.mxu0 0.0
      %3491 = vmatpush1.msra.mxu0 0.0
      %3492 = vmatprep.subr.mxu0 0.0
      %3493 = vmatpush1.msra.mxu0 0.0
      %3494 = vmatprep.subr.mxu0 0.0
      %3495 = vmatpush1.msra.mxu0 0.0
      %3496 = vmatprep.subr.mxu0 0.0
      %3497 = vmatpush1.msra.mxu0 0.0
      %3498 = vmatprep.subr.mxu0 0.0
      %3499 = vmatpush1.msra.mxu0 0.0
      %3500 = vmatprep.subr.mxu0 0.0
      %3501 = vmatpush1.msra.mxu0 0.0
      %3502 = vmatprep.subr.mxu0 0.0
      %3503 = vmatpush1.msra.mxu0 0.0
      %3504 = vmatprep.subr.mxu0 0.0
      %3505 = vmatpush1.msra.mxu0 0.0
      %3506 = vmatprep.subr.mxu0 0.0
      %3507 = vmatpush1.msra.mxu0 0.0
      %3508 = vmatprep.subr.mxu0 %v3106
      %3509 = vmatpush1.msra.mxu0 %v3105
      %3510 = vmatprep.subr.mxu0 %v3090
      %3511 = vmatpush1.msra.mxu0 %v3089
      %3512 = vmatprep.subr.mxu0 %v3074
      %3513 = vmatpush1.msra.mxu0 %v3073
      %3514 = vmatprep.subr.mxu0 %v3058
      %3515 = vmatpush1.msra.mxu0 %v3057
      %3516 = vmatprep.subr.mxu0 0.0
      %3517 = vmatpush2.msra.mxu0 0.0
      %3518 = vmatprep.subr.mxu0 0.0
      %3519 = vmatpush2.msra.mxu0 0.0
      %3520 = vmatprep.subr.mxu0 0.0
      %3521 = vmatpush2.msra.mxu0 0.0
      %3522 = vmatprep.subr.mxu0 0.0
      %3523 = vmatpush2.msra.mxu0 0.0
      %3524 = vmatprep.subr.mxu0 0.0
      %3525 = vmatpush2.msra.mxu0 0.0
      %3526 = vmatprep.subr.mxu0 0.0
      %3527 = vmatpush2.msra.mxu0 0.0
      %3528 = vmatprep.subr.mxu0 0.0
      %3529 = vmatpush2.msra.mxu0 0.0
      %3530 = vmatprep.subr.mxu0 0.0
      %3531 = vmatpush2.msra.mxu0 0.0
      %3532 = vmatprep.subr.mxu0 0.0
      %3533 = vmatpush2.msra.mxu0 0.0
      %3534 = vmatprep.subr.mxu0 0.0
      %3535 = vmatpush2.msra.mxu0 0.0
      %3536 = vmatprep.subr.mxu0 0.0
      %3537 = vmatpush2.msra.mxu0 0.0
      %3538 = vmatprep.subr.mxu0 0.0
      %3539 = vmatpush2.msra.mxu0 0.0
      %3540 = vmatprep.subr.mxu0 0.0
      %3541 = vmatpush2.msra.mxu0 0.0
      %3542 = vmatprep.subr.mxu0 0.0
      %3543 = vmatpush2.msra.mxu0 0.0
      %3544 = vmatprep.subr.mxu0 0.0
      %3545 = vmatpush2.msra.mxu0 0.0
      %3546 = vmatprep.subr.mxu0 0.0
      %3547 = vmatpush2.msra.mxu0 0.0
      %3548 = vmatprep.mubr.f32.mxu0 0.0
      %3549 = vmatmul.mubr.f32.gmra.mxu0 %v3198
      %v3550 = vpop.f32.mrf.mxu0
      %v3551 = vadd.f32 %v3152, %v3550
      %v3552 = vpop.f32.mrf.mxu0
      %v3553 = vadd.f32 %v3156, %v3552
      %3554 = vdwg.mxu0
      %3555 = vmatprep.subr.mxu0 0.0
      %3556 = vmatpush1.msra.mxu0 0.0
      %3557 = vmatprep.subr.mxu0 0.0
      %3558 = vmatpush1.msra.mxu0 0.0
      %3559 = vmatprep.subr.mxu0 0.0
      %3560 = vmatpush1.msra.mxu0 0.0
      %3561 = vmatprep.subr.mxu0 0.0
      %3562 = vmatpush1.msra.mxu0 0.0
      %3563 = vmatprep.subr.mxu0 0.0
      %3564 = vmatpush1.msra.mxu0 0.0
      %3565 = vmatprep.subr.mxu0 0.0
      %3566 = vmatpush1.msra.mxu0 0.0
      %3567 = vmatprep.subr.mxu0 0.0
      %3568 = vmatpush1.msra.mxu0 0.0
      %3569 = vmatprep.subr.mxu0 0.0
      %3570 = vmatpush1.msra.mxu0 0.0
      %3571 = vmatprep.subr.mxu0 0.0
      %3572 = vmatpush1.msra.mxu0 0.0
      %3573 = vmatprep.subr.mxu0 0.0
      %3574 = vmatpush1.msra.mxu0 0.0
      %3575 = vmatprep.subr.mxu0 0.0
      %3576 = vmatpush1.msra.mxu0 0.0
      %3577 = vmatprep.subr.mxu0 0.0
      %3578 = vmatpush1.msra.mxu0 0.0
      %3579 = vmatprep.subr.mxu0 %v3108
      %3580 = vmatpush1.msra.mxu0 %v3107
      %3581 = vmatprep.subr.mxu0 %v3092
      %3582 = vmatpush1.msra.mxu0 %v3091
      %3583 = vmatprep.subr.mxu0 %v3076
      %3584 = vmatpush1.msra.mxu0 %v3075
      %3585 = vmatprep.subr.mxu0 %v3060
      %3586 = vmatpush1.msra.mxu0 %v3059
      %3587 = vmatprep.subr.mxu0 0.0
      %3588 = vmatpush2.msra.mxu0 0.0
      %3589 = vmatprep.subr.mxu0 0.0
      %3590 = vmatpush2.msra.mxu0 0.0
      %3591 = vmatprep.subr.mxu0 0.0
      %3592 = vmatpush2.msra.mxu0 0.0
      %3593 = vmatprep.subr.mxu0 0.0
      %3594 = vmatpush2.msra.mxu0 0.0
      %3595 = vmatprep.subr.mxu0 0.0
      %3596 = vmatpush2.msra.mxu0 0.0
      %3597 = vmatprep.subr.mxu0 0.0
      %3598 = vmatpush2.msra.mxu0 0.0
      %3599 = vmatprep.subr.mxu0 0.0
      %3600 = vmatpush2.msra.mxu0 0.0
      %3601 = vmatprep.subr.mxu0 0.0
      %3602 = vmatpush2.msra.mxu0 0.0
      %3603 = vmatprep.subr.mxu0 0.0
      %3604 = vmatpush2.msra.mxu0 0.0
      %3605 = vmatprep.subr.mxu0 0.0
      %3606 = vmatpush2.msra.mxu0 0.0
      %3607 = vmatprep.subr.mxu0 0.0
      %3608 = vmatpush2.msra.mxu0 0.0
      %3609 = vmatprep.subr.mxu0 0.0
      %3610 = vmatpush2.msra.mxu0 0.0
      %3611 = vmatprep.subr.mxu0 0.0
      %3612 = vmatpush2.msra.mxu0 0.0
      %3613 = vmatprep.subr.mxu0 0.0
      %3614 = vmatpush2.msra.mxu0 0.0
      %3615 = vmatprep.subr.mxu0 0.0
      %3616 = vmatpush2.msra.mxu0 0.0
      %3617 = vmatprep.subr.mxu0 0.0
      %3618 = vmatpush2.msra.mxu0 0.0
      %3619 = vmatprep.mubr.f32.mxu0 0.0
      %3620 = vmatmul.mubr.f32.gmra.mxu0 %v3198
      %v3621 = vpop.f32.mrf.mxu0
      %v3622 = vadd.f32 %v3160, %v3621
      %v3623 = vpop.f32.mrf.mxu0
      %v3624 = vadd.f32 %v3164, %v3623
      %3625 = vdwg.mxu0
      %3626 = vmatprep.subr.mxu0 0.0
      %3627 = vmatpush1.msra.mxu0 0.0
      %3628 = vmatprep.subr.mxu0 0.0
      %3629 = vmatpush1.msra.mxu0 0.0
      %3630 = vmatprep.subr.mxu0 0.0
      %3631 = vmatpush1.msra.mxu0 0.0
      %3632 = vmatprep.subr.mxu0 0.0
      %3633 = vmatpush1.msra.mxu0 0.0
      %3634 = vmatprep.subr.mxu0 0.0
      %3635 = vmatpush1.msra.mxu0 0.0
      %3636 = vmatprep.subr.mxu0 0.0
      %3637 = vmatpush1.msra.mxu0 0.0
      %3638 = vmatprep.subr.mxu0 0.0
      %3639 = vmatpush1.msra.mxu0 0.0
      %3640 = vmatprep.subr.mxu0 0.0
      %3641 = vmatpush1.msra.mxu0 0.0
      %3642 = vmatprep.subr.mxu0 0.0
      %3643 = vmatpush1.msra.mxu0 0.0
      %3644 = vmatprep.subr.mxu0 0.0
      %3645 = vmatpush1.msra.mxu0 0.0
      %3646 = vmatprep.subr.mxu0 0.0
      %3647 = vmatpush1.msra.mxu0 0.0
      %3648 = vmatprep.subr.mxu0 0.0
      %3649 = vmatpush1.msra.mxu0 0.0
      %3650 = vmatprep.subr.mxu0 %v3110
      %3651 = vmatpush1.msra.mxu0 %v3109
      %3652 = vmatprep.subr.mxu0 %v3094
      %3653 = vmatpush1.msra.mxu0 %v3093
      %3654 = vmatprep.subr.mxu0 %v3078
      %3655 = vmatpush1.msra.mxu0 %v3077
      %3656 = vmatprep.subr.mxu0 %v3062
      %3657 = vmatpush1.msra.mxu0 %v3061
      %3658 = vmatprep.subr.mxu0 0.0
      %3659 = vmatpush2.msra.mxu0 0.0
      %3660 = vmatprep.subr.mxu0 0.0
      %3661 = vmatpush2.msra.mxu0 0.0
      %3662 = vmatprep.subr.mxu0 0.0
      %3663 = vmatpush2.msra.mxu0 0.0
      %3664 = vmatprep.subr.mxu0 0.0
      %3665 = vmatpush2.msra.mxu0 0.0
      %3666 = vmatprep.subr.mxu0 0.0
      %3667 = vmatpush2.msra.mxu0 0.0
      %3668 = vmatprep.subr.mxu0 0.0
      %3669 = vmatpush2.msra.mxu0 0.0
      %3670 = vmatprep.subr.mxu0 0.0
      %3671 = vmatpush2.msra.mxu0 0.0
      %3672 = vmatprep.subr.mxu0 0.0
      %3673 = vmatpush2.msra.mxu0 0.0
      %3674 = vmatprep.subr.mxu0 0.0
      %3675 = vmatpush2.msra.mxu0 0.0
      %3676 = vmatprep.subr.mxu0 0.0
      %3677 = vmatpush2.msra.mxu0 0.0
      %3678 = vmatprep.subr.mxu0 0.0
      %3679 = vmatpush2.msra.mxu0 0.0
      %3680 = vmatprep.subr.mxu0 0.0
      %3681 = vmatpush2.msra.mxu0 0.0
      %3682 = vmatprep.subr.mxu0 0.0
      %3683 = vmatpush2.msra.mxu0 0.0
      %3684 = vmatprep.subr.mxu0 0.0
      %3685 = vmatpush2.msra.mxu0 0.0
      %3686 = vmatprep.subr.mxu0 0.0
      %3687 = vmatpush2.msra.mxu0 0.0
      %3688 = vmatprep.subr.mxu0 0.0
      %3689 = vmatpush2.msra.mxu0 0.0
      %3690 = vmatprep.mubr.f32.mxu0 0.0
      %3691 = vmatmul.mubr.f32.gmra.mxu0 %v3198
      %v3692 = vpop.f32.mrf.mxu0
      %v3693 = vadd.f32 %v3168, %v3692
      %v3694 = vpop.f32.mrf.mxu0
      %v3695 = vadd.f32 %v3172, %v3694
      %3696 = vdwg.mxu0
      %3697 = vmatprep.subr.mxu0 0.0
      %3698 = vmatpush1.msra.mxu0 0.0
      %3699 = vmatprep.subr.mxu0 0.0
      %3700 = vmatpush1.msra.mxu0 0.0
      %3701 = vmatprep.subr.mxu0 0.0
      %3702 = vmatpush1.msra.mxu0 0.0
      %3703 = vmatprep.subr.mxu0 0.0
      %3704 = vmatpush1.msra.mxu0 0.0
      %3705 = vmatprep.subr.mxu0 0.0
      %3706 = vmatpush1.msra.mxu0 0.0
      %3707 = vmatprep.subr.mxu0 0.0
      %3708 = vmatpush1.msra.mxu0 0.0
      %3709 = vmatprep.subr.mxu0 0.0
      %3710 = vmatpush1.msra.mxu0 0.0
      %3711 = vmatprep.subr.mxu0 0.0
      %3712 = vmatpush1.msra.mxu0 0.0
      %3713 = vmatprep.subr.mxu0 0.0
      %3714 = vmatpush1.msra.mxu0 0.0
      %3715 = vmatprep.subr.mxu0 0.0
      %3716 = vmatpush1.msra.mxu0 0.0
      %3717 = vmatprep.subr.mxu0 0.0
      %3718 = vmatpush1.msra.mxu0 0.0
      %3719 = vmatprep.subr.mxu0 0.0
      %3720 = vmatpush1.msra.mxu0 0.0
      %3721 = vmatprep.subr.mxu0 %v3112
      %3722 = vmatpush1.msra.mxu0 %v3111
      %3723 = vmatprep.subr.mxu0 %v3096
      %3724 = vmatpush1.msra.mxu0 %v3095
      %3725 = vmatprep.subr.mxu0 %v3080
      %3726 = vmatpush1.msra.mxu0 %v3079
      %3727 = vmatprep.subr.mxu0 %v3064
      %3728 = vmatpush1.msra.mxu0 %v3063
      %3729 = vmatprep.subr.mxu0 0.0
      %3730 = vmatpush2.msra.mxu0 0.0
      %3731 = vmatprep.subr.mxu0 0.0
      %3732 = vmatpush2.msra.mxu0 0.0
      %3733 = vmatprep.subr.mxu0 0.0
      %3734 = vmatpush2.msra.mxu0 0.0
      %3735 = vmatprep.subr.mxu0 0.0
      %3736 = vmatpush2.msra.mxu0 0.0
      %3737 = vmatprep.subr.mxu0 0.0
      %3738 = vmatpush2.msra.mxu0 0.0
      %3739 = vmatprep.subr.mxu0 0.0
      %3740 = vmatpush2.msra.mxu0 0.0
      %3741 = vmatprep.subr.mxu0 0.0
      %3742 = vmatpush2.msra.mxu0 0.0
      %3743 = vmatprep.subr.mxu0 0.0
      %3744 = vmatpush2.msra.mxu0 0.0
      %3745 = vmatprep.subr.mxu0 0.0
      %3746 = vmatpush2.msra.mxu0 0.0
      %3747 = vmatprep.subr.mxu0 0.0
      %3748 = vmatpush2.msra.mxu0 0.0
      %3749 = vmatprep.subr.mxu0 0.0
      %3750 = vmatpush2.msra.mxu0 0.0
      %3751 = vmatprep.subr.mxu0 0.0
      %3752 = vmatpush2.msra.mxu0 0.0
      %3753 = vmatprep.subr.mxu0 0.0
      %3754 = vmatpush2.msra.mxu0 0.0
      %3755 = vmatprep.subr.mxu0 0.0
      %3756 = vmatpush2.msra.mxu0 0.0
      %3757 = vmatprep.subr.mxu0 0.0
      %3758 = vmatpush2.msra.mxu0 0.0
      %3759 = vmatprep.subr.mxu0 0.0
      %3760 = vmatpush2.msra.mxu0 0.0
      %3761 = vmatprep.mubr.f32.mxu0 0.0
      %3762 = vmatmul.mubr.f32.gmra.mxu0 %v3198
      %v3763 = vpop.f32.mrf.mxu0
      %v3764 = vadd.f32 %v3176, %v3763
      %v3765 = vpop.f32.mrf.mxu0
      %v3766 = vadd.f32 %v3180, %v3765
      %3767 = vdwg.mxu0
      %v3768 = vmax.f32 %v3267, 0.0
      %v3769 = vmax.f32 %v3269, 0.0
      %v3770 = vmax.f32 %v3338, 0.0
      %v3771 = vmax.f32 %v3340, 0.0
      %v3772 = vmax.f32 %v3409, 0.0
      %v3773 = vmax.f32 %v3411, 0.0
      %v3774 = vmax.f32 %v3480, 0.0
      %v3775 = vmax.f32 %v3482, 0.0
      %v3776 = vmax.f32 %v3551, 0.0
      %v3777 = vmax.f32 %v3553, 0.0
      %v3778 = vmax.f32 %v3622, 0.0
      %v3779 = vmax.f32 %v3624, 0.0
      %v3780 = vmax.f32 %v3693, 0.0
      %v3781 = vmax.f32 %v3695, 0.0
      %v3782 = vmax.f32 %v3764, 0.0
      %v3783 = vmax.f32 %v3766, 0.0
      %v3784 = vld [vmem:[%s15] sm:$0xff]
      %v3785 = vld [vmem:[%s15 + $0x8] sm:$0xff]
      %v3786 = vld [vmem:[%s15 + $0x10] sm:$0xff]
      %v3787 = vld [vmem:[%s15 + $0x18] sm:$0xff]
      %v3788 = vld [vmem:[%s15 + $0x20] sm:$0xff]
      %v3789 = vld [vmem:[%s15 + $0x28] sm:$0xff]
      %v3790 = vld [vmem:[%s15 + $0x30] sm:$0xff]
      %v3791 = vld [vmem:[%s15 + $0x38] sm:$0xff]
      %v3792 = vld [vmem:[%s15 + $0x40] sm:$0xff]
      %v3793 = vld [vmem:[%s15 + $0x48] sm:$0xff]
      %v3794 = vld [vmem:[%s15 + $0x50] sm:$0xff]
      %v3795 = vld [vmem:[%s15 + $0x58] sm:$0xff]
      %v3796 = vld [vmem:[%s15 + $0x60] sm:$0xff]
      %v3797 = vld [vmem:[%s15 + $0x68] sm:$0xff]
      %v3798 = vld [vmem:[%s15 + $0x70] sm:$0xff]
      %v3799 = vld [vmem:[%s15 + $0x78] sm:$0xff]
      %v3800 = vld [vmem:[%s15 + $0x80] sm:$0xff]
      %v3801 = vld [vmem:[%s15 + $0x88] sm:$0xff]
      %v3802 = vld [vmem:[%s15 + $0x90] sm:$0xff]
      %v3803 = vld [vmem:[%s15 + $0x98] sm:$0xff]
      %v3804 = vld [vmem:[%s15 + $0xa0] sm:$0xff]
      %v3805 = vld [vmem:[%s15 + $0xa8] sm:$0xff]
      %v3806 = vld [vmem:[%s15 + $0xb0] sm:$0xff]
      %v3807 = vld [vmem:[%s15 + $0xb8] sm:$0xff]
      %v3808 = vld [vmem:[%s15 + $0xc0] sm:$0xff]
      %v3809 = vld [vmem:[%s15 + $0xc8] sm:$0xff]
      %v3810 = vld [vmem:[%s15 + $0xd0] sm:$0xff]
      %v3811 = vld [vmem:[%s15 + $0xd8] sm:$0xff]
      %v3812 = vld [vmem:[%s15 + $0xe0] sm:$0xff]
      %v3813 = vld [vmem:[%s15 + $0xe8] sm:$0xff]
      %v3814 = vld [vmem:[%s15 + $0xf0] sm:$0xff]
      %v3815 = vld [vmem:[%s15 + $0xf8] sm:$0xff]
      %v3816 = vld [vmem:[%s15 + $0x100] sm:$0xff]
      %v3817 = vld [vmem:[%s15 + $0x108] sm:$0xff]
      %v3818 = vld [vmem:[%s15 + $0x110] sm:$0xff]
      %v3819 = vld [vmem:[%s15 + $0x118] sm:$0xff]
      %v3820 = vld [vmem:[%s15 + $0x120] sm:$0xff]
      %v3821 = vld [vmem:[%s15 + $0x128] sm:$0xff]
      %v3822 = vld [vmem:[%s15 + $0x130] sm:$0xff]
      %v3823 = vld [vmem:[%s15 + $0x138] sm:$0xff]
      %v3824 = vld [vmem:[%s15 + $0x140] sm:$0xff]
      %v3825 = vld [vmem:[%s15 + $0x148] sm:$0xff]
      %v3826 = vld [vmem:[%s15 + $0x150] sm:$0xff]
      %v3827 = vld [vmem:[%s15 + $0x158] sm:$0xff]
      %v3828 = vld [vmem:[%s15 + $0x160] sm:$0xff]
      %v3829 = vld [vmem:[%s15 + $0x168] sm:$0xff]
      %v3830 = vld [vmem:[%s15 + $0x170] sm:$0xff]
      %v3831 = vld [vmem:[%s15 + $0x178] sm:$0xff]
      %v3832 = vld [vmem:[%s15 + $0x180] sm:$0xff]
      %v3833 = vld [vmem:[%s15 + $0x188] sm:$0xff]
      %v3834 = vld [vmem:[%s15 + $0x190] sm:$0xff]
      %v3835 = vld [vmem:[%s15 + $0x198] sm:$0xff]
      %v3836 = vld [vmem:[%s15 + $0x1a0] sm:$0xff]
      %v3837 = vld [vmem:[%s15 + $0x1a8] sm:$0xff]
      %v3838 = vld [vmem:[%s15 + $0x1b0] sm:$0xff]
      %v3839 = vld [vmem:[%s15 + $0x1b8] sm:$0xff]
      %v3840 = vld [vmem:[%s15 + $0x1c0] sm:$0xff]
      %v3841 = vld [vmem:[%s15 + $0x1c8] sm:$0xff]
      %v3842 = vld [vmem:[%s15 + $0x1d0] sm:$0xff]
      %v3843 = vld [vmem:[%s15 + $0x1d8] sm:$0xff]
      %v3844 = vld [vmem:[%s15 + $0x1e0] sm:$0xff]
      %v3845 = vld [vmem:[%s15 + $0x1e8] sm:$0xff]
      %v3846 = vld [vmem:[%s15 + $0x1f0] sm:$0xff]
      %v3847 = vld [vmem:[%s15 + $0x1f8] sm:$0xff]
      %v3848 = vld [vmem:[%s15 + $0x200] sm:$0xff]
      %v3849 = vld [vmem:[%s15 + $0x208] sm:$0xff]
      %v3850 = vld [vmem:[%s15 + $0x210] sm:$0xff]
      %v3851 = vld [vmem:[%s15 + $0x218] sm:$0xff]
      %v3852 = vld [vmem:[%s15 + $0x220] sm:$0xff]
      %v3853 = vld [vmem:[%s15 + $0x228] sm:$0xff]
      %v3854 = vld [vmem:[%s15 + $0x230] sm:$0xff]
      %v3855 = vld [vmem:[%s15 + $0x238] sm:$0xff]
      %v3856 = vld [vmem:[%s15 + $0x240] sm:$0xff]
      %v3857 = vld [vmem:[%s15 + $0x248] sm:$0xff]
      %v3858 = vld [vmem:[%s15 + $0x250] sm:$0xff]
      %v3859 = vld [vmem:[%s15 + $0x258] sm:$0xff]
      %v3860 = vld [vmem:[%s15 + $0x260] sm:$0xff]
      %v3861 = vld [vmem:[%s15 + $0x268] sm:$0xff]
      %v3862 = vld [vmem:[%s15 + $0x270] sm:$0xff]
      %v3863 = vld [vmem:[%s15 + $0x278] sm:$0xff]
      %v3864 = vld [vmem:[%s15 + $0x280] sm:$0xff]
      %v3865 = vld [vmem:[%s15 + $0x288] sm:$0xff]
      %v3866 = vld [vmem:[%s15 + $0x290] sm:$0xff]
      %v3867 = vld [vmem:[%s15 + $0x298] sm:$0xff]
      %v3868 = vld [vmem:[%s15 + $0x2a0] sm:$0xff]
      %v3869 = vld [vmem:[%s15 + $0x2a8] sm:$0xff]
      %v3870 = vld [vmem:[%s15 + $0x2b0] sm:$0xff]
      %v3871 = vld [vmem:[%s15 + $0x2b8] sm:$0xff]
      %v3872 = vld [vmem:[%s15 + $0x2c0] sm:$0xff]
      %v3873 = vld [vmem:[%s15 + $0x2c8] sm:$0xff]
      %v3874 = vld [vmem:[%s15 + $0x2d0] sm:$0xff]
      %v3875 = vld [vmem:[%s15 + $0x2d8] sm:$0xff]
      %v3876 = vld [vmem:[%s15 + $0x2e0] sm:$0xff]
      %v3877 = vld [vmem:[%s15 + $0x2e8] sm:$0xff]
      %v3878 = vld [vmem:[%s15 + $0x2f0] sm:$0xff]
      %v3879 = vld [vmem:[%s15 + $0x2f8] sm:$0xff]
      %v3880 = vld [vmem:[%s15 + $0x300] sm:$0xff]
      %v3881 = vld [vmem:[%s15 + $0x308] sm:$0xff]
      %v3882 = vld [vmem:[%s15 + $0x310] sm:$0xff]
      %v3883 = vld [vmem:[%s15 + $0x318] sm:$0xff]
      %v3884 = vld [vmem:[%s15 + $0x320] sm:$0xff]
      %v3885 = vld [vmem:[%s15 + $0x328] sm:$0xff]
      %v3886 = vld [vmem:[%s15 + $0x330] sm:$0xff]
      %v3887 = vld [vmem:[%s15 + $0x338] sm:$0xff]
      %v3888 = vld [vmem:[%s15 + $0x340] sm:$0xff]
      %v3889 = vld [vmem:[%s15 + $0x348] sm:$0xff]
      %v3890 = vld [vmem:[%s15 + $0x350] sm:$0xff]
      %v3891 = vld [vmem:[%s15 + $0x358] sm:$0xff]
      %v3892 = vld [vmem:[%s15 + $0x360] sm:$0xff]
      %v3893 = vld [vmem:[%s15 + $0x368] sm:$0xff]
      %v3894 = vld [vmem:[%s15 + $0x370] sm:$0xff]
      %v3895 = vld [vmem:[%s15 + $0x378] sm:$0xff]
      %v3896 = vld [vmem:[%s15 + $0x380] sm:$0xff]
      %v3897 = vld [vmem:[%s15 + $0x388] sm:$0xff]
      %v3898 = vld [vmem:[%s15 + $0x390] sm:$0xff]
      %v3899 = vld [vmem:[%s15 + $0x398] sm:$0xff]
      %v3900 = vld [vmem:[%s15 + $0x3a0] sm:$0xff]
      %v3901 = vld [vmem:[%s15 + $0x3a8] sm:$0xff]
      %v3902 = vld [vmem:[%s15 + $0x3b0] sm:$0xff]
      %v3903 = vld [vmem:[%s15 + $0x3b8] sm:$0xff]
      %v3904 = vld [vmem:[%s15 + $0x3c0] sm:$0xff]
      %v3905 = vld [vmem:[%s15 + $0x3c8] sm:$0xff]
      %v3906 = vld [vmem:[%s15 + $0x3d0] sm:$0xff]
      %v3907 = vld [vmem:[%s15 + $0x3d8] sm:$0xff]
      %v3908 = vld [vmem:[%s15 + $0x3e0] sm:$0xff]
      %v3909 = vld [vmem:[%s15 + $0x3e8] sm:$0xff]
      %v3910 = vld [vmem:[%s15 + $0x3f0] sm:$0xff]
      %v3911 = vld [vmem:[%s15 + $0x3f8] sm:$0xff]
      %v3912 = vld [vmem:[%s15 + $0x400] sm:$0xff]
      %v3913 = vld [vmem:[%s15 + $0x408] sm:$0xff]
      %v3914 = vld [vmem:[%s15 + $0x410] sm:$0xff]
      %v3915 = vld [vmem:[%s15 + $0x418] sm:$0xff]
      %v3916 = vld [vmem:[%s15 + $0x420] sm:$0xff]
      %v3917 = vld [vmem:[%s15 + $0x428] sm:$0xff]
      %v3918 = vld [vmem:[%s15 + $0x430] sm:$0xff]
      %v3919 = vld [vmem:[%s15 + $0x438] sm:$0xff]
      %v3920 = vld [vmem:[%s15 + $0x440] sm:$0xff]
      %v3921 = vld [vmem:[%s15 + $0x448] sm:$0xff]
      %v3922 = vld [vmem:[%s15 + $0x450] sm:$0xff]
      %v3923 = vld [vmem:[%s15 + $0x458] sm:$0xff]
      %v3924 = vld [vmem:[%s15 + $0x460] sm:$0xff]
      %v3925 = vld [vmem:[%s15 + $0x468] sm:$0xff]
      %v3926 = vld [vmem:[%s15 + $0x470] sm:$0xff]
      %v3927 = vld [vmem:[%s15 + $0x478] sm:$0xff]
      %v3928 = vld [vmem:[%s15 + $0x480] sm:$0xff]
      %v3929 = vld [vmem:[%s15 + $0x488] sm:$0xff]
      %v3930 = vld [vmem:[%s15 + $0x490] sm:$0xff]
      %v3931 = vld [vmem:[%s15 + $0x498] sm:$0xff]
      %v3932 = vld [vmem:[%s15 + $0x4a0] sm:$0xff]
      %v3933 = vld [vmem:[%s15 + $0x4a8] sm:$0xff]
      %v3934 = vld [vmem:[%s15 + $0x4b0] sm:$0xff]
      %v3935 = vld [vmem:[%s15 + $0x4b8] sm:$0xff]
      %v3936 = vld [vmem:[%s15 + $0x4c0] sm:$0xff]
      %v3937 = vld [vmem:[%s15 + $0x4c8] sm:$0xff]
      %v3938 = vld [vmem:[%s15 + $0x4d0] sm:$0xff]
      %v3939 = vld [vmem:[%s15 + $0x4d8] sm:$0xff]
      %v3940 = vld [vmem:[%s15 + $0x4e0] sm:$0xff]
      %v3941 = vld [vmem:[%s15 + $0x4e8] sm:$0xff]
      %v3942 = vld [vmem:[%s15 + $0x4f0] sm:$0xff]
      %v3943 = vld [vmem:[%s15 + $0x4f8] sm:$0xff]
      %v3944 = vld [vmem:[%s15 + $0x500] sm:$0xff]
      %v3945 = vld [vmem:[%s15 + $0x508] sm:$0xff]
      %v3946 = vld [vmem:[%s15 + $0x510] sm:$0xff]
      %v3947 = vld [vmem:[%s15 + $0x518] sm:$0xff]
      %v3948 = vld [vmem:[%s15 + $0x520] sm:$0xff]
      %v3949 = vld [vmem:[%s15 + $0x528] sm:$0xff]
      %v3950 = vld [vmem:[%s15 + $0x530] sm:$0xff]
      %v3951 = vld [vmem:[%s15 + $0x538] sm:$0xff]
      %v3952 = vld [vmem:[%s15 + $0x540] sm:$0xff]
      %v3953 = vld [vmem:[%s15 + $0x548] sm:$0xff]
      %v3954 = vld [vmem:[%s15 + $0x550] sm:$0xff]
      %v3955 = vld [vmem:[%s15 + $0x558] sm:$0xff]
      %v3956 = vld [vmem:[%s15 + $0x560] sm:$0xff]
      %v3957 = vld [vmem:[%s15 + $0x568] sm:$0xff]
      %v3958 = vld [vmem:[%s15 + $0x570] sm:$0xff]
      %v3959 = vld [vmem:[%s15 + $0x578] sm:$0xff]
      %v3960 = vld [vmem:[%s15 + $0x580] sm:$0xff]
      %v3961 = vld [vmem:[%s15 + $0x588] sm:$0xff]
      %v3962 = vld [vmem:[%s15 + $0x590] sm:$0xff]
      %v3963 = vld [vmem:[%s15 + $0x598] sm:$0xff]
      %v3964 = vld [vmem:[%s15 + $0x5a0] sm:$0xff]
      %v3965 = vld [vmem:[%s15 + $0x5a8] sm:$0xff]
      %v3966 = vld [vmem:[%s15 + $0x5b0] sm:$0xff]
      %v3967 = vld [vmem:[%s15 + $0x5b8] sm:$0xff]
      %v3968 = vld [vmem:[%s15 + $0x5c0] sm:$0xff]
      %v3969 = vld [vmem:[%s15 + $0x5c8] sm:$0xff]
      %v3970 = vld [vmem:[%s15 + $0x5d0] sm:$0xff]
      %v3971 = vld [vmem:[%s15 + $0x5d8] sm:$0xff]
      %v3972 = vld [vmem:[%s15 + $0x5e0] sm:$0xff]
      %v3973 = vld [vmem:[%s15 + $0x5e8] sm:$0xff]
      %v3974 = vld [vmem:[%s15 + $0x5f0] sm:$0xff]
      %v3975 = vld [vmem:[%s15 + $0x5f8] sm:$0xff]
      %v3976 = vld [vmem:[%s15 + $0x600] sm:$0xff]
      %v3977 = vld [vmem:[%s15 + $0x608] sm:$0xff]
      %v3978 = vld [vmem:[%s15 + $0x610] sm:$0xff]
      %v3979 = vld [vmem:[%s15 + $0x618] sm:$0xff]
      %v3980 = vld [vmem:[%s15 + $0x620] sm:$0xff]
      %v3981 = vld [vmem:[%s15 + $0x628] sm:$0xff]
      %v3982 = vld [vmem:[%s15 + $0x630] sm:$0xff]
      %v3983 = vld [vmem:[%s15 + $0x638] sm:$0xff]
      %v3984 = vld [vmem:[%s15 + $0x640] sm:$0xff]
      %v3985 = vld [vmem:[%s15 + $0x648] sm:$0xff]
      %v3986 = vld [vmem:[%s15 + $0x650] sm:$0xff]
      %v3987 = vld [vmem:[%s15 + $0x658] sm:$0xff]
      %v3988 = vld [vmem:[%s15 + $0x660] sm:$0xff]
      %v3989 = vld [vmem:[%s15 + $0x668] sm:$0xff]
      %v3990 = vld [vmem:[%s15 + $0x670] sm:$0xff]
      %v3991 = vld [vmem:[%s15 + $0x678] sm:$0xff]
      %v3992 = vld [vmem:[%s15 + $0x680] sm:$0xff]
      %v3993 = vld [vmem:[%s15 + $0x688] sm:$0xff]
      %v3994 = vld [vmem:[%s15 + $0x690] sm:$0xff]
      %v3995 = vld [vmem:[%s15 + $0x698] sm:$0xff]
      %v3996 = vld [vmem:[%s15 + $0x6a0] sm:$0xff]
      %v3997 = vld [vmem:[%s15 + $0x6a8] sm:$0xff]
      %v3998 = vld [vmem:[%s15 + $0x6b0] sm:$0xff]
      %v3999 = vld [vmem:[%s15 + $0x6b8] sm:$0xff]
      %v4000 = vld [vmem:[%s15 + $0x6c0] sm:$0xff]
      %v4001 = vld [vmem:[%s15 + $0x6c8] sm:$0xff]
      %v4002 = vld [vmem:[%s15 + $0x6d0] sm:$0xff]
      %v4003 = vld [vmem:[%s15 + $0x6d8] sm:$0xff]
      %v4004 = vld [vmem:[%s15 + $0x6e0] sm:$0xff]
      %v4005 = vld [vmem:[%s15 + $0x6e8] sm:$0xff]
      %v4006 = vld [vmem:[%s15 + $0x6f0] sm:$0xff]
      %v4007 = vld [vmem:[%s15 + $0x6f8] sm:$0xff]
      %v4008 = vld [vmem:[%s15 + $0x700] sm:$0xff]
      %v4009 = vld [vmem:[%s15 + $0x708] sm:$0xff]
      %v4010 = vld [vmem:[%s15 + $0x710] sm:$0xff]
      %v4011 = vld [vmem:[%s15 + $0x718] sm:$0xff]
      %v4012 = vld [vmem:[%s15 + $0x720] sm:$0xff]
      %v4013 = vld [vmem:[%s15 + $0x728] sm:$0xff]
      %v4014 = vld [vmem:[%s15 + $0x730] sm:$0xff]
      %v4015 = vld [vmem:[%s15 + $0x738] sm:$0xff]
      %v4016 = vld [vmem:[%s15 + $0x740] sm:$0xff]
      %v4017 = vld [vmem:[%s15 + $0x748] sm:$0xff]
      %v4018 = vld [vmem:[%s15 + $0x750] sm:$0xff]
      %v4019 = vld [vmem:[%s15 + $0x758] sm:$0xff]
      %v4020 = vld [vmem:[%s15 + $0x760] sm:$0xff]
      %v4021 = vld [vmem:[%s15 + $0x768] sm:$0xff]
      %v4022 = vld [vmem:[%s15 + $0x770] sm:$0xff]
      %v4023 = vld [vmem:[%s15 + $0x778] sm:$0xff]
      %v4024 = vld [vmem:[%s15 + $0x780] sm:$0xff]
      %v4025 = vld [vmem:[%s15 + $0x788] sm:$0xff]
      %v4026 = vld [vmem:[%s15 + $0x790] sm:$0xff]
      %v4027 = vld [vmem:[%s15 + $0x798] sm:$0xff]
      %v4028 = vld [vmem:[%s15 + $0x7a0] sm:$0xff]
      %v4029 = vld [vmem:[%s15 + $0x7a8] sm:$0xff]
      %v4030 = vld [vmem:[%s15 + $0x7b0] sm:$0xff]
      %v4031 = vld [vmem:[%s15 + $0x7b8] sm:$0xff]
      %v4032 = vld [vmem:[%s15 + $0x7c0] sm:$0xff]
      %v4033 = vld [vmem:[%s15 + $0x7c8] sm:$0xff]
      %v4034 = vld [vmem:[%s15 + $0x7d0] sm:$0xff]
      %v4035 = vld [vmem:[%s15 + $0x7d8] sm:$0xff]
      %v4036 = vld [vmem:[%s15 + $0x7e0] sm:$0xff]
      %v4037 = vld [vmem:[%s15 + $0x7e8] sm:$0xff]
      %v4038 = vld [vmem:[%s15 + $0x7f0] sm:$0xff]
      %v4039 = vld [vmem:[%s15 + $0x7f8] sm:$0xff]
      %v4040 = vld [vmem:[%s16] sm:$0x1]
      %v4042 = vlaneseq
      %v4043 = vshrl.u32 %v4042, 7
      %v4044 = vsub.s32 0, %v4043
      %v4045 = vrot.slane %v4040, %v4044
      %4047 = vmatprep.subr.mxu0 0.0
      %4048 = vmatpush1.msra.mxu0 %v3799
      %4049 = vmatprep.subr.mxu0 0.0
      %4050 = vmatpush1.msra.mxu0 %v3798
      %4051 = vmatprep.subr.mxu0 0.0
      %4052 = vmatpush1.msra.mxu0 %v3797
      %4053 = vmatprep.subr.mxu0 0.0
      %4054 = vmatpush1.msra.mxu0 %v3796
      %4055 = vmatprep.subr.mxu0 0.0
      %4056 = vmatpush1.msra.mxu0 %v3795
      %4057 = vmatprep.subr.mxu0 0.0
      %4058 = vmatpush1.msra.mxu0 %v3794
      %4059 = vmatprep.subr.mxu0 0.0
      %4060 = vmatpush1.msra.mxu0 %v3793
      %4061 = vmatprep.subr.mxu0 0.0
      %4062 = vmatpush1.msra.mxu0 %v3792
      %4063 = vmatprep.subr.mxu0 0.0
      %4064 = vmatpush1.msra.mxu0 %v3791
      %4065 = vmatprep.subr.mxu0 0.0
      %4066 = vmatpush1.msra.mxu0 %v3790
      %4067 = vmatprep.subr.mxu0 0.0
      %4068 = vmatpush1.msra.mxu0 %v3789
      %4069 = vmatprep.subr.mxu0 0.0
      %4070 = vmatpush1.msra.mxu0 %v3788
      %4071 = vmatprep.subr.mxu0 0.0
      %4072 = vmatpush1.msra.mxu0 %v3787
      %4073 = vmatprep.subr.mxu0 0.0
      %4074 = vmatpush1.msra.mxu0 %v3786
      %4075 = vmatprep.subr.mxu0 0.0
      %4076 = vmatpush1.msra.mxu0 %v3785
      %4077 = vmatprep.subr.mxu0 0.0
      %4078 = vmatpush1.msra.mxu0 %v3784
      %4079 = vmatprep.subr.mxu0 0.0
      %4080 = vmatpush2.msra.mxu0 %v3815
      %4081 = vmatprep.subr.mxu0 0.0
      %4082 = vmatpush2.msra.mxu0 %v3814
      %4083 = vmatprep.subr.mxu0 0.0
      %4084 = vmatpush2.msra.mxu0 %v3813
      %4085 = vmatprep.subr.mxu0 0.0
      %4086 = vmatpush2.msra.mxu0 %v3812
      %4087 = vmatprep.subr.mxu0 0.0
      %4088 = vmatpush2.msra.mxu0 %v3811
      %4089 = vmatprep.subr.mxu0 0.0
      %4090 = vmatpush2.msra.mxu0 %v3810
      %4091 = vmatprep.subr.mxu0 0.0
      %4092 = vmatpush2.msra.mxu0 %v3809
      %4093 = vmatprep.subr.mxu0 0.0
      %4094 = vmatpush2.msra.mxu0 %v3808
      %4095 = vmatprep.subr.mxu0 0.0
      %4096 = vmatpush2.msra.mxu0 %v3807
      %4097 = vmatprep.subr.mxu0 0.0
      %4098 = vmatpush2.msra.mxu0 %v3806
      %4099 = vmatprep.subr.mxu0 0.0
      %4100 = vmatpush2.msra.mxu0 %v3805
      %4101 = vmatprep.subr.mxu0 0.0
      %4102 = vmatpush2.msra.mxu0 %v3804
      %4103 = vmatprep.subr.mxu0 0.0
      %4104 = vmatpush2.msra.mxu0 %v3803
      %4105 = vmatprep.subr.mxu0 0.0
      %4106 = vmatpush2.msra.mxu0 %v3802
      %4107 = vmatprep.subr.mxu0 0.0
      %4108 = vmatpush2.msra.mxu0 %v3801
      %4109 = vmatprep.subr.mxu0 0.0
      %4110 = vmatpush2.msra.mxu0 %v3800
      %4111 = vmatprep.mubr.f32.mxu0 %v3769
      %4112 = vmatmul.mubr.f32.gmra.mxu0 %v3768
      %v4113 = vpop.f32.mrf.mxu0
      %v4114 = vadd.f32 %v4045, %v4113
      %v4115 = vpop.f32.mrf.mxu0
      %4116 = vdwg.mxu0
      %4117 = vmatprep.subr.mxu0 0.0
      %4118 = vmatpush1.msra.mxu0 %v3831
      %4119 = vmatprep.subr.mxu0 0.0
      %4120 = vmatpush1.msra.mxu0 %v3830
      %4121 = vmatprep.subr.mxu0 0.0
      %4122 = vmatpush1.msra.mxu0 %v3829
      %4123 = vmatprep.subr.mxu0 0.0
      %4124 = vmatpush1.msra.mxu0 %v3828
      %4125 = vmatprep.subr.mxu0 0.0
      %4126 = vmatpush1.msra.mxu0 %v3827
      %4127 = vmatprep.subr.mxu0 0.0
      %4128 = vmatpush1.msra.mxu0 %v3826
      %4129 = vmatprep.subr.mxu0 0.0
      %4130 = vmatpush1.msra.mxu0 %v3825
      %4131 = vmatprep.subr.mxu0 0.0
      %4132 = vmatpush1.msra.mxu0 %v3824
      %4133 = vmatprep.subr.mxu0 0.0
      %4134 = vmatpush1.msra.mxu0 %v3823
      %4135 = vmatprep.subr.mxu0 0.0
      %4136 = vmatpush1.msra.mxu0 %v3822
      %4137 = vmatprep.subr.mxu0 0.0
      %4138 = vmatpush1.msra.mxu0 %v3821
      %4139 = vmatprep.subr.mxu0 0.0
      %4140 = vmatpush1.msra.mxu0 %v3820
      %4141 = vmatprep.subr.mxu0 0.0
      %4142 = vmatpush1.msra.mxu0 %v3819
      %4143 = vmatprep.subr.mxu0 0.0
      %4144 = vmatpush1.msra.mxu0 %v3818
      %4145 = vmatprep.subr.mxu0 0.0
      %4146 = vmatpush1.msra.mxu0 %v3817
      %4147 = vmatprep.subr.mxu0 0.0
      %4148 = vmatpush1.msra.mxu0 %v3816
      %4149 = vmatprep.subr.mxu0 0.0
      %4150 = vmatpush2.msra.mxu0 %v3847
      %4151 = vmatprep.subr.mxu0 0.0
      %4152 = vmatpush2.msra.mxu0 %v3846
      %4153 = vmatprep.subr.mxu0 0.0
      %4154 = vmatpush2.msra.mxu0 %v3845
      %4155 = vmatprep.subr.mxu0 0.0
      %4156 = vmatpush2.msra.mxu0 %v3844
      %4157 = vmatprep.subr.mxu0 0.0
      %4158 = vmatpush2.msra.mxu0 %v3843
      %4159 = vmatprep.subr.mxu0 0.0
      %4160 = vmatpush2.msra.mxu0 %v3842
      %4161 = vmatprep.subr.mxu0 0.0
      %4162 = vmatpush2.msra.mxu0 %v3841
      %4163 = vmatprep.subr.mxu0 0.0
      %4164 = vmatpush2.msra.mxu0 %v3840
      %4165 = vmatprep.subr.mxu0 0.0
      %4166 = vmatpush2.msra.mxu0 %v3839
      %4167 = vmatprep.subr.mxu0 0.0
      %4168 = vmatpush2.msra.mxu0 %v3838
      %4169 = vmatprep.subr.mxu0 0.0
      %4170 = vmatpush2.msra.mxu0 %v3837
      %4171 = vmatprep.subr.mxu0 0.0
      %4172 = vmatpush2.msra.mxu0 %v3836
      %4173 = vmatprep.subr.mxu0 0.0
      %4174 = vmatpush2.msra.mxu0 %v3835
      %4175 = vmatprep.subr.mxu0 0.0
      %4176 = vmatpush2.msra.mxu0 %v3834
      %4177 = vmatprep.subr.mxu0 0.0
      %4178 = vmatpush2.msra.mxu0 %v3833
      %4179 = vmatprep.subr.mxu0 0.0
      %4180 = vmatpush2.msra.mxu0 %v3832
      %4181 = vmatprep.mubr.f32.mxu0 %v3771
      %4182 = vmatmul.mubr.f32.gmra.mxu0 %v3770
      %v4183 = vpop.f32.mrf.mxu0
      %v4184 = vadd.f32 %v4114, %v4183
      %v4185 = vpop.f32.mrf.mxu0
      %4186 = vdwg.mxu0
      %4187 = vmatprep.subr.mxu0 0.0
      %4188 = vmatpush1.msra.mxu0 %v3863
      %4189 = vmatprep.subr.mxu0 0.0
      %4190 = vmatpush1.msra.mxu0 %v3862
      %4191 = vmatprep.subr.mxu0 0.0
      %4192 = vmatpush1.msra.mxu0 %v3861
      %4193 = vmatprep.subr.mxu0 0.0
      %4194 = vmatpush1.msra.mxu0 %v3860
      %4195 = vmatprep.subr.mxu0 0.0
      %4196 = vmatpush1.msra.mxu0 %v3859
      %4197 = vmatprep.subr.mxu0 0.0
      %4198 = vmatpush1.msra.mxu0 %v3858
      %4199 = vmatprep.subr.mxu0 0.0
      %4200 = vmatpush1.msra.mxu0 %v3857
      %4201 = vmatprep.subr.mxu0 0.0
      %4202 = vmatpush1.msra.mxu0 %v3856
      %4203 = vmatprep.subr.mxu0 0.0
      %4204 = vmatpush1.msra.mxu0 %v3855
      %4205 = vmatprep.subr.mxu0 0.0
      %4206 = vmatpush1.msra.mxu0 %v3854
      %4207 = vmatprep.subr.mxu0 0.0
      %4208 = vmatpush1.msra.mxu0 %v3853
      %4209 = vmatprep.subr.mxu0 0.0
      %4210 = vmatpush1.msra.mxu0 %v3852
      %4211 = vmatprep.subr.mxu0 0.0
      %4212 = vmatpush1.msra.mxu0 %v3851
      %4213 = vmatprep.subr.mxu0 0.0
      %4214 = vmatpush1.msra.mxu0 %v3850
      %4215 = vmatprep.subr.mxu0 0.0
      %4216 = vmatpush1.msra.mxu0 %v3849
      %4217 = vmatprep.subr.mxu0 0.0
      %4218 = vmatpush1.msra.mxu0 %v3848
      %4219 = vmatprep.subr.mxu0 0.0
      %4220 = vmatpush2.msra.mxu0 %v3879
      %4221 = vmatprep.subr.mxu0 0.0
      %4222 = vmatpush2.msra.mxu0 %v3878
      %4223 = vmatprep.subr.mxu0 0.0
      %4224 = vmatpush2.msra.mxu0 %v3877
      %4225 = vmatprep.subr.mxu0 0.0
      %4226 = vmatpush2.msra.mxu0 %v3876
      %4227 = vmatprep.subr.mxu0 0.0
      %4228 = vmatpush2.msra.mxu0 %v3875
      %4229 = vmatprep.subr.mxu0 0.0
      %4230 = vmatpush2.msra.mxu0 %v3874
      %4231 = vmatprep.subr.mxu0 0.0
      %4232 = vmatpush2.msra.mxu0 %v3873
      %4233 = vmatprep.subr.mxu0 0.0
      %4234 = vmatpush2.msra.mxu0 %v3872
      %4235 = vmatprep.subr.mxu0 0.0
      %4236 = vmatpush2.msra.mxu0 %v3871
      %4237 = vmatprep.subr.mxu0 0.0
      %4238 = vmatpush2.msra.mxu0 %v3870
      %4239 = vmatprep.subr.mxu0 0.0
      %4240 = vmatpush2.msra.mxu0 %v3869
      %4241 = vmatprep.subr.mxu0 0.0
      %4242 = vmatpush2.msra.mxu0 %v3868
      %4243 = vmatprep.subr.mxu0 0.0
      %4244 = vmatpush2.msra.mxu0 %v3867
      %4245 = vmatprep.subr.mxu0 0.0
      %4246 = vmatpush2.msra.mxu0 %v3866
      %4247 = vmatprep.subr.mxu0 0.0
      %4248 = vmatpush2.msra.mxu0 %v3865
      %4249 = vmatprep.subr.mxu0 0.0
      %4250 = vmatpush2.msra.mxu0 %v3864
      %4251 = vmatprep.mubr.f32.mxu0 %v3773
      %4252 = vmatmul.mubr.f32.gmra.mxu0 %v3772
      %v4253 = vpop.f32.mrf.mxu0
      %v4254 = vadd.f32 %v4184, %v4253
      %v4255 = vpop.f32.mrf.mxu0
      %4256 = vdwg.mxu0
      %4257 = vmatprep.subr.mxu0 0.0
      %4258 = vmatpush1.msra.mxu0 %v3895
      %4259 = vmatprep.subr.mxu0 0.0
      %4260 = vmatpush1.msra.mxu0 %v3894
      %4261 = vmatprep.subr.mxu0 0.0
      %4262 = vmatpush1.msra.mxu0 %v3893
      %4263 = vmatprep.subr.mxu0 0.0
      %4264 = vmatpush1.msra.mxu0 %v3892
      %4265 = vmatprep.subr.mxu0 0.0
      %4266 = vmatpush1.msra.mxu0 %v3891
      %4267 = vmatprep.subr.mxu0 0.0
      %4268 = vmatpush1.msra.mxu0 %v3890
      %4269 = vmatprep.subr.mxu0 0.0
      %4270 = vmatpush1.msra.mxu0 %v3889
      %4271 = vmatprep.subr.mxu0 0.0
      %4272 = vmatpush1.msra.mxu0 %v3888
      %4273 = vmatprep.subr.mxu0 0.0
      %4274 = vmatpush1.msra.mxu0 %v3887
      %4275 = vmatprep.subr.mxu0 0.0
      %4276 = vmatpush1.msra.mxu0 %v3886
      %4277 = vmatprep.subr.mxu0 0.0
      %4278 = vmatpush1.msra.mxu0 %v3885
      %4279 = vmatprep.subr.mxu0 0.0
      %4280 = vmatpush1.msra.mxu0 %v3884
      %4281 = vmatprep.subr.mxu0 0.0
      %4282 = vmatpush1.msra.mxu0 %v3883
      %4283 = vmatprep.subr.mxu0 0.0
      %4284 = vmatpush1.msra.mxu0 %v3882
      %4285 = vmatprep.subr.mxu0 0.0
      %4286 = vmatpush1.msra.mxu0 %v3881
      %4287 = vmatprep.subr.mxu0 0.0
      %4288 = vmatpush1.msra.mxu0 %v3880
      %4289 = vmatprep.subr.mxu0 0.0
      %4290 = vmatpush2.msra.mxu0 %v3911
      %4291 = vmatprep.subr.mxu0 0.0
      %4292 = vmatpush2.msra.mxu0 %v3910
      %4293 = vmatprep.subr.mxu0 0.0
      %4294 = vmatpush2.msra.mxu0 %v3909
      %4295 = vmatprep.subr.mxu0 0.0
      %4296 = vmatpush2.msra.mxu0 %v3908
      %4297 = vmatprep.subr.mxu0 0.0
      %4298 = vmatpush2.msra.mxu0 %v3907
      %4299 = vmatprep.subr.mxu0 0.0
      %4300 = vmatpush2.msra.mxu0 %v3906
      %4301 = vmatprep.subr.mxu0 0.0
      %4302 = vmatpush2.msra.mxu0 %v3905
      %4303 = vmatprep.subr.mxu0 0.0
      %4304 = vmatpush2.msra.mxu0 %v3904
      %4305 = vmatprep.subr.mxu0 0.0
      %4306 = vmatpush2.msra.mxu0 %v3903
      %4307 = vmatprep.subr.mxu0 0.0
      %4308 = vmatpush2.msra.mxu0 %v3902
      %4309 = vmatprep.subr.mxu0 0.0
      %4310 = vmatpush2.msra.mxu0 %v3901
      %4311 = vmatprep.subr.mxu0 0.0
      %4312 = vmatpush2.msra.mxu0 %v3900
      %4313 = vmatprep.subr.mxu0 0.0
      %4314 = vmatpush2.msra.mxu0 %v3899
      %4315 = vmatprep.subr.mxu0 0.0
      %4316 = vmatpush2.msra.mxu0 %v3898
      %4317 = vmatprep.subr.mxu0 0.0
      %4318 = vmatpush2.msra.mxu0 %v3897
      %4319 = vmatprep.subr.mxu0 0.0
      %4320 = vmatpush2.msra.mxu0 %v3896
      %4321 = vmatprep.mubr.f32.mxu0 %v3775
      %4322 = vmatmul.mubr.f32.gmra.mxu0 %v3774
      %v4323 = vpop.f32.mrf.mxu0
      %v4324 = vadd.f32 %v4254, %v4323
      %v4325 = vpop.f32.mrf.mxu0
      %4326 = vdwg.mxu0
      %4327 = vmatprep.subr.mxu0 0.0
      %4328 = vmatpush1.msra.mxu0 %v3927
      %4329 = vmatprep.subr.mxu0 0.0
      %4330 = vmatpush1.msra.mxu0 %v3926
      %4331 = vmatprep.subr.mxu0 0.0
      %4332 = vmatpush1.msra.mxu0 %v3925
      %4333 = vmatprep.subr.mxu0 0.0
      %4334 = vmatpush1.msra.mxu0 %v3924
      %4335 = vmatprep.subr.mxu0 0.0
      %4336 = vmatpush1.msra.mxu0 %v3923
      %4337 = vmatprep.subr.mxu0 0.0
      %4338 = vmatpush1.msra.mxu0 %v3922
      %4339 = vmatprep.subr.mxu0 0.0
      %4340 = vmatpush1.msra.mxu0 %v3921
      %4341 = vmatprep.subr.mxu0 0.0
      %4342 = vmatpush1.msra.mxu0 %v3920
      %4343 = vmatprep.subr.mxu0 0.0
      %4344 = vmatpush1.msra.mxu0 %v3919
      %4345 = vmatprep.subr.mxu0 0.0
      %4346 = vmatpush1.msra.mxu0 %v3918
      %4347 = vmatprep.subr.mxu0 0.0
      %4348 = vmatpush1.msra.mxu0 %v3917
      %4349 = vmatprep.subr.mxu0 0.0
      %4350 = vmatpush1.msra.mxu0 %v3916
      %4351 = vmatprep.subr.mxu0 0.0
      %4352 = vmatpush1.msra.mxu0 %v3915
      %4353 = vmatprep.subr.mxu0 0.0
      %4354 = vmatpush1.msra.mxu0 %v3914
      %4355 = vmatprep.subr.mxu0 0.0
      %4356 = vmatpush1.msra.mxu0 %v3913
      %4357 = vmatprep.subr.mxu0 0.0
      %4358 = vmatpush1.msra.mxu0 %v3912
      %4359 = vmatprep.subr.mxu0 0.0
      %4360 = vmatpush2.msra.mxu0 %v3943
      %4361 = vmatprep.subr.mxu0 0.0
      %4362 = vmatpush2.msra.mxu0 %v3942
      %4363 = vmatprep.subr.mxu0 0.0
      %4364 = vmatpush2.msra.mxu0 %v3941
      %4365 = vmatprep.subr.mxu0 0.0
      %4366 = vmatpush2.msra.mxu0 %v3940
      %4367 = vmatprep.subr.mxu0 0.0
      %4368 = vmatpush2.msra.mxu0 %v3939
      %4369 = vmatprep.subr.mxu0 0.0
      %4370 = vmatpush2.msra.mxu0 %v3938
      %4371 = vmatprep.subr.mxu0 0.0
      %4372 = vmatpush2.msra.mxu0 %v3937
      %4373 = vmatprep.subr.mxu0 0.0
      %4374 = vmatpush2.msra.mxu0 %v3936
      %4375 = vmatprep.subr.mxu0 0.0
      %4376 = vmatpush2.msra.mxu0 %v3935
      %4377 = vmatprep.subr.mxu0 0.0
      %4378 = vmatpush2.msra.mxu0 %v3934
      %4379 = vmatprep.subr.mxu0 0.0
      %4380 = vmatpush2.msra.mxu0 %v3933
      %4381 = vmatprep.subr.mxu0 0.0
      %4382 = vmatpush2.msra.mxu0 %v3932
      %4383 = vmatprep.subr.mxu0 0.0
      %4384 = vmatpush2.msra.mxu0 %v3931
      %4385 = vmatprep.subr.mxu0 0.0
      %4386 = vmatpush2.msra.mxu0 %v3930
      %4387 = vmatprep.subr.mxu0 0.0
      %4388 = vmatpush2.msra.mxu0 %v3929
      %4389 = vmatprep.subr.mxu0 0.0
      %4390 = vmatpush2.msra.mxu0 %v3928
      %4391 = vmatprep.mubr.f32.mxu0 %v3777
      %4392 = vmatmul.mubr.f32.gmra.mxu0 %v3776
      %v4393 = vpop.f32.mrf.mxu0
      %v4394 = vadd.f32 %v4324, %v4393
      %v4395 = vpop.f32.mrf.mxu0
      %4396 = vdwg.mxu0
      %4397 = vmatprep.subr.mxu0 0.0
      %4398 = vmatpush1.msra.mxu0 %v3959
      %4399 = vmatprep.subr.mxu0 0.0
      %4400 = vmatpush1.msra.mxu0 %v3958
      %4401 = vmatprep.subr.mxu0 0.0
      %4402 = vmatpush1.msra.mxu0 %v3957
      %4403 = vmatprep.subr.mxu0 0.0
      %4404 = vmatpush1.msra.mxu0 %v3956
      %4405 = vmatprep.subr.mxu0 0.0
      %4406 = vmatpush1.msra.mxu0 %v3955
      %4407 = vmatprep.subr.mxu0 0.0
      %4408 = vmatpush1.msra.mxu0 %v3954
      %4409 = vmatprep.subr.mxu0 0.0
      %4410 = vmatpush1.msra.mxu0 %v3953
      %4411 = vmatprep.subr.mxu0 0.0
      %4412 = vmatpush1.msra.mxu0 %v3952
      %4413 = vmatprep.subr.mxu0 0.0
      %4414 = vmatpush1.msra.mxu0 %v3951
      %4415 = vmatprep.subr.mxu0 0.0
      %4416 = vmatpush1.msra.mxu0 %v3950
      %4417 = vmatprep.subr.mxu0 0.0
      %4418 = vmatpush1.msra.mxu0 %v3949
      %4419 = vmatprep.subr.mxu0 0.0
      %4420 = vmatpush1.msra.mxu0 %v3948
      %4421 = vmatprep.subr.mxu0 0.0
      %4422 = vmatpush1.msra.mxu0 %v3947
      %4423 = vmatprep.subr.mxu0 0.0
      %4424 = vmatpush1.msra.mxu0 %v3946
      %4425 = vmatprep.subr.mxu0 0.0
      %4426 = vmatpush1.msra.mxu0 %v3945
      %4427 = vmatprep.subr.mxu0 0.0
      %4428 = vmatpush1.msra.mxu0 %v3944
      %4429 = vmatprep.subr.mxu0 0.0
      %4430 = vmatpush2.msra.mxu0 %v3975
      %4431 = vmatprep.subr.mxu0 0.0
      %4432 = vmatpush2.msra.mxu0 %v3974
      %4433 = vmatprep.subr.mxu0 0.0
      %4434 = vmatpush2.msra.mxu0 %v3973
      %4435 = vmatprep.subr.mxu0 0.0
      %4436 = vmatpush2.msra.mxu0 %v3972
      %4437 = vmatprep.subr.mxu0 0.0
      %4438 = vmatpush2.msra.mxu0 %v3971
      %4439 = vmatprep.subr.mxu0 0.0
      %4440 = vmatpush2.msra.mxu0 %v3970
      %4441 = vmatprep.subr.mxu0 0.0
      %4442 = vmatpush2.msra.mxu0 %v3969
      %4443 = vmatprep.subr.mxu0 0.0
      %4444 = vmatpush2.msra.mxu0 %v3968
      %4445 = vmatprep.subr.mxu0 0.0
      %4446 = vmatpush2.msra.mxu0 %v3967
      %4447 = vmatprep.subr.mxu0 0.0
      %4448 = vmatpush2.msra.mxu0 %v3966
      %4449 = vmatprep.subr.mxu0 0.0
      %4450 = vmatpush2.msra.mxu0 %v3965
      %4451 = vmatprep.subr.mxu0 0.0
      %4452 = vmatpush2.msra.mxu0 %v3964
      %4453 = vmatprep.subr.mxu0 0.0
      %4454 = vmatpush2.msra.mxu0 %v3963
      %4455 = vmatprep.subr.mxu0 0.0
      %4456 = vmatpush2.msra.mxu0 %v3962
      %4457 = vmatprep.subr.mxu0 0.0
      %4458 = vmatpush2.msra.mxu0 %v3961
      %4459 = vmatprep.subr.mxu0 0.0
      %4460 = vmatpush2.msra.mxu0 %v3960
      %4461 = vmatprep.mubr.f32.mxu0 %v3779
      %4462 = vmatmul.mubr.f32.gmra.mxu0 %v3778
      %v4463 = vpop.f32.mrf.mxu0
      %v4464 = vadd.f32 %v4394, %v4463
      %v4465 = vpop.f32.mrf.mxu0
      %4466 = vdwg.mxu0
      %4467 = vmatprep.subr.mxu0 0.0
      %4468 = vmatpush1.msra.mxu0 %v3991
      %4469 = vmatprep.subr.mxu0 0.0
      %4470 = vmatpush1.msra.mxu0 %v3990
      %4471 = vmatprep.subr.mxu0 0.0
      %4472 = vmatpush1.msra.mxu0 %v3989
      %4473 = vmatprep.subr.mxu0 0.0
      %4474 = vmatpush1.msra.mxu0 %v3988
      %4475 = vmatprep.subr.mxu0 0.0
      %4476 = vmatpush1.msra.mxu0 %v3987
      %4477 = vmatprep.subr.mxu0 0.0
      %4478 = vmatpush1.msra.mxu0 %v3986
      %4479 = vmatprep.subr.mxu0 0.0
      %4480 = vmatpush1.msra.mxu0 %v3985
      %4481 = vmatprep.subr.mxu0 0.0
      %4482 = vmatpush1.msra.mxu0 %v3984
      %4483 = vmatprep.subr.mxu0 0.0
      %4484 = vmatpush1.msra.mxu0 %v3983
      %4485 = vmatprep.subr.mxu0 0.0
      %4486 = vmatpush1.msra.mxu0 %v3982
      %4487 = vmatprep.subr.mxu0 0.0
      %4488 = vmatpush1.msra.mxu0 %v3981
      %4489 = vmatprep.subr.mxu0 0.0
      %4490 = vmatpush1.msra.mxu0 %v3980
      %4491 = vmatprep.subr.mxu0 0.0
      %4492 = vmatpush1.msra.mxu0 %v3979
      %4493 = vmatprep.subr.mxu0 0.0
      %4494 = vmatpush1.msra.mxu0 %v3978
      %4495 = vmatprep.subr.mxu0 0.0
      %4496 = vmatpush1.msra.mxu0 %v3977
      %4497 = vmatprep.subr.mxu0 0.0
      %4498 = vmatpush1.msra.mxu0 %v3976
      %4499 = vmatprep.subr.mxu0 0.0
      %4500 = vmatpush2.msra.mxu0 %v4007
      %4501 = vmatprep.subr.mxu0 0.0
      %4502 = vmatpush2.msra.mxu0 %v4006
      %4503 = vmatprep.subr.mxu0 0.0
      %4504 = vmatpush2.msra.mxu0 %v4005
      %4505 = vmatprep.subr.mxu0 0.0
      %4506 = vmatpush2.msra.mxu0 %v4004
      %4507 = vmatprep.subr.mxu0 0.0
      %4508 = vmatpush2.msra.mxu0 %v4003
      %4509 = vmatprep.subr.mxu0 0.0
      %4510 = vmatpush2.msra.mxu0 %v4002
      %4511 = vmatprep.subr.mxu0 0.0
      %4512 = vmatpush2.msra.mxu0 %v4001
      %4513 = vmatprep.subr.mxu0 0.0
      %4514 = vmatpush2.msra.mxu0 %v4000
      %4515 = vmatprep.subr.mxu0 0.0
      %4516 = vmatpush2.msra.mxu0 %v3999
      %4517 = vmatprep.subr.mxu0 0.0
      %4518 = vmatpush2.msra.mxu0 %v3998
      %4519 = vmatprep.subr.mxu0 0.0
      %4520 = vmatpush2.msra.mxu0 %v3997
      %4521 = vmatprep.subr.mxu0 0.0
      %4522 = vmatpush2.msra.mxu0 %v3996
      %4523 = vmatprep.subr.mxu0 0.0
      %4524 = vmatpush2.msra.mxu0 %v3995
      %4525 = vmatprep.subr.mxu0 0.0
      %4526 = vmatpush2.msra.mxu0 %v3994
      %4527 = vmatprep.subr.mxu0 0.0
      %4528 = vmatpush2.msra.mxu0 %v3993
      %4529 = vmatprep.subr.mxu0 0.0
      %4530 = vmatpush2.msra.mxu0 %v3992
      %4531 = vmatprep.mubr.f32.mxu0 %v3781
      %4532 = vmatmul.mubr.f32.gmra.mxu0 %v3780
      %v4533 = vpop.f32.mrf.mxu0
      %v4534 = vadd.f32 %v4464, %v4533
      %v4535 = vpop.f32.mrf.mxu0
      %4536 = vdwg.mxu0
      %4537 = vmatprep.subr.mxu0 0.0
      %4538 = vmatpush1.msra.mxu0 %v4023
      %4539 = vmatprep.subr.mxu0 0.0
      %4540 = vmatpush1.msra.mxu0 %v4022
      %4541 = vmatprep.subr.mxu0 0.0
      %4542 = vmatpush1.msra.mxu0 %v4021
      %4543 = vmatprep.subr.mxu0 0.0
      %4544 = vmatpush1.msra.mxu0 %v4020
      %4545 = vmatprep.subr.mxu0 0.0
      %4546 = vmatpush1.msra.mxu0 %v4019
      %4547 = vmatprep.subr.mxu0 0.0
      %4548 = vmatpush1.msra.mxu0 %v4018
      %4549 = vmatprep.subr.mxu0 0.0
      %4550 = vmatpush1.msra.mxu0 %v4017
      %4551 = vmatprep.subr.mxu0 0.0
      %4552 = vmatpush1.msra.mxu0 %v4016
      %4553 = vmatprep.subr.mxu0 0.0
      %4554 = vmatpush1.msra.mxu0 %v4015
      %4555 = vmatprep.subr.mxu0 0.0
      %4556 = vmatpush1.msra.mxu0 %v4014
      %4557 = vmatprep.subr.mxu0 0.0
      %4558 = vmatpush1.msra.mxu0 %v4013
      %4559 = vmatprep.subr.mxu0 0.0
      %4560 = vmatpush1.msra.mxu0 %v4012
      %4561 = vmatprep.subr.mxu0 0.0
      %4562 = vmatpush1.msra.mxu0 %v4011
      %4563 = vmatprep.subr.mxu0 0.0
      %4564 = vmatpush1.msra.mxu0 %v4010
      %4565 = vmatprep.subr.mxu0 0.0
      %4566 = vmatpush1.msra.mxu0 %v4009
      %4567 = vmatprep.subr.mxu0 0.0
      %4568 = vmatpush1.msra.mxu0 %v4008
      %4569 = vmatprep.subr.mxu0 0.0
      %4570 = vmatpush2.msra.mxu0 %v4039
      %4571 = vmatprep.subr.mxu0 0.0
      %4572 = vmatpush2.msra.mxu0 %v4038
      %4573 = vmatprep.subr.mxu0 0.0
      %4574 = vmatpush2.msra.mxu0 %v4037
      %4575 = vmatprep.subr.mxu0 0.0
      %4576 = vmatpush2.msra.mxu0 %v4036
      %4577 = vmatprep.subr.mxu0 0.0
      %4578 = vmatpush2.msra.mxu0 %v4035
      %4579 = vmatprep.subr.mxu0 0.0
      %4580 = vmatpush2.msra.mxu0 %v4034
      %4581 = vmatprep.subr.mxu0 0.0
      %4582 = vmatpush2.msra.mxu0 %v4033
      %4583 = vmatprep.subr.mxu0 0.0
      %4584 = vmatpush2.msra.mxu0 %v4032
      %4585 = vmatprep.subr.mxu0 0.0
      %4586 = vmatpush2.msra.mxu0 %v4031
      %4587 = vmatprep.subr.mxu0 0.0
      %4588 = vmatpush2.msra.mxu0 %v4030
      %4589 = vmatprep.subr.mxu0 0.0
      %4590 = vmatpush2.msra.mxu0 %v4029
      %4591 = vmatprep.subr.mxu0 0.0
      %4592 = vmatpush2.msra.mxu0 %v4028
      %4593 = vmatprep.subr.mxu0 0.0
      %4594 = vmatpush2.msra.mxu0 %v4027
      %4595 = vmatprep.subr.mxu0 0.0
      %4596 = vmatpush2.msra.mxu0 %v4026
      %4597 = vmatprep.subr.mxu0 0.0
      %4598 = vmatpush2.msra.mxu0 %v4025
      %4599 = vmatprep.subr.mxu0 0.0
      %4600 = vmatpush2.msra.mxu0 %v4024
      %4601 = vmatprep.mubr.f32.mxu0 %v3783
      %4602 = vmatmul.mubr.f32.gmra.mxu0 %v3782
      %v4603 = vpop.f32.mrf.mxu0
      %v4604 = vadd.f32 %v4534, %v4603
      %v4605 = vpop.f32.mrf.mxu0
      %4606 = vdwg.mxu0
      %v4607 = vadd.f32 %v3048, %v4604
      %v4608 = vld [vmem:[%s21] sm:$0x1]
      %v4609 = vld [vmem:[%s22] sm:$0x1]
      %v4610 = vsel %vm755, %v4607, 0.0
      %4611 = vadd.xlane.f32.xlu0 %v4610
      %v4612 = vpop.xlane.xlu0 %4611
      %v4613 = vmul.f32 %v4612, %v1822
      %v4614 = vsub.f32 %v4607, %v4613
      %v4615 = vmul.f32 %v4614, %v4614
      %v4616 = vsel %vm755, %v4615, 0.0
      %4617 = vadd.xlane.f32.xlu0 %v4616
      %v4618 = vpop.xlane.xlu0 %4617
      %v4619 = vmul.f32 %v4618, %v1822
      %v4620 = vadd.f32 %v4619, 1e-05
      %v4621 = vrsqrt.pop %v4620
      %v4622 = vmul.f32 %v4614, %v4621
      %v4624 = vlaneseq
      %v4625 = vshrl.u32 %v4624, 7
      %v4626 = vsub.s32 0, %v4625
      %v4627 = vrot.slane %v4608, %v4626
      %v4629 = vmul.f32 %v4622, %v4627
      %v4631 = vlaneseq
      %v4632 = vshrl.u32 %v4631, 7
      %v4633 = vsub.s32 0, %v4632
      %v4634 = vrot.slane %v4609, %v4633
      %v4636 = vadd.f32 %v4629, %v4634
      %4637 = vst.msk [vmem:[%s739] sm:$0xff] %vm755, %v4636
      %p4638 = scmp.lt.s32.totalorder %s34, 1
      %s4639 = scalar_select %p4638, %s34, 1
      %s4640 = smul.addr %s4639, 8
      %s4641 = scalar_lea.vmem %s23, %s4640
      // Predicated region
      $region113: #{decoder_forward.3} parent=111 // pred_check
        %p4642 = pneg %p550
      $region114: #{decoder_forward.3} parent=111 // pred_check_branch
        %4644 = sbr.rel (%p4642) target = $region116
      $region115: #{decoder_forward.3} parent=111 // pred_region
        _
      $region116: #{decoder_forward.3} parent=111 // pred_fallthru
        _
    $region112: #{decoder_forward.3} parent=5 // pred_fallthru
      _
    %p4645 = scmp.le.s32.totalorder 2, %s29
    // Predicated region
    $region117: #{decoder_forward.3} parent=5 // pred_check
      %p4646 = pneg %p4645
    $region118: #{decoder_forward.3} parent=5 // pred_check_branch
      %4648 = sbr.rel (%p4646) target = $region120
    $region119: #{decoder_forward.3} parent=5 // pred_region
      %s4649 = ssub.s32 %s29, 2
      // Predicated region
      $region121: #{decoder_forward.3} parent=119 // pred_check
        %p4650 = pneg %p556
      $region122: #{decoder_forward.3} parent=119 // pred_check_branch
        %4652 = sbr.rel (%p4650) target = $region124
      $region123: #{decoder_forward.3} parent=119 // pred_region
        %p4653 = scmp.lt.s32.totalorder %s35, 1
        %s4654 = scalar_select %p4653, %s35, 1
        %s4655 = smul.addr %s4654, 8
        %s4656 = scalar_lea.vmem %s23, %s4655
      $region124: #{decoder_forward.3} parent=119 // pred_fallthru
        _
    $region120: #{decoder_forward.3} parent=5 // pred_fallthru
      _
  $region6: #{decoder_forward.3} parent=0 // loop_footer
    %s33 = sadd.s32 1, %s29
  $region7: #{decoder_forward.3} parent=0 // loop_footer_branch
    %28 = sbr.rel target = $region3
  $region8: #{decoder_forward.3} parent=0 // loop_exit
    _

</llo_original>
